<compile_context>
chip_gen: v6e
topology: v6e:2x2x1
jax: 0.10.0
libtpu: 0.0.40
codegen_flags: <defaults>
</compile_context>

<pallas_src>
import functools

import jax
import jax.numpy as jnp
from jax.experimental import pallas as pl
from jax.experimental.pallas import tpu as pltpu


def _round_up(a, b):
    return (a + b - 1) // b * b


# ----------------------------- fused Pallas kernel ------------------------------

def _tcn_fused_kernel(*refs, k, T, off, t_pad, block_cfg, out_size):
    """Fused TemporalConvNet + last-step Linear for one batch tile.

    refs = [x_ref, <per-block params...>, lin_w, lin_b, out_ref, buf_act, buf_h]
      x_ref:   (TILE_N, T, Cin0)  bf16 input activations
      per block: w1 (c_max, k*cout [+cout if downsample]) bf16, b1 (1, cout) f32,
                 w2 (c_max, k*cout) bf16, b2 (1, cout) f32,
                 [bds (1, cout) f32]  if downsample (wds is fused into w1)
      lin_w:   (O, C_last) f32, lin_b: (1, O) f32
      out_ref: (TILE_N, 1, O)
      buf_act: (TILE_N, T_PAD, C_MAX) f32 scratch (block input/output)
      buf_h:   (TILE_N, T_PAD, C_MAX) f32 scratch (conv1 activation)
    """
    x_ref = refs[0]
    out_ref = refs[-3]
    buf_act = refs[-2]
    buf_h = refs[-1]
    params = refs[1:-3]

    tile_n = buf_act.shape[0]
    c_max = buf_act.shape[-1]

    # Zero both scratch buffers once per batch tile: covers the causal left
    # padding, the sublane-alignment tail rows and any unused channel lanes.
    # Everything stays finite afterwards, so the K-padded (zero weight row)
    # matmuls below cannot pick up NaN/Inf garbage.
    zeros_buf = jnp.zeros((tile_n, t_pad, c_max), jnp.float32)
    buf_act[...] = zeros_buf
    buf_h[...] = zeros_buf

    cin0 = block_cfg[0][0]
    buf_act[:, off:off + T, :cin0] = x_ref[...].astype(jnp.float32)

    def conv_matmul(src_ref, w_ref):
        # Whole-buffer, fully aligned operand read; input channels are padded
        # to c_max with zero weight rows, the k taps (+ optional fused 1x1
        # downsample) live on the matmul N axis -> one wide MXU matmul per conv.
        op = src_ref[...].astype(jnp.bfloat16).reshape(tile_n * t_pad, c_max)
        z = jnp.dot(op, w_ref[...], preferred_element_type=jnp.float32)
        return z.reshape(tile_n, t_pad, w_ref.shape[-1])

    def tap_sum(z3, cout, dil, b_ref):
        # out[:, t, :] = b + sum_j z_j[:, t - (k-1-j)*dil, :]  (causal + chomp)
        t0 = off - (k - 1) * dil                       # >= 0 since off >= pad_max
        acc = b_ref[...].reshape(1, 1, cout)
        for j in range(k):
            s = t0 + j * dil
            acc = acc + z3[:, s:s + T, j * cout:(j + 1) * cout]
        return acc                                     # (tile_n, T, cout) f32

    p = 0
    for (cin, cout, dil, has_ds) in block_cfg:
        w1, b1, w2, b2 = params[p], params[p + 1], params[p + 2], params[p + 3]
        p += 4
        if has_ds:
            bds = params[p]
            p += 1

        # conv1 (+ fused 1x1 downsample columns) -> ReLU
        z1 = conv_matmul(buf_act, w1)
        h = jnp.maximum(tap_sum(z1, cout, dil, b1), 0.0)
        if has_ds:
            # residual = downsample(x): the extra column block of z1 at the
            # un-shifted (sublane-aligned) time window.
            res = (z1[:, off:off + T, k * cout:(k + 1) * cout]
                   + bds[...].reshape(1, 1, cout))
        buf_h[:, off:off + T, :cout] = h

        # conv2 -> ReLU
        z2 = conv_matmul(buf_h, w2)
        conv_out = jnp.maximum(tap_sum(z2, cout, dil, b2), 0.0)

        if not has_ds:
            # identity residual: read (aligned) after conv2 so the residual's
            # live range does not span the second matmul.
            res = buf_act[:, off:off + T, :cin]

        y = jnp.maximum(conv_out + res, 0.0)
        buf_act[:, off:off + T, :cout] = y

    # last time step -> Linear(num_channels[-1] -> output_size)
    lin_w, lin_b = params[p], params[p + 1]            # (O, C_last), (1, O)
    c_last = block_cfg[-1][1]
    last = buf_act[:, off + T - 1:off + T, :c_last]    # (tile_n, 1, C_last) f32
    if out_size == 1:
        # VPU multiply + lane reduction: avoid a 1-lane-wide MXU matmul.
        o = jnp.sum(last * lin_w[...].reshape(1, 1, c_last),
                    axis=-1, keepdims=True)            # (tile_n, 1, 1)
    else:
        o = jax.lax.dot_general(last, lin_w[...], (((2,), (1,)), ((), ())),
                                preferred_element_type=jnp.float32)
    out_ref[...] = o + lin_b[...].reshape(1, 1, out_size)


# ------------------------------ JAX wrapper -------------------------------

def tcn_model_forward(x_nct, params, kernel_size, *, tile_n=None):
    """Equivalent of TCNModel.forward (eval).  x_nct: (N, num_input, T)."""
    N, _, T = x_nct.shape
    k = kernel_size
    out_size = params['linear_w'].shape[0]

    # Static per-block config.
    block_cfg = []
    for i, blk in enumerate(params['blocks']):
        _, cin, cout = blk['w1'].shape
        block_cfg.append((cin, cout, 2 ** i, bool(blk['has_downsample'])))
    cin0 = block_cfg[0][0]
    c_max = max([cin0] + [c for _, c, _, _ in block_cfg])

    # Sublane-aligned causal offset and padded time length.
    pad_max = (k - 1) * block_cfg[-1][2]
    off = _round_up(pad_max, 8)
    t_pad = off + _round_up(T, 8)

    # Batch-tile sizing: largest tile whose scratch + live conv temporaries fit
    # a ~24 MiB VMEM budget (conservative lane-padded estimate; safe on v7x's
    # 64 MiB, comfortable on v5e/v6e's 128 MiB).
    def est_bytes(tn):
        cl = _round_up(c_max, 128)                # lane-padded channel width
        zl = _round_up((k + 1) * c_max, 128)      # widest matmul result
        cin_l = _round_up(cin0, 128)
        scratch = 2 * tn * t_pad * cl * 4
        io = 2 * tn * T * cin_l * 2 + 2 * tn * 128 * 4
        tmp = tn * t_pad * (2 * cl + 4 * zl + 4 * cl)
        return scratch + io + tmp

    n_cap = max(8, _round_up(N, 8))
    if tile_n is None:
        budget = 24 << 20
        tile_n = 8
        for cand in (1024, 768, 512, 384, 256, 192, 128, 96, 64, 48, 32, 16, 8):
            tn = min(cand, n_cap)
            if est_bytes(tn) <= budget:
                tile_n = tn
                break
    # v7x: try to keep the 'parallel' grid even so both TensorCores get work.
    grid_len = -(-N // tile_n)
    if grid_len > 1 and grid_len % 2 == 1 and tile_n >= 16:
        tile_n = max(8, (tile_n // 2) // 8 * 8)

    vmem_limit = int(min(56 << 20, max(32 << 20, int(est_bytes(tile_n) * 1.5))))

    # x: (N, C, T) -> (N, T, C), streamed as bf16 (halves the only per-step HBM
    # input; its first consumer is a bf16 MXU matmul anyway).
    # TODO(synk): for very large x, feed (N, C, T) and transpose per-tile inside
    # the kernel to save one HBM pass; kept in the wrapper here for lowering safety.
    x = jnp.transpose(x_nct, (0, 2, 1)).astype(jnp.bfloat16)
    n_pad = (-N) % tile_n
    if n_pad:
        x = jnp.pad(x, ((0, n_pad), (0, 0), (0, 0)))
    n_padded = N + n_pad
    grid = (n_padded // tile_n,)

    # Flattened weight operands.  Per conv the k taps (and the fused 1x1
    # downsample for conv1 of downsampling blocks) are stacked along the matmul
    # N axis; the K axis (input channels) is zero-padded to c_max so the kernel
    # reads whole activation buffers with no slicing.
    # NOTE: weight_norm at fresh init is the identity reparameterization
    # (g = ||v||); for a trained checkpoint fold g * v / ||v|| here instead.
    args = [x]
    for (cin, cout, dil, has_ds), blk in zip(block_cfg, params['blocks']):
        w1_cols = (k + 1) * cout if has_ds else k * cout
        w1 = jnp.zeros((c_max, w1_cols), jnp.float32)
        for j in range(k):
            w1 = w1.at[:cin, j * cout:(j + 1) * cout].set(blk['w1'][j])
        if has_ds:
            w1 = w1.at[:cin, k * cout:(k + 1) * cout].set(blk['wds'])
        w2 = jnp.zeros((c_max, k * cout), jnp.float32)
        for j in range(k):
            w2 = w2.at[:cout, j * cout:(j + 1) * cout].set(blk['w2'][j])
        args += [w1.astype(jnp.bfloat16),
                 blk['b1'].reshape(1, cout).astype(jnp.float32),
                 w2.astype(jnp.bfloat16),
                 blk['b2'].reshape(1, cout).astype(jnp.float32)]
        if has_ds:
            args += [blk['bds'].reshape(1, cout).astype(jnp.float32)]
    args += [params['linear_w'].astype(jnp.float32),
             params['linear_b'].reshape(1, out_size).astype(jnp.float32)]

    in_specs = [pl.BlockSpec((tile_n, T, cin0), lambda i: (i, 0, 0))]
    for a in args[1:]:
        # Small weights: constant block index => fetched once, kept resident.
        in_specs.append(pl.BlockSpec(a.shape, lambda i, _nd=a.ndim: (0,) * _nd))

    kern = functools.partial(_tcn_fused_kernel, k=k, T=T, off=off, t_pad=t_pad,
                             block_cfg=tuple(block_cfg), out_size=out_size)

    out = pl.pallas_call(
        kern,
        out_shape=jax.ShapeDtypeStruct((n_padded, 1, out_size), jnp.float32),
        grid_spec=pltpu.PrefetchScalarGridSpec(
            num_scalar_prefetch=0,
            grid=grid,
            in_specs=in_specs,
            out_specs=pl.BlockSpec((tile_n, 1, out_size), lambda i: (i, 0, 0)),
            scratch_shapes=[pltpu.VMEM((tile_n, t_pad, c_max), jnp.float32),
                            pltpu.VMEM((tile_n, t_pad, c_max), jnp.float32)]),
        compiler_params=pltpu.CompilerParams(
            dimension_semantics=("parallel",),
            vmem_limit_bytes=vmem_limit),
    )(*args)

    return jnp.squeeze(out[:N, 0, :])                  # torch .squeeze()


# --------------------------- deterministic params --------------------------

def init_params(key, num_input, num_channels, kernel_size, output_size):
    """Conv weights ~ N(0, 0.01) like TemporalBlock.init_weights; biases zero."""
    params = {'blocks': []}
    in_ch = num_input
    for out_ch in num_channels:
        key, k1, k2, k3 = jax.random.split(key, 4)
        has_downsample = (in_ch != out_ch)
        blk = {
            'w1': 0.01 * jax.random.normal(k1, (kernel_size, in_ch, out_ch),
                                           jnp.float32),
            'b1': jnp.zeros((out_ch,), jnp.float32),
            'w2': 0.01 * jax.random.normal(k2, (kernel_size, out_ch, out_ch),
                                           jnp.float32),
            'b2': jnp.zeros((out_ch,), jnp.float32),
            'has_downsample': has_downsample,
        }
        if has_downsample:
            blk['wds'] = 0.01 * jax.random.normal(k3, (in_ch, out_ch), jnp.float32)
            blk['bds'] = jnp.zeros((out_ch,), jnp.float32)
        params['blocks'].append(blk)
        in_ch = out_ch
    key, kl = jax.random.split(key)
    params['linear_w'] = 0.01 * jax.random.normal(
        kl, (output_size, in_ch), jnp.float32)        # PyTorch (O, C) layout
    params['linear_b'] = jnp.zeros((output_size,), jnp.float32)
    return params


# --------------------------- pure-JAX reference ----------------------------

def tcn_reference(x_nct, params, kernel_size):
    k = kernel_size
    x = jnp.transpose(x_nct, (0, 2, 1)).astype(jnp.float32)   # (N, T, C)
    T = x.shape[1]
    for i, blk in enumerate(params['blocks']):
        dil = 2 ** i
        pad = (k - 1) * dil

        def conv(inp, w, b):
            ip = jnp.pad(inp, ((0, 0), (pad, 0), (0, 0)))
            acc = b[None, None, :]
            for j in range(k):
                acc = acc + jnp.einsum('ntc,cd->ntd',
                                       ip[:, j * dil: j * dil + T, :], w[j])
            return acc

        h = jax.nn.relu(conv(x, blk['w1'], blk['b1']))
        o = jax.nn.relu(conv(h, blk['w2'], blk['b2']))
        if blk['has_downsample']:
            res = jnp.einsum('ntc,cd->ntd', x, blk['wds']) + blk['bds']
        else:
            res = x
        x = jax.nn.relu(o + res)
    out = x[:, -1, :] @ params['linear_w'].T + params['linear_b']
    return jnp.squeeze(out)


# --------------------------------- driver ----------------------------------

if __name__ == "__main__":
    # TCNModel(num_input=16, output_size=1, num_channels=[32, 32],
    #          kernel_size=3, dropout=0.0)
    N, num_input, T = 2, 16, 16
    num_channels = [32, 32]
    kernel_size = 3
    output_size = 1

    key = jax.random.PRNGKey(0)
    kx, kp = jax.random.split(key)
    x = jax.random.normal(kx, (N, num_input, T), jnp.float32)  # (N, C, L) as in PyTorch
    params = init_params(kp, num_input, num_channels, kernel_size, output_size)

    out = tcn_model_forward(x, params, kernel_size)
    jax.block_until_ready(out)
    assert out.shape == (N,)            # (N, 1) squeezed -> (N,)

    ref = tcn_reference(x, params, kernel_size)
    assert jnp.allclose(out, ref, rtol=5e-2, atol=2e-4), (out, ref)

    print("KERNEL_OK")
</pallas_src>

<mosaic_0001>
module attributes {stable_mosaic.version = 11 : i64} {
  func.func @_tcn_fused_kernel(%arg0: i32, %arg1: memref<8x16x16xbf16, #tpu.memory_space<vmem>>, %arg2: memref<32x128xbf16, #tpu.memory_space<vmem>>, %arg3: memref<1x32xf32, #tpu.memory_space<vmem>>, %arg4: memref<32x96xbf16, #tpu.memory_space<vmem>>, %arg5: memref<1x32xf32, #tpu.memory_space<vmem>>, %arg6: memref<1x32xf32, #tpu.memory_space<vmem>>, %arg7: memref<32x96xbf16, #tpu.memory_space<vmem>>, %arg8: memref<1x32xf32, #tpu.memory_space<vmem>>, %arg9: memref<32x96xbf16, #tpu.memory_space<vmem>>, %arg10: memref<1x32xf32, #tpu.memory_space<vmem>>, %arg11: memref<1x32xf32, #tpu.memory_space<vmem>>, %arg12: memref<1x1xf32, #tpu.memory_space<vmem>>, %arg13: memref<8x1x1xf32, #tpu.memory_space<vmem>>, %arg14: memref<8x24x32xf32, #tpu.memory_space<vmem>>, %arg15: memref<8x24x32xf32, #tpu.memory_space<vmem>>) attributes {dimension_semantics = [#tpu.dimension_semantics<parallel>], iteration_bounds = array<i64: 1>, scalar_prefetch = 0 : i64, scratch_operands = 2 : i64, tpu.core_type = #tpu.core_type<tc>, window_params = [{transform_indices = @transform_0, window_bounds = array<i64: 8, 16, 16>}, {pipeline_mode = #tpu.pipeline_mode<synchronous>, transform_indices = @transform_1, window_bounds = array<i64: 32, 128>}, {pipeline_mode = #tpu.pipeline_mode<synchronous>, transform_indices = @transform_2, window_bounds = array<i64: 1, 32>}, {pipeline_mode = #tpu.pipeline_mode<synchronous>, transform_indices = @transform_3, window_bounds = array<i64: 32, 96>}, {pipeline_mode = #tpu.pipeline_mode<synchronous>, transform_indices = @transform_4, window_bounds = array<i64: 1, 32>}, {pipeline_mode = #tpu.pipeline_mode<synchronous>, transform_indices = @transform_5, window_bounds = array<i64: 1, 32>}, {pipeline_mode = #tpu.pipeline_mode<synchronous>, transform_indices = @transform_6, window_bounds = array<i64: 32, 96>}, {pipeline_mode = #tpu.pipeline_mode<synchronous>, transform_indices = @transform_7, window_bounds = array<i64: 1, 32>}, {pipeline_mode = #tpu.pipeline_mode<synchronous>, transform_indices = @transform_8, window_bounds = array<i64: 32, 96>}, {pipeline_mode = #tpu.pipeline_mode<synchronous>, transform_indices = @transform_9, window_bounds = array<i64: 1, 32>}, {pipeline_mode = #tpu.pipeline_mode<synchronous>, transform_indices = @transform_10, window_bounds = array<i64: 1, 32>}, {pipeline_mode = #tpu.pipeline_mode<synchronous>, transform_indices = @transform_11, window_bounds = array<i64: 1, 1>}, {transform_indices = @transform_12, window_bounds = array<i64: 8, 1, 1>}]} {
    %cst = arith.constant 0.000000e+00 : f32
    %0 = vector.broadcast %cst : f32 to vector<8x24x32xf32>
    %c0 = arith.constant 0 : index
    %c0_0 = arith.constant 0 : index
    %c0_1 = arith.constant 0 : index
    %1 = vector.load %arg14[%c0, %c0_0, %c0_1] : memref<8x24x32xf32, #tpu.memory_space<vmem>>, vector<8x24x32xf32>
    tpu.vector_store %arg14[%c0, %c0_0, %c0_1], %0 {strides = array<i32>} : memref<8x24x32xf32, #tpu.memory_space<vmem>>, vector<8x24x32xf32>,
    %c0_2 = arith.constant 0 : index
    %c0_3 = arith.constant 0 : index
    %c0_4 = arith.constant 0 : index
    %2 = vector.load %arg15[%c0_2, %c0_3, %c0_4] : memref<8x24x32xf32, #tpu.memory_space<vmem>>, vector<8x24x32xf32>
    tpu.vector_store %arg15[%c0_2, %c0_3, %c0_4], %0 {strides = array<i32>} : memref<8x24x32xf32, #tpu.memory_space<vmem>>, vector<8x24x32xf32>,
    %c0_5 = arith.constant 0 : index
    %c0_6 = arith.constant 0 : index
    %c0_7 = arith.constant 0 : index
    %3 = vector.load %arg1[%c0_5, %c0_6, %c0_7] : memref<8x16x16xbf16, #tpu.memory_space<vmem>>, vector<8x16x16xbf16>
    %4 = arith.extf %3 : vector<8x16x16xbf16> to vector<8x16x16xf32>
    %c0_8 = arith.constant 0 : index
    %c8 = arith.constant 8 : index
    %c0_9 = arith.constant 0 : index
    %5 = vector.load %arg14[%c0_8, %c8, %c0_9] : memref<8x24x32xf32, #tpu.memory_space<vmem>>, vector<8x16x16xf32>
    tpu.vector_store %arg14[%c0_8, %c8, %c0_9], %4 {strides = array<i32>} : memref<8x24x32xf32, #tpu.memory_space<vmem>>, vector<8x16x16xf32>,
    %c0_10 = arith.constant 0 : index
    %c0_11 = arith.constant 0 : index
    %c0_12 = arith.constant 0 : index
    %6 = vector.load %arg14[%c0_10, %c0_11, %c0_12] : memref<8x24x32xf32, #tpu.memory_space<vmem>>, vector<8x24x32xf32>
    %7 = arith.truncf %6 : vector<8x24x32xf32> to vector<8x24x32xbf16>
    %8 = vector.shape_cast %7 : vector<8x24x32xbf16> to vector<192x32xbf16>
    %c0_13 = arith.constant 0 : index
    %c0_14 = arith.constant 0 : index
    %9 = vector.load %arg2[%c0_13, %c0_14] : memref<32x128xbf16, #tpu.memory_space<vmem>>, vector<32x128xbf16>
    %cst_15 = arith.constant dense<0.000000e+00> : vector<192x128xf32>
    %10 = tpu.matmul %8, %9, %cst_15 {dimension_numbers = #tpu.dot_dimension_numbers<[1], [0], [0], [1], [0, 0, 1, 1], [], []>} : vector<192x32xbf16>, vector<32x128xbf16>, vector<192x128xf32> -> vector<192x128xf32>
    %11 = vector.shape_cast %10 : vector<192x128xf32> to vector<8x24x128xf32>
    %c0_16 = arith.constant 0 : index
    %c0_17 = arith.constant 0 : index
    %12 = vector.load %arg3[%c0_16, %c0_17] : memref<1x32xf32, #tpu.memory_space<vmem>>, vector<1x32xf32>
    %13 = vector.shape_cast %12 : vector<1x32xf32> to vector<1x1x32xf32>
    %14 = vector.extract_strided_slice %11 {offsets = [0, 6, 0], sizes = [8, 16, 32], strides = [1, 1, 1]} : vector<8x24x128xf32> to vector<8x16x32xf32>
    %15 = vector.broadcast %13 : vector<1x1x32xf32> to vector<8x16x32xf32>
    %16 = arith.addf %15, %14 : vector<8x16x32xf32>
    %17 = vector.extract_strided_slice %11 {offsets = [0, 7, 32], sizes = [8, 16, 32], strides = [1, 1, 1]} : vector<8x24x128xf32> to vector<8x16x32xf32>
    %18 = arith.addf %16, %17 : vector<8x16x32xf32>
    %19 = vector.extract_strided_slice %11 {offsets = [0, 8, 64], sizes = [8, 16, 32], strides = [1, 1, 1]} : vector<8x24x128xf32> to vector<8x16x32xf32>
    %20 = arith.addf %18, %19 : vector<8x16x32xf32>
    %cst_18 = arith.constant 0.000000e+00 : f32
    %21 = vector.broadcast %cst_18 : f32 to vector<8x16x32xf32>
    %22 = arith.maximumf %20, %21 : vector<8x16x32xf32>
    %23 = vector.extract_strided_slice %11 {offsets = [0, 8, 96], sizes = [8, 16, 32], strides = [1, 1, 1]} : vector<8x24x128xf32> to vector<8x16x32xf32>
    %c0_19 = arith.constant 0 : index
    %c0_20 = arith.constant 0 : index
    %24 = vector.load %arg6[%c0_19, %c0_20] : memref<1x32xf32, #tpu.memory_space<vmem>>, vector<1x32xf32>
    %25 = vector.shape_cast %24 : vector<1x32xf32> to vector<1x1x32xf32>
    %26 = vector.broadcast %25 : vector<1x1x32xf32> to vector<8x16x32xf32>
    %27 = arith.addf %23, %26 : vector<8x16x32xf32>
    %c0_21 = arith.constant 0 : index
    %c8_22 = arith.constant 8 : index
    %c0_23 = arith.constant 0 : index
    %28 = vector.load %arg15[%c0_21, %c8_22, %c0_23] : memref<8x24x32xf32, #tpu.memory_space<vmem>>, vector<8x16x32xf32>
    tpu.vector_store %arg15[%c0_21, %c8_22, %c0_23], %22 {strides = array<i32>} : memref<8x24x32xf32, #tpu.memory_space<vmem>>, vector<8x16x32xf32>,
    %c0_24 = arith.constant 0 : index
    %c0_25 = arith.constant 0 : index
    %c0_26 = arith.constant 0 : index
    %29 = vector.load %arg15[%c0_24, %c0_25, %c0_26] : memref<8x24x32xf32, #tpu.memory_space<vmem>>, vector<8x24x32xf32>
    %30 = arith.truncf %29 : vector<8x24x32xf32> to vector<8x24x32xbf16>
    %31 = vector.shape_cast %30 : vector<8x24x32xbf16> to vector<192x32xbf16>
    %c0_27 = arith.constant 0 : index
    %c0_28 = arith.constant 0 : index
    %32 = vector.load %arg4[%c0_27, %c0_28] : memref<32x96xbf16, #tpu.memory_space<vmem>>, vector<32x96xbf16>
    %cst_29 = arith.constant dense<0.000000e+00> : vector<192x96xf32>
    %33 = tpu.matmul %31, %32, %cst_29 {dimension_numbers = #tpu.dot_dimension_numbers<[1], [0], [0], [1], [0, 0, 1, 1], [], []>} : vector<192x32xbf16>, vector<32x96xbf16>, vector<192x96xf32> -> vector<192x96xf32>
    %34 = vector.shape_cast %33 : vector<192x96xf32> to vector<8x24x96xf32>
    %c0_30 = arith.constant 0 : index
    %c0_31 = arith.constant 0 : index
    %35 = vector.load %arg5[%c0_30, %c0_31] : memref<1x32xf32, #tpu.memory_space<vmem>>, vector<1x32xf32>
    %36 = vector.shape_cast %35 : vector<1x32xf32> to vector<1x1x32xf32>
    %37 = vector.extract_strided_slice %34 {offsets = [0, 6, 0], sizes = [8, 16, 32], strides = [1, 1, 1]} : vector<8x24x96xf32> to vector<8x16x32xf32>
    %38 = vector.broadcast %36 : vector<1x1x32xf32> to vector<8x16x32xf32>
    %39 = arith.addf %38, %37 : vector<8x16x32xf32>
    %40 = vector.extract_strided_slice %34 {offsets = [0, 7, 32], sizes = [8, 16, 32], strides = [1, 1, 1]} : vector<8x24x96xf32> to vector<8x16x32xf32>
    %41 = arith.addf %39, %40 : vector<8x16x32xf32>
    %42 = vector.extract_strided_slice %34 {offsets = [0, 8, 64], sizes = [8, 16, 32], strides = [1, 1, 1]} : vector<8x24x96xf32> to vector<8x16x32xf32>
    %43 = arith.addf %41, %42 : vector<8x16x32xf32>
    %cst_32 = arith.constant 0.000000e+00 : f32
    %44 = vector.broadcast %cst_32 : f32 to vector<8x16x32xf32>
    %45 = arith.maximumf %43, %44 : vector<8x16x32xf32>
    %46 = arith.addf %45, %27 : vector<8x16x32xf32>
    %cst_33 = arith.constant 0.000000e+00 : f32
    %47 = vector.broadcast %cst_33 : f32 to vector<8x16x32xf32>
    %48 = arith.maximumf %46, %47 : vector<8x16x32xf32>
    %c0_34 = arith.constant 0 : index
    %c8_35 = arith.constant 8 : index
    %c0_36 = arith.constant 0 : index
    %49 = vector.load %arg14[%c0_34, %c8_35, %c0_36] : memref<8x24x32xf32, #tpu.memory_space<vmem>>, vector<8x16x32xf32>
    tpu.vector_store %arg14[%c0_34, %c8_35, %c0_36], %48 {strides = array<i32>} : memref<8x24x32xf32, #tpu.memory_space<vmem>>, vector<8x16x32xf32>,
    %c0_37 = arith.constant 0 : index
    %c0_38 = arith.constant 0 : index
    %c0_39 = arith.constant 0 : index
    %50 = vector.load %arg14[%c0_37, %c0_38, %c0_39] : memref<8x24x32xf32, #tpu.memory_space<vmem>>, vector<8x24x32xf32>
    %51 = arith.truncf %50 : vector<8x24x32xf32> to vector<8x24x32xbf16>
    %52 = vector.shape_cast %51 : vector<8x24x32xbf16> to vector<192x32xbf16>
    %c0_40 = arith.constant 0 : index
    %c0_41 = arith.constant 0 : index
    %53 = vector.load %arg7[%c0_40, %c0_41] : memref<32x96xbf16, #tpu.memory_space<vmem>>, vector<32x96xbf16>
    %cst_42 = arith.constant dense<0.000000e+00> : vector<192x96xf32>
    %54 = tpu.matmul %52, %53, %cst_42 {dimension_numbers = #tpu.dot_dimension_numbers<[1], [0], [0], [1], [0, 0, 1, 1], [], []>} : vector<192x32xbf16>, vector<32x96xbf16>, vector<192x96xf32> -> vector<192x96xf32>
    %55 = vector.shape_cast %54 : vector<192x96xf32> to vector<8x24x96xf32>
    %c0_43 = arith.constant 0 : index
    %c0_44 = arith.constant 0 : index
    %56 = vector.load %arg8[%c0_43, %c0_44] : memref<1x32xf32, #tpu.memory_space<vmem>>, vector<1x32xf32>
    %57 = vector.shape_cast %56 : vector<1x32xf32> to vector<1x1x32xf32>
    %58 = vector.extract_strided_slice %55 {offsets = [0, 4, 0], sizes = [8, 16, 32], strides = [1, 1, 1]} : vector<8x24x96xf32> to vector<8x16x32xf32>
    %59 = vector.broadcast %57 : vector<1x1x32xf32> to vector<8x16x32xf32>
    %60 = arith.addf %59, %58 : vector<8x16x32xf32>
    %61 = vector.extract_strided_slice %55 {offsets = [0, 6, 32], sizes = [8, 16, 32], strides = [1, 1, 1]} : vector<8x24x96xf32> to vector<8x16x32xf32>
    %62 = arith.addf %60, %61 : vector<8x16x32xf32>
    %63 = vector.extract_strided_slice %55 {offsets = [0, 8, 64], sizes = [8, 16, 32], strides = [1, 1, 1]} : vector<8x24x96xf32> to vector<8x16x32xf32>
    %64 = arith.addf %62, %63 : vector<8x16x32xf32>
    %cst_45 = arith.constant 0.000000e+00 : f32
    %65 = vector.broadcast %cst_45 : f32 to vector<8x16x32xf32>
    %66 = arith.maximumf %64, %65 : vector<8x16x32xf32>
    %c0_46 = arith.constant 0 : index
    %c8_47 = arith.constant 8 : index
    %c0_48 = arith.constant 0 : index
    %67 = vector.load %arg15[%c0_46, %c8_47, %c0_48] : memref<8x24x32xf32, #tpu.memory_space<vmem>>, vector<8x16x32xf32>
    tpu.vector_store %arg15[%c0_46, %c8_47, %c0_48], %66 {strides = array<i32>} : memref<8x24x32xf32, #tpu.memory_space<vmem>>, vector<8x16x32xf32>,
    %c0_49 = arith.constant 0 : index
    %c0_50 = arith.constant 0 : index
    %c0_51 = arith.constant 0 : index
    %68 = vector.load %arg15[%c0_49, %c0_50, %c0_51] : memref<8x24x32xf32, #tpu.memory_space<vmem>>, vector<8x24x32xf32>
    %69 = arith.truncf %68 : vector<8x24x32xf32> to vector<8x24x32xbf16>
    %70 = vector.shape_cast %69 : vector<8x24x32xbf16> to vector<192x32xbf16>
    %c0_52 = arith.constant 0 : index
    %c0_53 = arith.constant 0 : index
    %71 = vector.load %arg9[%c0_52, %c0_53] : memref<32x96xbf16, #tpu.memory_space<vmem>>, vector<32x96xbf16>
    %cst_54 = arith.constant dense<0.000000e+00> : vector<192x96xf32>
    %72 = tpu.matmul %70, %71, %cst_54 {dimension_numbers = #tpu.dot_dimension_numbers<[1], [0], [0], [1], [0, 0, 1, 1], [], []>} : vector<192x32xbf16>, vector<32x96xbf16>, vector<192x96xf32> -> vector<192x96xf32>
    %73 = vector.shape_cast %72 : vector<192x96xf32> to vector<8x24x96xf32>
    %c0_55 = arith.constant 0 : index
    %c0_56 = arith.constant 0 : index
    %74 = vector.load %arg10[%c0_55, %c0_56] : memref<1x32xf32, #tpu.memory_space<vmem>>, vector<1x32xf32>
    %75 = vector.shape_cast %74 : vector<1x32xf32> to vector<1x1x32xf32>
    %76 = vector.extract_strided_slice %73 {offsets = [0, 4, 0], sizes = [8, 16, 32], strides = [1, 1, 1]} : vector<8x24x96xf32> to vector<8x16x32xf32>
    %77 = vector.broadcast %75 : vector<1x1x32xf32> to vector<8x16x32xf32>
    %78 = arith.addf %77, %76 : vector<8x16x32xf32>
    %79 = vector.extract_strided_slice %73 {offsets = [0, 6, 32], sizes = [8, 16, 32], strides = [1, 1, 1]} : vector<8x24x96xf32> to vector<8x16x32xf32>
    %80 = arith.addf %78, %79 : vector<8x16x32xf32>
    %81 = vector.extract_strided_slice %73 {offsets = [0, 8, 64], sizes = [8, 16, 32], strides = [1, 1, 1]} : vector<8x24x96xf32> to vector<8x16x32xf32>
    %82 = arith.addf %80, %81 : vector<8x16x32xf32>
    %cst_57 = arith.constant 0.000000e+00 : f32
    %83 = vector.broadcast %cst_57 : f32 to vector<8x16x32xf32>
    %84 = arith.maximumf %82, %83 : vector<8x16x32xf32>
    %c0_58 = arith.constant 0 : index
    %c8_59 = arith.constant 8 : index
    %c0_60 = arith.constant 0 : index
    %85 = vector.load %arg14[%c0_58, %c8_59, %c0_60] : memref<8x24x32xf32, #tpu.memory_space<vmem>>, vector<8x16x32xf32>
    %86 = arith.addf %84, %85 : vector<8x16x32xf32>
    %cst_61 = arith.constant 0.000000e+00 : f32
    %87 = vector.broadcast %cst_61 : f32 to vector<8x16x32xf32>
    %88 = arith.maximumf %86, %87 : vector<8x16x32xf32>
    %c0_62 = arith.constant 0 : index
    %c8_63 = arith.constant 8 : index
    %c0_64 = arith.constant 0 : index
    %89 = vector.load %arg14[%c0_62, %c8_63, %c0_64] : memref<8x24x32xf32, #tpu.memory_space<vmem>>, vector<8x16x32xf32>
    tpu.vector_store %arg14[%c0_62, %c8_63, %c0_64], %88 {strides = array<i32>} : memref<8x24x32xf32, #tpu.memory_space<vmem>>, vector<8x16x32xf32>,
    %c0_65 = arith.constant 0 : index
    %c23 = arith.constant 23 : index
    %c0_66 = arith.constant 0 : index
    %90 = vector.load %arg14[%c0_65, %c23, %c0_66] : memref<8x24x32xf32, #tpu.memory_space<vmem>>, vector<8x1x32xf32>
    %c0_67 = arith.constant 0 : index
    %c0_68 = arith.constant 0 : index
    %91 = vector.load %arg11[%c0_67, %c0_68] : memref<1x32xf32, #tpu.memory_space<vmem>>, vector<1x32xf32>
    %92 = vector.shape_cast %91 : vector<1x32xf32> to vector<1x1x32xf32>
    %93 = vector.broadcast %92 : vector<1x1x32xf32> to vector<8x1x32xf32>
    %94 = arith.mulf %90, %93 : vector<8x1x32xf32>
    %cst_69 = arith.constant dense<0.000000e+00> : vector<8x1xf32>
    %95 = vector.multi_reduction <add>, %94, %cst_69 [2] : vector<8x1x32xf32> to vector<8x1xf32>
    %96 = vector.shape_cast %95 : vector<8x1xf32> to vector<8x1x1xf32>
    %c0_70 = arith.constant 0 : index
    %c0_71 = arith.constant 0 : index
    %97 = vector.load %arg12[%c0_70, %c0_71] : memref<1x1xf32, #tpu.memory_space<vmem>>, vector<1x1xf32>
    %98 = vector.shape_cast %97 : vector<1x1xf32> to vector<1x1x1xf32>
    %99 = vector.broadcast %98 : vector<1x1x1xf32> to vector<8x1x1xf32>
    %100 = arith.addf %96, %99 : vector<8x1x1xf32>
    %c0_72 = arith.constant 0 : index
    %c0_73 = arith.constant 0 : index
    %c0_74 = arith.constant 0 : index
    %101 = vector.load %arg13[%c0_72, %c0_73, %c0_74] : memref<8x1x1xf32, #tpu.memory_space<vmem>>, vector<8x1x1xf32>
    tpu.vector_store %arg13[%c0_72, %c0_73, %c0_74], %100 {strides = array<i32>} : memref<8x1x1xf32, #tpu.memory_space<vmem>>, vector<8x1x1xf32>,
    return
  }
  func.func @transform_0(%arg0: i32) -> (i32, i32, i32) {
    %c0_i32 = arith.constant 0 : i32
    %c0_i32_0 = arith.constant 0 : i32
    %c0_i32_1 = arith.constant 0 : i32
    return %arg0, %c0_i32, %c0_i32_0 : i32, i32, i32
  }
  func.func @transform_1(%arg0: i32) -> (i32, i32) {
    %c0_i32 = arith.constant 0 : i32
    %c0_i32_0 = arith.constant 0 : i32
    %c0_i32_1 = arith.constant 0 : i32
    return %c0_i32, %c0_i32_0 : i32, i32
  }
  func.func @transform_2(%arg0: i32) -> (i32, i32) {
    %c0_i32 = arith.constant 0 : i32
    %c0_i32_0 = arith.constant 0 : i32
    %c0_i32_1 = arith.constant 0 : i32
    return %c0_i32, %c0_i32_0 : i32, i32
  }
  func.func @transform_3(%arg0: i32) -> (i32, i32) {
    %c0_i32 = arith.constant 0 : i32
    %c0_i32_0 = arith.constant 0 : i32
    %c0_i32_1 = arith.constant 0 : i32
    return %c0_i32, %c0_i32_0 : i32, i32
  }
  func.func @transform_4(%arg0: i32) -> (i32, i32) {
    %c0_i32 = arith.constant 0 : i32
    %c0_i32_0 = arith.constant 0 : i32
    %c0_i32_1 = arith.constant 0 : i32
    return %c0_i32, %c0_i32_0 : i32, i32
  }
  func.func @transform_5(%arg0: i32) -> (i32, i32) {
    %c0_i32 = arith.constant 0 : i32
    %c0_i32_0 = arith.constant 0 : i32
    %c0_i32_1 = arith.constant 0 : i32
    return %c0_i32, %c0_i32_0 : i32, i32
  }
  func.func @transform_6(%arg0: i32) -> (i32, i32) {
    %c0_i32 = arith.constant 0 : i32
    %c0_i32_0 = arith.constant 0 : i32
    %c0_i32_1 = arith.constant 0 : i32
    return %c0_i32, %c0_i32_0 : i32, i32
  }
  func.func @transform_7(%arg0: i32) -> (i32, i32) {
    %c0_i32 = arith.constant 0 : i32
    %c0_i32_0 = arith.constant 0 : i32
    %c0_i32_1 = arith.constant 0 : i32
    return %c0_i32, %c0_i32_0 : i32, i32
  }
  func.func @transform_8(%arg0: i32) -> (i32, i32) {
    %c0_i32 = arith.constant 0 : i32
    %c0_i32_0 = arith.constant 0 : i32
    %c0_i32_1 = arith.constant 0 : i32
    return %c0_i32, %c0_i32_0 : i32, i32
  }
  func.func @transform_9(%arg0: i32) -> (i32, i32) {
    %c0_i32 = arith.constant 0 : i32
    %c0_i32_0 = arith.constant 0 : i32
    %c0_i32_1 = arith.constant 0 : i32
    return %c0_i32, %c0_i32_0 : i32, i32
  }
  func.func @transform_10(%arg0: i32) -> (i32, i32) {
    %c0_i32 = arith.constant 0 : i32
    %c0_i32_0 = arith.constant 0 : i32
    %c0_i32_1 = arith.constant 0 : i32
    return %c0_i32, %c0_i32_0 : i32, i32
  }
  func.func @transform_11(%arg0: i32) -> (i32, i32) {
    %c0_i32 = arith.constant 0 : i32
    %c0_i32_0 = arith.constant 0 : i32
    %c0_i32_1 = arith.constant 0 : i32
    return %c0_i32, %c0_i32_0 : i32, i32
  }
  func.func @transform_12(%arg0: i32) -> (i32, i32, i32) {
    %c0_i32 = arith.constant 0 : i32
    %c0_i32_0 = arith.constant 0 : i32
    %c0_i32_1 = arith.constant 0 : i32
    return %arg0, %c0_i32, %c0_i32_0 : i32, i32, i32
  }
}

</mosaic_0001>

<llo_original>
// kernel: tpu_custom_call.1
$region0: #{tpu_custom_call.1}
  #allocation0 [shape = 'u32[]', space=smem, size = 0x4, offset = 0x4, fixed_abs, tag = 'smem constant byte address 0x4 - core index']
  #allocation1 [shape = 'u32[144,128]{1,0:T(1,128)}', space=vmem, size = 0x12000, scoped, tag = 'internal scratch']
  #allocation2 [shape = 'f32[8,24,32]{2,1,0:T(8,128)}', space=vmem, size = 0x18000, scoped, tag = 'scratch operand']
  #allocation3 [shape = 'f32[8,24,32]{2,1,0:T(8,128)}', space=vmem, size = 0x18000, scoped, tag = 'scratch operand']
  #allocation4 [shape = 'f32[1,1]{1,0:T(1,128)S(1)}', space=vmem, size = 0x200, scoped, tag = 'scoped memory for tpu_custom_call.1']
  %s0 = inlined_call_operand.hbm [shape: bf16[8,16,16], index: 0, kind: input, shape index: {}]
  %s1 = inlined_call_operand.hbm [shape: bf16[32,128], index: 1, kind: input, shape index: {}]
  %s2 = inlined_call_operand.hbm [shape: f32[1,32], index: 2, kind: input, shape index: {}]
  %s3 = inlined_call_operand.hbm [shape: bf16[32,96], index: 3, kind: input, shape index: {}]
  %s4 = inlined_call_operand.hbm [shape: f32[1,32], index: 4, kind: input, shape index: {}]
  %s5 = inlined_call_operand.hbm [shape: f32[1,32], index: 5, kind: input, shape index: {}]
  %s6 = inlined_call_operand.hbm [shape: bf16[32,96], index: 6, kind: input, shape index: {}]
  %s7 = inlined_call_operand.hbm [shape: f32[1,32], index: 7, kind: input, shape index: {}]
  %s8 = inlined_call_operand.vmem [shape: bf16[32,96], index: 8, kind: input, shape index: {}]
  %s9 = inlined_call_operand.vmem [shape: f32[1,32], index: 9, kind: input, shape index: {}]
  %s10 = inlined_call_operand.vmem [shape: f32[1,32], index: 10, kind: input, shape index: {}]
  %s11 = inlined_call_operand.<no memory space> [shape: f32[1,1], index: 11, kind: input, shape index: {}]
  %s12 = inlined_call_operand.vmem [shape: f32[8,1,1], index: 12, kind: output, shape index: {}]
  %s13 = sld [smem:[#allocation0]]
  $region90: #{tpu_custom_call.1} parent=0
    _
  %s15 = ssub.s32 1, %s13
  %s16 = scalar_select 0, %s15, %s13
  %v17 = vstv %s11
  %18 = vst [vmem:[#allocation4] sm:$0x1] %v17
  $region1: #{tpu_custom_call.1} parent=0
    #allocation5 [shape = 'u8[32768]{0}', space=vmem, size = 0x8000, scoped, tag = 'input window, operand 0, single buffered']
    #allocation6 [shape = 's32[1]{0}', space=sflag, size = 0x4, scoped, tag = 'scoped memory for tpu_custom_call.1']
    #allocation7 [shape = 'u8[8192]{0}', space=vmem, size = 0x2000, scoped, tag = 'input window, operand 1, single buffered']
    #allocation8 [shape = 's32[1]{0}', space=sflag, size = 0x4, scoped, tag = 'scoped memory for tpu_custom_call.1']
    #allocation9 [shape = 'u8[512]{0}', space=vmem, size = 0x400, scoped, tag = 'input window, operand 2, single buffered']
    #allocation10 [shape = 'u8[8192]{0}', space=vmem, size = 0x2000, scoped, tag = 'input window, operand 3, single buffered']
    #allocation11 [shape = 's32[1]{0}', space=sflag, size = 0x4, scoped, tag = 'scoped memory for tpu_custom_call.1']
    #allocation12 [shape = 'u8[512]{0}', space=vmem, size = 0x400, scoped, tag = 'input window, operand 4, single buffered']
    #allocation13 [shape = 'u8[512]{0}', space=vmem, size = 0x400, scoped, tag = 'input window, operand 5, single buffered']
    #allocation14 [shape = 's32[1]{0}', space=sflag, size = 0x4, scoped, tag = 'scoped memory for tpu_custom_call.1']
    #allocation15 [shape = 'u8[8192]{0}', space=vmem, size = 0x2000, scoped, tag = 'input window, operand 6, single buffered']
    #allocation16 [shape = 'u8[512]{0}', space=vmem, size = 0x400, scoped, tag = 'input window, operand 7, single buffered']
    #allocation17 [shape = 's32[1]{0}', space=sflag, size = 0x4, scoped, tag = 'scoped memory for tpu_custom_call.1']
    %19 = vsyncpa [#allocation6], 0
    %20 = vsyncpa [#allocation8], 0
    %21 = vsyncpa [#allocation11], 0
    %22 = vsyncpa [#allocation14], 0
    %23 = vsyncpa [#allocation17], 0
    // Predicated region
    $region2: #{tpu_custom_call.1} parent=1 // pred_check
      _
    $region3: #{tpu_custom_call.1} parent=1 // pred_check_branch
      %25 = sbr.rel (0) target = $region5
    $region4: #{tpu_custom_call.1} parent=1 // pred_region
      %s27 = ssub.s32 1024, 1024
      %28 = vsyncadd [#allocation6], %s27
      %s29 = sshll.u32 [#allocation5], 4
      %s30 = int_to_ptr.vmem [resolvable:$true] %s29
      %35 = dma.hbm_to_vmem [thread:$0]  %s0, 1024, %s30, [#allocation6], 64, 64, 4
    $region5: #{tpu_custom_call.1} parent=1 // pred_fallthru
      _
    // Predicated region
    $region6: #{tpu_custom_call.1} parent=1 // pred_check
      _
    $region7: #{tpu_custom_call.1} parent=1 // pred_check_branch
      %37 = sbr.rel (0) target = $region9
    $region8: #{tpu_custom_call.1} parent=1 // pred_region
      %s39 = ssub.s32 256, 256
      %40 = vsyncadd [#allocation8], %s39
      %s41 = sshll.u32 [#allocation7], 4
      %s42 = int_to_ptr.vmem [resolvable:$true] %s41
      %47 = dma.hbm_to_vmem [thread:$0]  %s1, 256, %s42, [#allocation8], 64, 64, 4
    $region9: #{tpu_custom_call.1} parent=1 // pred_fallthru
      _
    // Predicated region
    $region10: #{tpu_custom_call.1} parent=1 // pred_check
      _
    $region11: #{tpu_custom_call.1} parent=1 // pred_check_branch
      %49 = sbr.rel (0) target = $region13
    $region12: #{tpu_custom_call.1} parent=1 // pred_region
      %s51 = ssub.s32 16, 16
      %52 = vsyncadd [#allocation8], %s51
      %s54 = sshll.u32 [#allocation9], 4
      %s55 = int_to_ptr.vmem [resolvable:$true] %s54
      %57 = dma.hbm_to_vmem [thread:$0]  %s2, 16, %s55, [#allocation8]
    $region13: #{tpu_custom_call.1} parent=1 // pred_fallthru
      _
    // Predicated region
    $region14: #{tpu_custom_call.1} parent=1 // pred_check
      _
    $region15: #{tpu_custom_call.1} parent=1 // pred_check_branch
      %59 = sbr.rel (0) target = $region17
    $region16: #{tpu_custom_call.1} parent=1 // pred_region
      %s61 = ssub.s32 256, 256
      %62 = vsyncadd [#allocation11], %s61
      %s63 = sshll.u32 [#allocation10], 4
      %s64 = int_to_ptr.vmem [resolvable:$true] %s63
      %69 = dma.hbm_to_vmem [thread:$0]  %s3, 256, %s64, [#allocation11], 64, 64, 4
    $region17: #{tpu_custom_call.1} parent=1 // pred_fallthru
      _
    // Predicated region
    $region18: #{tpu_custom_call.1} parent=1 // pred_check
      _
    $region19: #{tpu_custom_call.1} parent=1 // pred_check_branch
      %71 = sbr.rel (0) target = $region21
    $region20: #{tpu_custom_call.1} parent=1 // pred_region
      %s73 = ssub.s32 16, 16
      %74 = vsyncadd [#allocation11], %s73
      %s76 = sshll.u32 [#allocation12], 4
      %s77 = int_to_ptr.vmem [resolvable:$true] %s76
      %79 = dma.hbm_to_vmem [thread:$0]  %s4, 16, %s77, [#allocation11]
    $region21: #{tpu_custom_call.1} parent=1 // pred_fallthru
      _
    // Predicated region
    $region22: #{tpu_custom_call.1} parent=1 // pred_check
      _
    $region23: #{tpu_custom_call.1} parent=1 // pred_check_branch
      %81 = sbr.rel (0) target = $region25
    $region24: #{tpu_custom_call.1} parent=1 // pred_region
      %s83 = ssub.s32 16, 16
      %84 = vsyncadd [#allocation14], %s83
      %s86 = sshll.u32 [#allocation13], 4
      %s87 = int_to_ptr.vmem [resolvable:$true] %s86
      %89 = dma.hbm_to_vmem [thread:$0]  %s5, 16, %s87, [#allocation14]
    $region25: #{tpu_custom_call.1} parent=1 // pred_fallthru
      _
    // Predicated region
    $region26: #{tpu_custom_call.1} parent=1 // pred_check
      _
    $region27: #{tpu_custom_call.1} parent=1 // pred_check_branch
      %91 = sbr.rel (0) target = $region29
    $region28: #{tpu_custom_call.1} parent=1 // pred_region
      %s93 = ssub.s32 256, 256
      %94 = vsyncadd [#allocation14], %s93
      %s95 = sshll.u32 [#allocation15], 4
      %s96 = int_to_ptr.vmem [resolvable:$true] %s95
      %101 = dma.hbm_to_vmem [thread:$0]  %s6, 256, %s96, [#allocation14], 64, 64, 4
    $region29: #{tpu_custom_call.1} parent=1 // pred_fallthru
      _
    // Predicated region
    $region30: #{tpu_custom_call.1} parent=1 // pred_check
      _
    $region31: #{tpu_custom_call.1} parent=1 // pred_check_branch
      %103 = sbr.rel (0) target = $region33
    $region32: #{tpu_custom_call.1} parent=1 // pred_region
      %s105 = ssub.s32 16, 16
      %106 = vsyncadd [#allocation17], %s105
      %s108 = sshll.u32 [#allocation16], 4
      %s109 = int_to_ptr.vmem [resolvable:$true] %s108
      %111 = dma.hbm_to_vmem [thread:$0]  %s7, 16, %s109, [#allocation17]
    $region33: #{tpu_custom_call.1} parent=1 // pred_fallthru
      _
    // Predicated region
    $region34: #{tpu_custom_call.1} parent=1 // pred_check
      _
    $region35: #{tpu_custom_call.1} parent=1 // pred_check_branch
      %113 = sbr.rel (0) target = $region37
    $region36: #{tpu_custom_call.1} parent=1 // pred_region
      _
    $region37: #{tpu_custom_call.1} parent=1 // pred_fallthru
      _
    // Predicated region
    $region38: #{tpu_custom_call.1} parent=1 // pred_check
      _
    $region39: #{tpu_custom_call.1} parent=1 // pred_check_branch
      %115 = sbr.rel (0) target = $region41
    $region40: #{tpu_custom_call.1} parent=1 // pred_region
      _
    $region41: #{tpu_custom_call.1} parent=1 // pred_fallthru
      _
    // Predicated region
    $region42: #{tpu_custom_call.1} parent=1 // pred_check
      _
    $region43: #{tpu_custom_call.1} parent=1 // pred_check_branch
      %117 = sbr.rel (0) target = $region45
    $region44: #{tpu_custom_call.1} parent=1 // pred_region
      _
    $region45: #{tpu_custom_call.1} parent=1 // pred_fallthru
      _
    // Predicated region
    $region46: #{tpu_custom_call.1} parent=1 // pred_check
      _
    $region47: #{tpu_custom_call.1} parent=1 // pred_check_branch
      %119 = sbr.rel (0) target = $region49
    $region48: #{tpu_custom_call.1} parent=1 // pred_region
      _
    $region49: #{tpu_custom_call.1} parent=1 // pred_fallthru
      _
    // Predicated region
    $region50: #{tpu_custom_call.1} parent=1 // pred_check
      _
    $region51: #{tpu_custom_call.1} parent=1 // pred_check_branch
      %121 = sbr.rel (0) target = $region53
    $region52: #{tpu_custom_call.1} parent=1 // pred_region
      %122 = dma.done [#allocation6], 1024
    $region53: #{tpu_custom_call.1} parent=1 // pred_fallthru
      _
    // Predicated region
    $region54: #{tpu_custom_call.1} parent=1 // pred_check
      _
    $region55: #{tpu_custom_call.1} parent=1 // pred_check_branch
      %124 = sbr.rel (0) target = $region57
    $region56: #{tpu_custom_call.1} parent=1 // pred_region
      %125 = dma.done [#allocation8], 256
    $region57: #{tpu_custom_call.1} parent=1 // pred_fallthru
      _
    // Predicated region
    $region58: #{tpu_custom_call.1} parent=1 // pred_check
      _
    $region59: #{tpu_custom_call.1} parent=1 // pred_check_branch
      %127 = sbr.rel (0) target = $region61
    $region60: #{tpu_custom_call.1} parent=1 // pred_region
      %128 = dma.done [#allocation8], 16
    $region61: #{tpu_custom_call.1} parent=1 // pred_fallthru
      _
    // Predicated region
    $region62: #{tpu_custom_call.1} parent=1 // pred_check
      _
    $region63: #{tpu_custom_call.1} parent=1 // pred_check_branch
      %130 = sbr.rel (0) target = $region65
    $region64: #{tpu_custom_call.1} parent=1 // pred_region
      %131 = dma.done [#allocation11], 256
    $region65: #{tpu_custom_call.1} parent=1 // pred_fallthru
      _
    // Predicated region
    $region66: #{tpu_custom_call.1} parent=1 // pred_check
      _
    $region67: #{tpu_custom_call.1} parent=1 // pred_check_branch
      %133 = sbr.rel (0) target = $region69
    $region68: #{tpu_custom_call.1} parent=1 // pred_region
      %134 = dma.done [#allocation11], 16
    $region69: #{tpu_custom_call.1} parent=1 // pred_fallthru
      _
    // Predicated region
    $region70: #{tpu_custom_call.1} parent=1 // pred_check
      _
    $region71: #{tpu_custom_call.1} parent=1 // pred_check_branch
      %136 = sbr.rel (0) target = $region73
    $region72: #{tpu_custom_call.1} parent=1 // pred_region
      %137 = dma.done [#allocation14], 16
    $region73: #{tpu_custom_call.1} parent=1 // pred_fallthru
      _
    // Predicated region
    $region74: #{tpu_custom_call.1} parent=1 // pred_check
      _
    $region75: #{tpu_custom_call.1} parent=1 // pred_check_branch
      %139 = sbr.rel (0) target = $region77
    $region76: #{tpu_custom_call.1} parent=1 // pred_region
      %140 = dma.done [#allocation14], 256
    $region77: #{tpu_custom_call.1} parent=1 // pred_fallthru
      _
    // Predicated region
    $region78: #{tpu_custom_call.1} parent=1 // pred_check
      _
    $region79: #{tpu_custom_call.1} parent=1 // pred_check_branch
      %142 = sbr.rel (0) target = $region81
    $region80: #{tpu_custom_call.1} parent=1 // pred_region
      %143 = dma.done [#allocation17], 16
    $region81: #{tpu_custom_call.1} parent=1 // pred_fallthru
      _
    %vm145 = vcmask 261120
    %146 = vst.msk [vmem:[#allocation2] sm:$0xff] %vm145, 0.0
    %147 = vst.msk [vmem:[#allocation2 + $0x8] sm:$0xff] %vm145, 0.0
    %148 = vst.msk [vmem:[#allocation2 + $0x10] sm:$0xff] %vm145, 0.0
    %149 = vst.msk [vmem:[#allocation2 + $0x18] sm:$0xff] %vm145, 0.0
    %150 = vst.msk [vmem:[#allocation2 + $0x20] sm:$0xff] %vm145, 0.0
    %151 = vst.msk [vmem:[#allocation2 + $0x28] sm:$0xff] %vm145, 0.0
    %152 = vst.msk [vmem:[#allocation2 + $0x30] sm:$0xff] %vm145, 0.0
    %153 = vst.msk [vmem:[#allocation2 + $0x38] sm:$0xff] %vm145, 0.0
    %154 = vst.msk [vmem:[#allocation2 + $0x40] sm:$0xff] %vm145, 0.0
    %155 = vst.msk [vmem:[#allocation2 + $0x48] sm:$0xff] %vm145, 0.0
    %156 = vst.msk [vmem:[#allocation2 + $0x50] sm:$0xff] %vm145, 0.0
    %157 = vst.msk [vmem:[#allocation2 + $0x58] sm:$0xff] %vm145, 0.0
    %158 = vst.msk [vmem:[#allocation2 + $0x60] sm:$0xff] %vm145, 0.0
    %159 = vst.msk [vmem:[#allocation2 + $0x68] sm:$0xff] %vm145, 0.0
    %160 = vst.msk [vmem:[#allocation2 + $0x70] sm:$0xff] %vm145, 0.0
    %161 = vst.msk [vmem:[#allocation2 + $0x78] sm:$0xff] %vm145, 0.0
    %162 = vst.msk [vmem:[#allocation2 + $0x80] sm:$0xff] %vm145, 0.0
    %163 = vst.msk [vmem:[#allocation2 + $0x88] sm:$0xff] %vm145, 0.0
    %164 = vst.msk [vmem:[#allocation2 + $0x90] sm:$0xff] %vm145, 0.0
    %165 = vst.msk [vmem:[#allocation2 + $0x98] sm:$0xff] %vm145, 0.0
    %166 = vst.msk [vmem:[#allocation2 + $0xa0] sm:$0xff] %vm145, 0.0
    %167 = vst.msk [vmem:[#allocation2 + $0xa8] sm:$0xff] %vm145, 0.0
    %168 = vst.msk [vmem:[#allocation2 + $0xb0] sm:$0xff] %vm145, 0.0
    %169 = vst.msk [vmem:[#allocation2 + $0xb8] sm:$0xff] %vm145, 0.0
    %170 = vst.msk [vmem:[#allocation3] sm:$0xff] %vm145, 0.0
    %171 = vst.msk [vmem:[#allocation3 + $0x8] sm:$0xff] %vm145, 0.0
    %172 = vst.msk [vmem:[#allocation3 + $0x10] sm:$0xff] %vm145, 0.0
    %173 = vst.msk [vmem:[#allocation3 + $0x18] sm:$0xff] %vm145, 0.0
    %174 = vst.msk [vmem:[#allocation3 + $0x20] sm:$0xff] %vm145, 0.0
    %175 = vst.msk [vmem:[#allocation3 + $0x28] sm:$0xff] %vm145, 0.0
    %176 = vst.msk [vmem:[#allocation3 + $0x30] sm:$0xff] %vm145, 0.0
    %177 = vst.msk [vmem:[#allocation3 + $0x38] sm:$0xff] %vm145, 0.0
    %178 = vst.msk [vmem:[#allocation3 + $0x40] sm:$0xff] %vm145, 0.0
    %179 = vst.msk [vmem:[#allocation3 + $0x48] sm:$0xff] %vm145, 0.0
    %180 = vst.msk [vmem:[#allocation3 + $0x50] sm:$0xff] %vm145, 0.0
    %181 = vst.msk [vmem:[#allocation3 + $0x58] sm:$0xff] %vm145, 0.0
    %182 = vst.msk [vmem:[#allocation3 + $0x60] sm:$0xff] %vm145, 0.0
    %183 = vst.msk [vmem:[#allocation3 + $0x68] sm:$0xff] %vm145, 0.0
    %184 = vst.msk [vmem:[#allocation3 + $0x70] sm:$0xff] %vm145, 0.0
    %185 = vst.msk [vmem:[#allocation3 + $0x78] sm:$0xff] %vm145, 0.0
    %186 = vst.msk [vmem:[#allocation3 + $0x80] sm:$0xff] %vm145, 0.0
    %187 = vst.msk [vmem:[#allocation3 + $0x88] sm:$0xff] %vm145, 0.0
    %188 = vst.msk [vmem:[#allocation3 + $0x90] sm:$0xff] %vm145, 0.0
    %189 = vst.msk [vmem:[#allocation3 + $0x98] sm:$0xff] %vm145, 0.0
    %190 = vst.msk [vmem:[#allocation3 + $0xa0] sm:$0xff] %vm145, 0.0
    %191 = vst.msk [vmem:[#allocation3 + $0xa8] sm:$0xff] %vm145, 0.0
    %192 = vst.msk [vmem:[#allocation3 + $0xb0] sm:$0xff] %vm145, 0.0
    %193 = vst.msk [vmem:[#allocation3 + $0xb8] sm:$0xff] %vm145, 0.0
    %v194 = vld [vmem:[#allocation5] sm:$0xf]
    %v195 = vld [vmem:[#allocation5 + $0x4] sm:$0xf]
    %v196 = vld [vmem:[#allocation5 + $0x8] sm:$0xf]
    %v197 = vld [vmem:[#allocation5 + $0xc] sm:$0xf]
    %v198 = vld [vmem:[#allocation5 + $0x10] sm:$0xf]
    %v199 = vld [vmem:[#allocation5 + $0x14] sm:$0xf]
    %v200 = vld [vmem:[#allocation5 + $0x18] sm:$0xf]
    %v201 = vld [vmem:[#allocation5 + $0x1c] sm:$0xf]
    %v202 = vld [vmem:[#allocation5 + $0x20] sm:$0xf]
    %v203 = vld [vmem:[#allocation5 + $0x24] sm:$0xf]
    %v204 = vld [vmem:[#allocation5 + $0x28] sm:$0xf]
    %v205 = vld [vmem:[#allocation5 + $0x2c] sm:$0xf]
    %v206 = vld [vmem:[#allocation5 + $0x30] sm:$0xf]
    %v207 = vld [vmem:[#allocation5 + $0x34] sm:$0xf]
    %v208 = vld [vmem:[#allocation5 + $0x38] sm:$0xf]
    %v209 = vld [vmem:[#allocation5 + $0x3c] sm:$0xf]
    %v210 = vunpack.c.l.bf16 %v194
    %v211 = vunpack.c.l.bf16 %v195
    %v212 = vunpack.c.l.bf16 %v196
    %v213 = vunpack.c.l.bf16 %v197
    %v214 = vunpack.c.l.bf16 %v198
    %v215 = vunpack.c.l.bf16 %v199
    %v216 = vunpack.c.l.bf16 %v200
    %v217 = vunpack.c.l.bf16 %v201
    %v218 = vunpack.c.l.bf16 %v202
    %v219 = vunpack.c.l.bf16 %v203
    %v220 = vunpack.c.l.bf16 %v204
    %v221 = vunpack.c.l.bf16 %v205
    %v222 = vunpack.c.l.bf16 %v206
    %v223 = vunpack.c.l.bf16 %v207
    %v224 = vunpack.c.l.bf16 %v208
    %v225 = vunpack.c.l.bf16 %v209
    %vm226 = vcmask 130048
    %227 = vst.msk [vmem:[#allocation2 + $0x8] sm:$0xff] %vm226, %v210
    %228 = vst.msk [vmem:[#allocation2 + $0x10] sm:$0xff] %vm226, %v211
    %229 = vst.msk [vmem:[#allocation2 + $0x20] sm:$0xff] %vm226, %v212
    %230 = vst.msk [vmem:[#allocation2 + $0x28] sm:$0xff] %vm226, %v213
    %231 = vst.msk [vmem:[#allocation2 + $0x38] sm:$0xff] %vm226, %v214
    %232 = vst.msk [vmem:[#allocation2 + $0x40] sm:$0xff] %vm226, %v215
    %233 = vst.msk [vmem:[#allocation2 + $0x50] sm:$0xff] %vm226, %v216
    %234 = vst.msk [vmem:[#allocation2 + $0x58] sm:$0xff] %vm226, %v217
    %235 = vst.msk [vmem:[#allocation2 + $0x68] sm:$0xff] %vm226, %v218
    %236 = vst.msk [vmem:[#allocation2 + $0x70] sm:$0xff] %vm226, %v219
    %237 = vst.msk [vmem:[#allocation2 + $0x80] sm:$0xff] %vm226, %v220
    %238 = vst.msk [vmem:[#allocation2 + $0x88] sm:$0xff] %vm226, %v221
    %239 = vst.msk [vmem:[#allocation2 + $0x98] sm:$0xff] %vm226, %v222
    %240 = vst.msk [vmem:[#allocation2 + $0xa0] sm:$0xff] %vm226, %v223
    %241 = vst.msk [vmem:[#allocation2 + $0xb0] sm:$0xff] %vm226, %v224
    %242 = vst.msk [vmem:[#allocation2 + $0xb8] sm:$0xff] %vm226, %v225
    %v243 = vld [vmem:[#allocation2] sm:$0xff]
    %v244 = vld [vmem:[#allocation2 + $0x8] sm:$0xff]
    %v245 = vld [vmem:[#allocation2 + $0x10] sm:$0xff]
    %v246 = vld [vmem:[#allocation2 + $0x18] sm:$0xff]
    %v247 = vld [vmem:[#allocation2 + $0x20] sm:$0xff]
    %v248 = vld [vmem:[#allocation2 + $0x28] sm:$0xff]
    %v249 = vld [vmem:[#allocation2 + $0x30] sm:$0xff]
    %v250 = vld [vmem:[#allocation2 + $0x38] sm:$0xff]
    %v251 = vld [vmem:[#allocation2 + $0x40] sm:$0xff]
    %v252 = vld [vmem:[#allocation2 + $0x48] sm:$0xff]
    %v253 = vld [vmem:[#allocation2 + $0x50] sm:$0xff]
    %v254 = vld [vmem:[#allocation2 + $0x58] sm:$0xff]
    %v255 = vld [vmem:[#allocation2 + $0x60] sm:$0xff]
    %v256 = vld [vmem:[#allocation2 + $0x68] sm:$0xff]
    %v257 = vld [vmem:[#allocation2 + $0x70] sm:$0xff]
    %v258 = vld [vmem:[#allocation2 + $0x78] sm:$0xff]
    %v259 = vld [vmem:[#allocation2 + $0x80] sm:$0xff]
    %v260 = vld [vmem:[#allocation2 + $0x88] sm:$0xff]
    %v261 = vld [vmem:[#allocation2 + $0x90] sm:$0xff]
    %v262 = vld [vmem:[#allocation2 + $0x98] sm:$0xff]
    %v263 = vld [vmem:[#allocation2 + $0xa0] sm:$0xff]
    %v264 = vld [vmem:[#allocation2 + $0xa8] sm:$0xff]
    %v265 = vld [vmem:[#allocation2 + $0xb0] sm:$0xff]
    %v266 = vld [vmem:[#allocation2 + $0xb8] sm:$0xff]
    %v267 = vpack.c.bf16 %v244, %v243
    %v268 = vpack.c.bf16 %v245, %v245
    %v269 = vpack.c.bf16 %v247, %v246
    %v270 = vpack.c.bf16 %v248, %v248
    %v271 = vpack.c.bf16 %v250, %v249
    %v272 = vpack.c.bf16 %v251, %v251
    %v273 = vpack.c.bf16 %v253, %v252
    %v274 = vpack.c.bf16 %v254, %v254
    %v275 = vpack.c.bf16 %v256, %v255
    %v276 = vpack.c.bf16 %v257, %v257
    %v277 = vpack.c.bf16 %v259, %v258
    %v278 = vpack.c.bf16 %v260, %v260
    %v279 = vpack.c.bf16 %v262, %v261
    %v280 = vpack.c.bf16 %v263, %v263
    %v281 = vpack.c.bf16 %v265, %v264
    %v282 = vpack.c.bf16 %v266, %v266
    %v299 = vunpack.c.l.b16 %v267
    %v300 = vunpack.c.h.b16 %v267
    %v301 = vunpack.c.l.b16 %v268
    %v302 = vunpack.c.l.b16 %v269
    %v303 = vunpack.c.h.b16 %v269
    %v304 = vunpack.c.l.b16 %v270
    %v305 = vunpack.c.l.b16 %v271
    %v306 = vunpack.c.h.b16 %v271
    %v307 = vunpack.c.l.b16 %v272
    %v308 = vunpack.c.l.b16 %v273
    %v309 = vunpack.c.h.b16 %v273
    %v310 = vunpack.c.l.b16 %v274
    %v311 = vunpack.c.l.b16 %v275
    %v312 = vunpack.c.h.b16 %v275
    %v313 = vunpack.c.l.b16 %v276
    %v314 = vunpack.c.l.b16 %v277
    %v315 = vunpack.c.h.b16 %v277
    %v316 = vunpack.c.l.b16 %v278
    %v317 = vunpack.c.l.b16 %v279
    %v318 = vunpack.c.h.b16 %v279
    %v319 = vunpack.c.l.b16 %v280
    %v320 = vunpack.c.l.b16 %v281
    %v321 = vunpack.c.h.b16 %v281
    %v322 = vunpack.c.l.b16 %v282
    %v323 = vld [vmem:[#allocation7] sm:$0xf]
    %v324 = vld [vmem:[#allocation7 + $0x4] sm:$0xf]
    %v325 = vld [vmem:[#allocation7 + $0x8] sm:$0xf]
    %v326 = vld [vmem:[#allocation7 + $0xc] sm:$0xf]
    %v327 = vpack.c.b16 %v300, %v299
    %v328 = vpack.c.b16 %v302, %v301
    %v329 = vpack.c.b16 %v304, %v303
    %v330 = vpack.c.b16 %v306, %v305
    %v331 = vpack.c.b16 %v308, %v307
    %v332 = vpack.c.b16 %v310, %v309
    %v333 = vpack.c.b16 %v312, %v311
    %v334 = vpack.c.b16 %v314, %v313
    %v335 = vpack.c.b16 %v316, %v315
    %v336 = vpack.c.b16 %v318, %v317
    %v337 = vpack.c.b16 %v320, %v319
    %v338 = vpack.c.b16 %v322, %v321
    %v343 = vunpack.c.l.b16 %v323
    %v344 = vunpack.c.l.b16 %v324
    %v345 = vunpack.c.l.b16 %v325
    %v346 = vunpack.c.l.b16 %v326
    %v347 = vpack.c.b16 %v344, %v343
    %v348 = vpack.c.b16 %v346, %v345
    %v352 = vsel %vm145, %v327, 0
    %v355 = vsel %vm145, %v328, 0
    %v358 = vsel %vm145, %v329, 0
    %v361 = vsel %vm145, %v330, 0
    %v364 = vsel %vm145, %v331, 0
    %v367 = vsel %vm145, %v332, 0
    %v370 = vsel %vm145, %v333, 0
    %v373 = vsel %vm145, %v334, 0
    %v376 = vsel %vm145, %v335, 0
    %v379 = vsel %vm145, %v336, 0
    %v382 = vsel %vm145, %v337, 0
    %v385 = vsel %vm145, %v338, 0
    %387 = vmatprep.subr.bf16.mxu0 0
    %388 = vmatpush1.bf16.msra.mxu0 0
    %389 = vmatprep.subr.bf16.mxu0 0
    %390 = vmatpush1.bf16.msra.mxu0 0
    %391 = vmatprep.subr.bf16.mxu0 0
    %392 = vmatpush1.bf16.msra.mxu0 0
    %393 = vmatprep.subr.bf16.mxu0 0
    %394 = vmatpush1.bf16.msra.mxu0 0
    %395 = vmatprep.subr.bf16.mxu0 0
    %396 = vmatpush1.bf16.msra.mxu0 0
    %397 = vmatprep.subr.bf16.mxu0 0
    %398 = vmatpush1.bf16.msra.mxu0 0
    %399 = vmatprep.subr.bf16.mxu0 0
    %400 = vmatpush1.bf16.msra.mxu0 %v348
    %401 = vmatprep.subr.bf16.mxu0 0
    %402 = vmatpush1.bf16.msra.mxu0 %v347
    %403 = vmatprep.subr.bf16.mxu0 0
    %404 = vmatpush2.bf16.msra.mxu0 0
    %405 = vmatprep.subr.bf16.mxu0 0
    %406 = vmatpush2.bf16.msra.mxu0 0
    %407 = vmatprep.subr.bf16.mxu0 0
    %408 = vmatpush2.bf16.msra.mxu0 0
    %409 = vmatprep.subr.bf16.mxu0 0
    %410 = vmatpush2.bf16.msra.mxu0 0
    %411 = vmatprep.subr.bf16.mxu0 0
    %412 = vmatpush2.bf16.msra.mxu0 0
    %413 = vmatprep.subr.bf16.mxu0 0
    %414 = vmatpush2.bf16.msra.mxu0 0
    %415 = vmatprep.subr.bf16.mxu0 0
    %416 = vmatpush2.bf16.msra.mxu0 0
    %417 = vmatprep.subr.bf16.mxu0 0
    %418 = vmatpush2.bf16.msra.mxu0 0
    %419 = vmatprep.mubr.bf16.mxu0 0
    %420 = vmatmul.mubr.bf16.gmra.mxu0 %v352
    %v421 = vpop.f32.mrf.mxu0
    %v422 = vadd.f32 0.0, %v421
    %v423 = vpop.f32.mrf.mxu0
    %v424 = vpop.f32.mrf.mxu0
    %v425 = vadd.f32 0.0, %v424
    %v426 = vpop.f32.mrf.mxu0
    %427 = vmatprep.mubr.bf16.mxu0 0
    %428 = vmatmul.mubr.bf16.gmra.mxu0 %v355
    %v429 = vpop.f32.mrf.mxu0
    %v430 = vadd.f32 0.0, %v429
    %v431 = vpop.f32.mrf.mxu0
    %v432 = vpop.f32.mrf.mxu0
    %v433 = vadd.f32 0.0, %v432
    %v434 = vpop.f32.mrf.mxu0
    %435 = vmatprep.mubr.bf16.mxu0 0
    %436 = vmatmul.mubr.bf16.gmra.mxu0 %v358
    %v437 = vpop.f32.mrf.mxu0
    %v438 = vadd.f32 0.0, %v437
    %v439 = vpop.f32.mrf.mxu0
    %v440 = vpop.f32.mrf.mxu0
    %v441 = vadd.f32 0.0, %v440
    %v442 = vpop.f32.mrf.mxu0
    %443 = vmatprep.mubr.bf16.mxu0 0
    %444 = vmatmul.mubr.bf16.gmra.mxu0 %v361
    %v445 = vpop.f32.mrf.mxu0
    %v446 = vadd.f32 0.0, %v445
    %v447 = vpop.f32.mrf.mxu0
    %v448 = vpop.f32.mrf.mxu0
    %v449 = vadd.f32 0.0, %v448
    %v450 = vpop.f32.mrf.mxu0
    %451 = vmatprep.mubr.bf16.mxu0 0
    %452 = vmatmul.mubr.bf16.gmra.mxu0 %v364
    %v453 = vpop.f32.mrf.mxu0
    %v454 = vadd.f32 0.0, %v453
    %v455 = vpop.f32.mrf.mxu0
    %v456 = vpop.f32.mrf.mxu0
    %v457 = vadd.f32 0.0, %v456
    %v458 = vpop.f32.mrf.mxu0
    %459 = vmatprep.mubr.bf16.mxu0 0
    %460 = vmatmul.mubr.bf16.gmra.mxu0 %v367
    %v461 = vpop.f32.mrf.mxu0
    %v462 = vadd.f32 0.0, %v461
    %v463 = vpop.f32.mrf.mxu0
    %v464 = vpop.f32.mrf.mxu0
    %v465 = vadd.f32 0.0, %v464
    %v466 = vpop.f32.mrf.mxu0
    %467 = vmatprep.mubr.bf16.mxu0 0
    %468 = vmatmul.mubr.bf16.gmra.mxu0 %v370
    %v469 = vpop.f32.mrf.mxu0
    %v470 = vadd.f32 0.0, %v469
    %v471 = vpop.f32.mrf.mxu0
    %v472 = vpop.f32.mrf.mxu0
    %v473 = vadd.f32 0.0, %v472
    %v474 = vpop.f32.mrf.mxu0
    %475 = vmatprep.mubr.bf16.mxu0 0
    %476 = vmatmul.mubr.bf16.gmra.mxu0 %v373
    %v477 = vpop.f32.mrf.mxu0
    %v478 = vadd.f32 0.0, %v477
    %v479 = vpop.f32.mrf.mxu0
    %v480 = vpop.f32.mrf.mxu0
    %v481 = vadd.f32 0.0, %v480
    %v482 = vpop.f32.mrf.mxu0
    %483 = vmatprep.mubr.bf16.mxu0 0
    %484 = vmatmul.mubr.bf16.gmra.mxu0 %v376
    %v485 = vpop.f32.mrf.mxu0
    %v486 = vadd.f32 0.0, %v485
    %v487 = vpop.f32.mrf.mxu0
    %v488 = vpop.f32.mrf.mxu0
    %v489 = vadd.f32 0.0, %v488
    %v490 = vpop.f32.mrf.mxu0
    %491 = vmatprep.mubr.bf16.mxu0 0
    %492 = vmatmul.mubr.bf16.gmra.mxu0 %v379
    %v493 = vpop.f32.mrf.mxu0
    %v494 = vadd.f32 0.0, %v493
    %v495 = vpop.f32.mrf.mxu0
    %v496 = vpop.f32.mrf.mxu0
    %v497 = vadd.f32 0.0, %v496
    %v498 = vpop.f32.mrf.mxu0
    %499 = vmatprep.mubr.bf16.mxu0 0
    %500 = vmatmul.mubr.bf16.gmra.mxu0 %v382
    %v501 = vpop.f32.mrf.mxu0
    %v502 = vadd.f32 0.0, %v501
    %v503 = vpop.f32.mrf.mxu0
    %v504 = vpop.f32.mrf.mxu0
    %v505 = vadd.f32 0.0, %v504
    %v506 = vpop.f32.mrf.mxu0
    %507 = vmatprep.mubr.bf16.mxu0 0
    %508 = vmatmul.mubr.bf16.gmra.mxu0 %v385
    %v509 = vpop.f32.mrf.mxu0
    %v510 = vadd.f32 0.0, %v509
    %v511 = vpop.f32.mrf.mxu0
    %v512 = vpop.f32.mrf.mxu0
    %v513 = vadd.f32 0.0, %v512
    %v514 = vpop.f32.mrf.mxu0
    %515 = vdwg.mxu0
    %v516 = vld [vmem:[#allocation9] sm:$0x1]
    %v518 = vlaneseq
    %v519 = vshrl.u32 %v518, 7
    %v520 = vsub.s32 0, %v519
    %v521 = vrot.slane %v516, %v520
    %v523 = vadd.f32 %v521, %v422
    %v524 = vadd.f32 %v521, %v425
    %v525 = vadd.f32 %v521, %v430
    %v526 = vadd.f32 %v521, %v433
    %v527 = vadd.f32 %v521, %v438
    %v528 = vadd.f32 %v521, %v441
    %v529 = vadd.f32 %v521, %v446
    %v530 = vadd.f32 %v521, %v449
    %v531 = vadd.f32 %v521, %v454
    %v532 = vadd.f32 %v521, %v457
    %v533 = vadd.f32 %v521, %v462
    %v534 = vadd.f32 %v521, %v465
    %v535 = vadd.f32 %v521, %v470
    %v536 = vadd.f32 %v521, %v473
    %v537 = vadd.f32 %v521, %v478
    %v538 = vadd.f32 %v521, %v481
    %v539 = vadd.f32 %v521, %v486
    %v540 = vadd.f32 %v521, %v489
    %v541 = vadd.f32 %v521, %v494
    %v542 = vadd.f32 %v521, %v497
    %v543 = vadd.f32 %v521, %v502
    %v544 = vadd.f32 %v521, %v505
    %v545 = vadd.f32 %v521, %v510
    %v546 = vadd.f32 %v521, %v513
    %vm571 = vcmask 1046528
    %v572 = vrot.slane %v422, 1
    %v573 = vrot.slane %v425, 1
    %v574 = vsel %vm571, %v572, %v573
    %v575 = vrot.slane %v430, 1
    %v576 = vsel %vm571, %v573, %v575
    %v577 = vrot.slane %v433, 1
    %v578 = vrot.slane %v438, 1
    %v579 = vsel %vm571, %v577, %v578
    %v580 = vrot.slane %v441, 1
    %v581 = vsel %vm571, %v578, %v580
    %v582 = vrot.slane %v446, 1
    %v583 = vrot.slane %v449, 1
    %v584 = vsel %vm571, %v582, %v583
    %v585 = vrot.slane %v454, 1
    %v586 = vsel %vm571, %v583, %v585
    %v587 = vrot.slane %v457, 1
    %v588 = vrot.slane %v462, 1
    %v589 = vsel %vm571, %v587, %v588
    %v590 = vrot.slane %v465, 1
    %v591 = vsel %vm571, %v588, %v590
    %v592 = vrot.slane %v470, 1
    %v593 = vrot.slane %v473, 1
    %v594 = vsel %vm571, %v592, %v593
    %v595 = vrot.slane %v478, 1
    %v596 = vsel %vm571, %v593, %v595
    %v597 = vrot.slane %v481, 1
    %v598 = vrot.slane %v486, 1
    %v599 = vsel %vm571, %v597, %v598
    %v600 = vrot.slane %v489, 1
    %v601 = vsel %vm571, %v598, %v600
    %v602 = vrot.slane %v494, 1
    %v603 = vrot.slane %v497, 1
    %v604 = vsel %vm571, %v602, %v603
    %v605 = vrot.slane %v502, 1
    %v606 = vsel %vm571, %v603, %v605
    %v607 = vrot.slane %v505, 1
    %v608 = vrot.slane %v510, 1
    %v609 = vsel %vm571, %v607, %v608
    %v610 = vrot.slane %v513, 1
    %v611 = vsel %vm571, %v608, %v610
    %612 = vrot.lane.b32.xlu0 %v574, 96
    %v613 = vpop.permute.xlu0 %612
    %614 = vrot.lane.b32.xlu0 %v576, 96
    %v615 = vpop.permute.xlu0 %614
    %616 = vrot.lane.b32.xlu0 %v575, 96
    %v617 = vpop.permute.xlu0 %616
    %618 = vrot.lane.b32.xlu0 %v579, 96
    %v619 = vpop.permute.xlu0 %618
    %620 = vrot.lane.b32.xlu0 %v581, 96
    %v621 = vpop.permute.xlu0 %620
    %622 = vrot.lane.b32.xlu0 %v580, 96
    %v623 = vpop.permute.xlu0 %622
    %624 = vrot.lane.b32.xlu0 %v584, 96
    %v625 = vpop.permute.xlu0 %624
    %626 = vrot.lane.b32.xlu0 %v586, 96
    %v627 = vpop.permute.xlu0 %626
    %628 = vrot.lane.b32.xlu0 %v585, 96
    %v629 = vpop.permute.xlu0 %628
    %630 = vrot.lane.b32.xlu0 %v589, 96
    %v631 = vpop.permute.xlu0 %630
    %632 = vrot.lane.b32.xlu0 %v591, 96
    %v633 = vpop.permute.xlu0 %632
    %634 = vrot.lane.b32.xlu0 %v590, 96
    %v635 = vpop.permute.xlu0 %634
    %636 = vrot.lane.b32.xlu0 %v594, 96
    %v637 = vpop.permute.xlu0 %636
    %638 = vrot.lane.b32.xlu0 %v596, 96
    %v639 = vpop.permute.xlu0 %638
    %640 = vrot.lane.b32.xlu0 %v595, 96
    %v641 = vpop.permute.xlu0 %640
    %642 = vrot.lane.b32.xlu0 %v599, 96
    %v643 = vpop.permute.xlu0 %642
    %644 = vrot.lane.b32.xlu0 %v601, 96
    %v645 = vpop.permute.xlu0 %644
    %646 = vrot.lane.b32.xlu0 %v600, 96
    %v647 = vpop.permute.xlu0 %646
    %648 = vrot.lane.b32.xlu0 %v604, 96
    %v649 = vpop.permute.xlu0 %648
    %650 = vrot.lane.b32.xlu0 %v606, 96
    %v651 = vpop.permute.xlu0 %650
    %652 = vrot.lane.b32.xlu0 %v605, 96
    %v653 = vpop.permute.xlu0 %652
    %654 = vrot.lane.b32.xlu0 %v609, 96
    %v655 = vpop.permute.xlu0 %654
    %656 = vrot.lane.b32.xlu0 %v611, 96
    %v657 = vpop.permute.xlu0 %656
    %658 = vrot.lane.b32.xlu0 %v610, 96
    %v659 = vpop.permute.xlu0 %658
    %v684 = vadd.f32 %v523, %v613
    %v685 = vadd.f32 %v524, %v615
    %v686 = vadd.f32 %v525, %v617
    %v687 = vadd.f32 %v526, %v619
    %v688 = vadd.f32 %v527, %v621
    %v689 = vadd.f32 %v528, %v623
    %v690 = vadd.f32 %v529, %v625
    %v691 = vadd.f32 %v530, %v627
    %v692 = vadd.f32 %v531, %v629
    %v693 = vadd.f32 %v532, %v631
    %v694 = vadd.f32 %v533, %v633
    %v695 = vadd.f32 %v534, %v635
    %v696 = vadd.f32 %v535, %v637
    %v697 = vadd.f32 %v536, %v639
    %v698 = vadd.f32 %v537, %v641
    %v699 = vadd.f32 %v538, %v643
    %v700 = vadd.f32 %v539, %v645
    %v701 = vadd.f32 %v540, %v647
    %v702 = vadd.f32 %v541, %v649
    %v703 = vadd.f32 %v542, %v651
    %v704 = vadd.f32 %v543, %v653
    %v705 = vadd.f32 %v544, %v655
    %v706 = vadd.f32 %v545, %v657
    %v707 = vadd.f32 %v546, %v659
    %vm708 = vcmask 1045504
    %v709 = vrot.slane %v425, 2
    %v710 = vrot.slane %v430, 2
    %v711 = vsel %vm708, %v709, %v710
    %v712 = vrot.slane %v438, 2
    %v713 = vrot.slane %v441, 2
    %v714 = vsel %vm708, %v712, %v713
    %v715 = vrot.slane %v449, 2
    %v716 = vrot.slane %v454, 2
    %v717 = vsel %vm708, %v715, %v716
    %v718 = vrot.slane %v462, 2
    %v719 = vrot.slane %v465, 2
    %v720 = vsel %vm708, %v718, %v719
    %v721 = vrot.slane %v473, 2
    %v722 = vrot.slane %v478, 2
    %v723 = vsel %vm708, %v721, %v722
    %v724 = vrot.slane %v486, 2
    %v725 = vrot.slane %v489, 2
    %v726 = vsel %vm708, %v724, %v725
    %v727 = vrot.slane %v497, 2
    %v728 = vrot.slane %v502, 2
    %v729 = vsel %vm708, %v727, %v728
    %v730 = vrot.slane %v510, 2
    %v731 = vrot.slane %v513, 2
    %v732 = vsel %vm708, %v730, %v731
    %733 = vrot.lane.b32.xlu0 %v709, 64
    %v734 = vpop.permute.xlu0 %733
    %735 = vrot.lane.b32.xlu0 %v711, 64
    %v736 = vpop.permute.xlu0 %735
    %737 = vrot.lane.b32.xlu0 %v710, 64
    %v738 = vpop.permute.xlu0 %737
    %739 = vrot.lane.b32.xlu0 %v712, 64
    %v740 = vpop.permute.xlu0 %739
    %741 = vrot.lane.b32.xlu0 %v714, 64
    %v742 = vpop.permute.xlu0 %741
    %743 = vrot.lane.b32.xlu0 %v713, 64
    %v744 = vpop.permute.xlu0 %743
    %745 = vrot.lane.b32.xlu0 %v715, 64
    %v746 = vpop.permute.xlu0 %745
    %747 = vrot.lane.b32.xlu0 %v717, 64
    %v748 = vpop.permute.xlu0 %747
    %749 = vrot.lane.b32.xlu0 %v716, 64
    %v750 = vpop.permute.xlu0 %749
    %751 = vrot.lane.b32.xlu0 %v718, 64
    %v752 = vpop.permute.xlu0 %751
    %753 = vrot.lane.b32.xlu0 %v720, 64
    %v754 = vpop.permute.xlu0 %753
    %755 = vrot.lane.b32.xlu0 %v719, 64
    %v756 = vpop.permute.xlu0 %755
    %757 = vrot.lane.b32.xlu0 %v721, 64
    %v758 = vpop.permute.xlu0 %757
    %759 = vrot.lane.b32.xlu0 %v723, 64
    %v760 = vpop.permute.xlu0 %759
    %761 = vrot.lane.b32.xlu0 %v722, 64
    %v762 = vpop.permute.xlu0 %761
    %763 = vrot.lane.b32.xlu0 %v724, 64
    %v764 = vpop.permute.xlu0 %763
    %765 = vrot.lane.b32.xlu0 %v726, 64
    %v766 = vpop.permute.xlu0 %765
    %767 = vrot.lane.b32.xlu0 %v725, 64
    %v768 = vpop.permute.xlu0 %767
    %769 = vrot.lane.b32.xlu0 %v727, 64
    %v770 = vpop.permute.xlu0 %769
    %771 = vrot.lane.b32.xlu0 %v729, 64
    %v772 = vpop.permute.xlu0 %771
    %773 = vrot.lane.b32.xlu0 %v728, 64
    %v774 = vpop.permute.xlu0 %773
    %775 = vrot.lane.b32.xlu0 %v730, 64
    %v776 = vpop.permute.xlu0 %775
    %777 = vrot.lane.b32.xlu0 %v732, 64
    %v778 = vpop.permute.xlu0 %777
    %779 = vrot.lane.b32.xlu0 %v731, 64
    %v780 = vpop.permute.xlu0 %779
    %v805 = vadd.f32 %v684, %v734
    %v806 = vadd.f32 %v685, %v736
    %v807 = vadd.f32 %v686, %v738
    %v808 = vadd.f32 %v687, %v740
    %v809 = vadd.f32 %v688, %v742
    %v810 = vadd.f32 %v689, %v744
    %v811 = vadd.f32 %v690, %v746
    %v812 = vadd.f32 %v691, %v748
    %v813 = vadd.f32 %v692, %v750
    %v814 = vadd.f32 %v693, %v752
    %v815 = vadd.f32 %v694, %v754
    %v816 = vadd.f32 %v695, %v756
    %v817 = vadd.f32 %v696, %v758
    %v818 = vadd.f32 %v697, %v760
    %v819 = vadd.f32 %v698, %v762
    %v820 = vadd.f32 %v699, %v764
    %v821 = vadd.f32 %v700, %v766
    %v822 = vadd.f32 %v701, %v768
    %v823 = vadd.f32 %v702, %v770
    %v824 = vadd.f32 %v703, %v772
    %v825 = vadd.f32 %v704, %v774
    %v826 = vadd.f32 %v705, %v776
    %v827 = vadd.f32 %v706, %v778
    %v828 = vadd.f32 %v707, %v780
    %v829 = vmax.f32 %v805, 0.0
    %v830 = vmax.f32 %v806, 0.0
    %v831 = vmax.f32 %v807, 0.0
    %v832 = vmax.f32 %v808, 0.0
    %v833 = vmax.f32 %v809, 0.0
    %v834 = vmax.f32 %v810, 0.0
    %v835 = vmax.f32 %v811, 0.0
    %v836 = vmax.f32 %v812, 0.0
    %v837 = vmax.f32 %v813, 0.0
    %v838 = vmax.f32 %v814, 0.0
    %v839 = vmax.f32 %v815, 0.0
    %v840 = vmax.f32 %v816, 0.0
    %v841 = vmax.f32 %v817, 0.0
    %v842 = vmax.f32 %v818, 0.0
    %v843 = vmax.f32 %v819, 0.0
    %v844 = vmax.f32 %v820, 0.0
    %v845 = vmax.f32 %v821, 0.0
    %v846 = vmax.f32 %v822, 0.0
    %v847 = vmax.f32 %v823, 0.0
    %v848 = vmax.f32 %v824, 0.0
    %v849 = vmax.f32 %v825, 0.0
    %v850 = vmax.f32 %v826, 0.0
    %v851 = vmax.f32 %v827, 0.0
    %v852 = vmax.f32 %v828, 0.0
    %v853 = vld [vmem:[#allocation13] sm:$0x1]
    %v855 = vlaneseq
    %v856 = vshrl.u32 %v855, 7
    %v857 = vsub.s32 0, %v856
    %v858 = vrot.slane %v853, %v857
    %859 = vrot.lane.b32.xlu0 %v858, 96
    %v860 = vpop.permute.xlu0 %859
    %v862 = vadd.f32 %v425, %v860
    %v863 = vadd.f32 %v430, %v860
    %v864 = vadd.f32 %v438, %v860
    %v865 = vadd.f32 %v441, %v860
    %v866 = vadd.f32 %v449, %v860
    %v867 = vadd.f32 %v454, %v860
    %v868 = vadd.f32 %v462, %v860
    %v869 = vadd.f32 %v465, %v860
    %v870 = vadd.f32 %v473, %v860
    %v871 = vadd.f32 %v478, %v860
    %v872 = vadd.f32 %v486, %v860
    %v873 = vadd.f32 %v489, %v860
    %v874 = vadd.f32 %v497, %v860
    %v875 = vadd.f32 %v502, %v860
    %v876 = vadd.f32 %v510, %v860
    %v877 = vadd.f32 %v513, %v860
    %vm878 = vcmask 261126
    %879 = vst.msk [vmem:[#allocation3 + $0x2] sm:$0xc0] %vm878, %v829
    %880 = vst.msk [vmem:[#allocation3 + $0xa] sm:$0xff] %vm145, %v830
    %vm881 = vcmask 259072
    %882 = vst.msk [vmem:[#allocation3 + $0x12] sm:$0x3f] %vm881, %v831
    %883 = vst.msk [vmem:[#allocation3 + $0x1a] sm:$0xc0] %vm878, %v832
    %884 = vst.msk [vmem:[#allocation3 + $0x22] sm:$0xff] %vm145, %v833
    %885 = vst.msk [vmem:[#allocation3 + $0x2a] sm:$0x3f] %vm881, %v834
    %886 = vst.msk [vmem:[#allocation3 + $0x32] sm:$0xc0] %vm878, %v835
    %887 = vst.msk [vmem:[#allocation3 + $0x3a] sm:$0xff] %vm145, %v836
    %888 = vst.msk [vmem:[#allocation3 + $0x42] sm:$0x3f] %vm881, %v837
    %889 = vst.msk [vmem:[#allocation3 + $0x4a] sm:$0xc0] %vm878, %v838
    %890 = vst.msk [vmem:[#allocation3 + $0x52] sm:$0xff] %vm145, %v839
    %891 = vst.msk [vmem:[#allocation3 + $0x5a] sm:$0x3f] %vm881, %v840
    %892 = vst.msk [vmem:[#allocation3 + $0x62] sm:$0xc0] %vm878, %v841
    %893 = vst.msk [vmem:[#allocation3 + $0x6a] sm:$0xff] %vm145, %v842
    %894 = vst.msk [vmem:[#allocation3 + $0x72] sm:$0x3f] %vm881, %v843
    %895 = vst.msk [vmem:[#allocation3 + $0x7a] sm:$0xc0] %vm878, %v844
    %896 = vst.msk [vmem:[#allocation3 + $0x82] sm:$0xff] %vm145, %v845
    %897 = vst.msk [vmem:[#allocation3 + $0x8a] sm:$0x3f] %vm881, %v846
    %898 = vst.msk [vmem:[#allocation3 + $0x92] sm:$0xc0] %vm878, %v847
    %899 = vst.msk [vmem:[#allocation3 + $0x9a] sm:$0xff] %vm145, %v848
    %900 = vst.msk [vmem:[#allocation3 + $0xa2] sm:$0x3f] %vm881, %v849
    %901 = vst.msk [vmem:[#allocation3 + $0xaa] sm:$0xc0] %vm878, %v850
    %902 = vst.msk [vmem:[#allocation3 + $0xb2] sm:$0xff] %vm145, %v851
    %903 = vst.msk [vmem:[#allocation3 + $0xba] sm:$0x3f] %vm881, %v852
    %v904 = vld [vmem:[#allocation3] sm:$0xff]
    %v905 = vld [vmem:[#allocation3 + $0x8] sm:$0xff]
    %v906 = vld [vmem:[#allocation3 + $0x10] sm:$0xff]
    %v907 = vld [vmem:[#allocation3 + $0x18] sm:$0xff]
    %v908 = vld [vmem:[#allocation3 + $0x20] sm:$0xff]
    %v909 = vld [vmem:[#allocation3 + $0x28] sm:$0xff]
    %v910 = vld [vmem:[#allocation3 + $0x30] sm:$0xff]
    %v911 = vld [vmem:[#allocation3 + $0x38] sm:$0xff]
    %v912 = vld [vmem:[#allocation3 + $0x40] sm:$0xff]
    %v913 = vld [vmem:[#allocation3 + $0x48] sm:$0xff]
    %v914 = vld [vmem:[#allocation3 + $0x50] sm:$0xff]
    %v915 = vld [vmem:[#allocation3 + $0x58] sm:$0xff]
    %v916 = vld [vmem:[#allocation3 + $0x60] sm:$0xff]
    %v917 = vld [vmem:[#allocation3 + $0x68] sm:$0xff]
    %v918 = vld [vmem:[#allocation3 + $0x70] sm:$0xff]
    %v919 = vld [vmem:[#allocation3 + $0x78] sm:$0xff]
    %v920 = vld [vmem:[#allocation3 + $0x80] sm:$0xff]
    %v921 = vld [vmem:[#allocation3 + $0x88] sm:$0xff]
    %v922 = vld [vmem:[#allocation3 + $0x90] sm:$0xff]
    %v923 = vld [vmem:[#allocation3 + $0x98] sm:$0xff]
    %v924 = vld [vmem:[#allocation3 + $0xa0] sm:$0xff]
    %v925 = vld [vmem:[#allocation3 + $0xa8] sm:$0xff]
    %v926 = vld [vmem:[#allocation3 + $0xb0] sm:$0xff]
    %v927 = vld [vmem:[#allocation3 + $0xb8] sm:$0xff]
    %v928 = vpack.c.bf16 %v905, %v904
    %v929 = vpack.c.bf16 %v906, %v906
    %v930 = vpack.c.bf16 %v908, %v907
    %v931 = vpack.c.bf16 %v909, %v909
    %v932 = vpack.c.bf16 %v911, %v910
    %v933 = vpack.c.bf16 %v912, %v912
    %v934 = vpack.c.bf16 %v914, %v913
    %v935 = vpack.c.bf16 %v915, %v915
    %v936 = vpack.c.bf16 %v917, %v916
    %v937 = vpack.c.bf16 %v918, %v918
    %v938 = vpack.c.bf16 %v920, %v919
    %v939 = vpack.c.bf16 %v921, %v921
    %v940 = vpack.c.bf16 %v923, %v922
    %v941 = vpack.c.bf16 %v924, %v924
    %v942 = vpack.c.bf16 %v926, %v925
    %v943 = vpack.c.bf16 %v927, %v927
    %v960 = vunpack.c.l.b16 %v928
    %v961 = vunpack.c.h.b16 %v928
    %v962 = vunpack.c.l.b16 %v929
    %v963 = vunpack.c.l.b16 %v930
    %v964 = vunpack.c.h.b16 %v930
    %v965 = vunpack.c.l.b16 %v931
    %v966 = vunpack.c.l.b16 %v932
    %v967 = vunpack.c.h.b16 %v932
    %v968 = vunpack.c.l.b16 %v933
    %v969 = vunpack.c.l.b16 %v934
    %v970 = vunpack.c.h.b16 %v934
    %v971 = vunpack.c.l.b16 %v935
    %v972 = vunpack.c.l.b16 %v936
    %v973 = vunpack.c.h.b16 %v936
    %v974 = vunpack.c.l.b16 %v937
    %v975 = vunpack.c.l.b16 %v938
    %v976 = vunpack.c.h.b16 %v938
    %v977 = vunpack.c.l.b16 %v939
    %v978 = vunpack.c.l.b16 %v940
    %v979 = vunpack.c.h.b16 %v940
    %v980 = vunpack.c.l.b16 %v941
    %v981 = vunpack.c.l.b16 %v942
    %v982 = vunpack.c.h.b16 %v942
    %v983 = vunpack.c.l.b16 %v943
    %v984 = vld [vmem:[#allocation10] sm:$0xf]
    %v985 = vld [vmem:[#allocation10 + $0x4] sm:$0xf]
    %v986 = vld [vmem:[#allocation10 + $0x8] sm:$0xf]
    %v987 = vld [vmem:[#allocation10 + $0xc] sm:$0xf]
    %v988 = vpack.c.b16 %v961, %v960
    %v989 = vpack.c.b16 %v963, %v962
    %v990 = vpack.c.b16 %v965, %v964
    %v991 = vpack.c.b16 %v967, %v966
    %v992 = vpack.c.b16 %v969, %v968
    %v993 = vpack.c.b16 %v971, %v970
    %v994 = vpack.c.b16 %v973, %v972
    %v995 = vpack.c.b16 %v975, %v974
    %v996 = vpack.c.b16 %v977, %v976
    %v997 = vpack.c.b16 %v979, %v978
    %v998 = vpack.c.b16 %v981, %v980
    %v999 = vpack.c.b16 %v983, %v982
    %v1004 = vunpack.c.l.b16 %v984
    %v1005 = vunpack.c.l.b16 %v985
    %v1006 = vunpack.c.l.b16 %v986
    %v1007 = vunpack.c.l.b16 %v987
    %v1008 = vpack.c.b16 %v1005, %v1004
    %v1009 = vpack.c.b16 %v1007, %v1006
    %v1013 = vsel %vm145, %v988, 0
    %v1016 = vsel %vm145, %v989, 0
    %v1019 = vsel %vm145, %v990, 0
    %v1022 = vsel %vm145, %v991, 0
    %v1025 = vsel %vm145, %v992, 0
    %v1028 = vsel %vm145, %v993, 0
    %v1031 = vsel %vm145, %v994, 0
    %v1034 = vsel %vm145, %v995, 0
    %v1037 = vsel %vm145, %v996, 0
    %v1040 = vsel %vm145, %v997, 0
    %v1043 = vsel %vm145, %v998, 0
    %v1046 = vsel %vm145, %v999, 0
    %1048 = vmatprep.subr.bf16.mxu0 0
    %1049 = vmatpush1.bf16.msra.mxu0 0
    %1050 = vmatprep.subr.bf16.mxu0 0
    %1051 = vmatpush1.bf16.msra.mxu0 0
    %1052 = vmatprep.subr.bf16.mxu0 0
    %1053 = vmatpush1.bf16.msra.mxu0 0
    %1054 = vmatprep.subr.bf16.mxu0 0
    %1055 = vmatpush1.bf16.msra.mxu0 0
    %1056 = vmatprep.subr.bf16.mxu0 0
    %1057 = vmatpush1.bf16.msra.mxu0 0
    %1058 = vmatprep.subr.bf16.mxu0 0
    %1059 = vmatpush1.bf16.msra.mxu0 0
    %1060 = vmatprep.subr.bf16.mxu0 0
    %1061 = vmatpush1.bf16.msra.mxu0 %v1009
    %1062 = vmatprep.subr.bf16.mxu0 0
    %1063 = vmatpush1.bf16.msra.mxu0 %v1008
    %1064 = vmatprep.subr.bf16.mxu0 0
    %1065 = vmatpush2.bf16.msra.mxu0 0
    %1066 = vmatprep.subr.bf16.mxu0 0
    %1067 = vmatpush2.bf16.msra.mxu0 0
    %1068 = vmatprep.subr.bf16.mxu0 0
    %1069 = vmatpush2.bf16.msra.mxu0 0
    %1070 = vmatprep.subr.bf16.mxu0 0
    %1071 = vmatpush2.bf16.msra.mxu0 0
    %1072 = vmatprep.subr.bf16.mxu0 0
    %1073 = vmatpush2.bf16.msra.mxu0 0
    %1074 = vmatprep.subr.bf16.mxu0 0
    %1075 = vmatpush2.bf16.msra.mxu0 0
    %1076 = vmatprep.subr.bf16.mxu0 0
    %1077 = vmatpush2.bf16.msra.mxu0 0
    %1078 = vmatprep.subr.bf16.mxu0 0
    %1079 = vmatpush2.bf16.msra.mxu0 0
    %1080 = vmatprep.mubr.bf16.mxu0 0
    %1081 = vmatmul.mubr.bf16.gmra.mxu0 %v1013
    %v1082 = vpop.f32.mrf.mxu0
    %v1083 = vadd.f32 0.0, %v1082
    %v1084 = vpop.f32.mrf.mxu0
    %v1085 = vpop.f32.mrf.mxu0
    %v1086 = vadd.f32 0.0, %v1085
    %v1087 = vpop.f32.mrf.mxu0
    %1088 = vmatprep.mubr.bf16.mxu0 0
    %1089 = vmatmul.mubr.bf16.gmra.mxu0 %v1016
    %v1090 = vpop.f32.mrf.mxu0
    %v1091 = vadd.f32 0.0, %v1090
    %v1092 = vpop.f32.mrf.mxu0
    %v1093 = vpop.f32.mrf.mxu0
    %v1094 = vadd.f32 0.0, %v1093
    %v1095 = vpop.f32.mrf.mxu0
    %1096 = vmatprep.mubr.bf16.mxu0 0
    %1097 = vmatmul.mubr.bf16.gmra.mxu0 %v1019
    %v1098 = vpop.f32.mrf.mxu0
    %v1099 = vadd.f32 0.0, %v1098
    %v1100 = vpop.f32.mrf.mxu0
    %v1101 = vpop.f32.mrf.mxu0
    %v1102 = vadd.f32 0.0, %v1101
    %v1103 = vpop.f32.mrf.mxu0
    %1104 = vmatprep.mubr.bf16.mxu0 0
    %1105 = vmatmul.mubr.bf16.gmra.mxu0 %v1022
    %v1106 = vpop.f32.mrf.mxu0
    %v1107 = vadd.f32 0.0, %v1106
    %v1108 = vpop.f32.mrf.mxu0
    %v1109 = vpop.f32.mrf.mxu0
    %v1110 = vadd.f32 0.0, %v1109
    %v1111 = vpop.f32.mrf.mxu0
    %1112 = vmatprep.mubr.bf16.mxu0 0
    %1113 = vmatmul.mubr.bf16.gmra.mxu0 %v1025
    %v1114 = vpop.f32.mrf.mxu0
    %v1115 = vadd.f32 0.0, %v1114
    %v1116 = vpop.f32.mrf.mxu0
    %v1117 = vpop.f32.mrf.mxu0
    %v1118 = vadd.f32 0.0, %v1117
    %v1119 = vpop.f32.mrf.mxu0
    %1120 = vmatprep.mubr.bf16.mxu0 0
    %1121 = vmatmul.mubr.bf16.gmra.mxu0 %v1028
    %v1122 = vpop.f32.mrf.mxu0
    %v1123 = vadd.f32 0.0, %v1122
    %v1124 = vpop.f32.mrf.mxu0
    %v1125 = vpop.f32.mrf.mxu0
    %v1126 = vadd.f32 0.0, %v1125
    %v1127 = vpop.f32.mrf.mxu0
    %1128 = vmatprep.mubr.bf16.mxu0 0
    %1129 = vmatmul.mubr.bf16.gmra.mxu0 %v1031
    %v1130 = vpop.f32.mrf.mxu0
    %v1131 = vadd.f32 0.0, %v1130
    %v1132 = vpop.f32.mrf.mxu0
    %v1133 = vpop.f32.mrf.mxu0
    %v1134 = vadd.f32 0.0, %v1133
    %v1135 = vpop.f32.mrf.mxu0
    %1136 = vmatprep.mubr.bf16.mxu0 0
    %1137 = vmatmul.mubr.bf16.gmra.mxu0 %v1034
    %v1138 = vpop.f32.mrf.mxu0
    %v1139 = vadd.f32 0.0, %v1138
    %v1140 = vpop.f32.mrf.mxu0
    %v1141 = vpop.f32.mrf.mxu0
    %v1142 = vadd.f32 0.0, %v1141
    %v1143 = vpop.f32.mrf.mxu0
    %1144 = vmatprep.mubr.bf16.mxu0 0
    %1145 = vmatmul.mubr.bf16.gmra.mxu0 %v1037
    %v1146 = vpop.f32.mrf.mxu0
    %v1147 = vadd.f32 0.0, %v1146
    %v1148 = vpop.f32.mrf.mxu0
    %v1149 = vpop.f32.mrf.mxu0
    %v1150 = vadd.f32 0.0, %v1149
    %v1151 = vpop.f32.mrf.mxu0
    %1152 = vmatprep.mubr.bf16.mxu0 0
    %1153 = vmatmul.mubr.bf16.gmra.mxu0 %v1040
    %v1154 = vpop.f32.mrf.mxu0
    %v1155 = vadd.f32 0.0, %v1154
    %v1156 = vpop.f32.mrf.mxu0
    %v1157 = vpop.f32.mrf.mxu0
    %v1158 = vadd.f32 0.0, %v1157
    %v1159 = vpop.f32.mrf.mxu0
    %1160 = vmatprep.mubr.bf16.mxu0 0
    %1161 = vmatmul.mubr.bf16.gmra.mxu0 %v1043
    %v1162 = vpop.f32.mrf.mxu0
    %v1163 = vadd.f32 0.0, %v1162
    %v1164 = vpop.f32.mrf.mxu0
    %v1165 = vpop.f32.mrf.mxu0
    %v1166 = vadd.f32 0.0, %v1165
    %v1167 = vpop.f32.mrf.mxu0
    %1168 = vmatprep.mubr.bf16.mxu0 0
    %1169 = vmatmul.mubr.bf16.gmra.mxu0 %v1046
    %v1170 = vpop.f32.mrf.mxu0
    %v1171 = vadd.f32 0.0, %v1170
    %v1172 = vpop.f32.mrf.mxu0
    %v1173 = vpop.f32.mrf.mxu0
    %v1174 = vadd.f32 0.0, %v1173
    %v1175 = vpop.f32.mrf.mxu0
    %1176 = vdwg.mxu0
    %v1177 = vld [vmem:[#allocation12] sm:$0x1]
    %v1179 = vlaneseq
    %v1180 = vshrl.u32 %v1179, 7
    %v1181 = vsub.s32 0, %v1180
    %v1182 = vrot.slane %v1177, %v1181
    %v1184 = vadd.f32 %v1182, %v1083
    %v1185 = vadd.f32 %v1182, %v1086
    %v1186 = vadd.f32 %v1182, %v1091
    %v1187 = vadd.f32 %v1182, %v1094
    %v1188 = vadd.f32 %v1182, %v1099
    %v1189 = vadd.f32 %v1182, %v1102
    %v1190 = vadd.f32 %v1182, %v1107
    %v1191 = vadd.f32 %v1182, %v1110
    %v1192 = vadd.f32 %v1182, %v1115
    %v1193 = vadd.f32 %v1182, %v1118
    %v1194 = vadd.f32 %v1182, %v1123
    %v1195 = vadd.f32 %v1182, %v1126
    %v1196 = vadd.f32 %v1182, %v1131
    %v1197 = vadd.f32 %v1182, %v1134
    %v1198 = vadd.f32 %v1182, %v1139
    %v1199 = vadd.f32 %v1182, %v1142
    %v1200 = vadd.f32 %v1182, %v1147
    %v1201 = vadd.f32 %v1182, %v1150
    %v1202 = vadd.f32 %v1182, %v1155
    %v1203 = vadd.f32 %v1182, %v1158
    %v1204 = vadd.f32 %v1182, %v1163
    %v1205 = vadd.f32 %v1182, %v1166
    %v1206 = vadd.f32 %v1182, %v1171
    %v1207 = vadd.f32 %v1182, %v1174
    %v1232 = vrot.slane %v1083, 1
    %v1233 = vrot.slane %v1086, 1
    %v1234 = vsel %vm571, %v1232, %v1233
    %v1235 = vrot.slane %v1091, 1
    %v1236 = vsel %vm571, %v1233, %v1235
    %v1237 = vrot.slane %v1094, 1
    %v1238 = vrot.slane %v1099, 1
    %v1239 = vsel %vm571, %v1237, %v1238
    %v1240 = vrot.slane %v1102, 1
    %v1241 = vsel %vm571, %v1238, %v1240
    %v1242 = vrot.slane %v1107, 1
    %v1243 = vrot.slane %v1110, 1
    %v1244 = vsel %vm571, %v1242, %v1243
    %v1245 = vrot.slane %v1115, 1
    %v1246 = vsel %vm571, %v1243, %v1245
    %v1247 = vrot.slane %v1118, 1
    %v1248 = vrot.slane %v1123, 1
    %v1249 = vsel %vm571, %v1247, %v1248
    %v1250 = vrot.slane %v1126, 1
    %v1251 = vsel %vm571, %v1248, %v1250
    %v1252 = vrot.slane %v1131, 1
    %v1253 = vrot.slane %v1134, 1
    %v1254 = vsel %vm571, %v1252, %v1253
    %v1255 = vrot.slane %v1139, 1
    %v1256 = vsel %vm571, %v1253, %v1255
    %v1257 = vrot.slane %v1142, 1
    %v1258 = vrot.slane %v1147, 1
    %v1259 = vsel %vm571, %v1257, %v1258
    %v1260 = vrot.slane %v1150, 1
    %v1261 = vsel %vm571, %v1258, %v1260
    %v1262 = vrot.slane %v1155, 1
    %v1263 = vrot.slane %v1158, 1
    %v1264 = vsel %vm571, %v1262, %v1263
    %v1265 = vrot.slane %v1163, 1
    %v1266 = vsel %vm571, %v1263, %v1265
    %v1267 = vrot.slane %v1166, 1
    %v1268 = vrot.slane %v1171, 1
    %v1269 = vsel %vm571, %v1267, %v1268
    %v1270 = vrot.slane %v1174, 1
    %v1271 = vsel %vm571, %v1268, %v1270
    %1272 = vrot.lane.b32.xlu0 %v1234, 96
    %v1273 = vpop.permute.xlu0 %1272
    %1274 = vrot.lane.b32.xlu0 %v1236, 96
    %v1275 = vpop.permute.xlu0 %1274
    %1276 = vrot.lane.b32.xlu0 %v1235, 96
    %v1277 = vpop.permute.xlu0 %1276
    %1278 = vrot.lane.b32.xlu0 %v1239, 96
    %v1279 = vpop.permute.xlu0 %1278
    %1280 = vrot.lane.b32.xlu0 %v1241, 96
    %v1281 = vpop.permute.xlu0 %1280
    %1282 = vrot.lane.b32.xlu0 %v1240, 96
    %v1283 = vpop.permute.xlu0 %1282
    %1284 = vrot.lane.b32.xlu0 %v1244, 96
    %v1285 = vpop.permute.xlu0 %1284
    %1286 = vrot.lane.b32.xlu0 %v1246, 96
    %v1287 = vpop.permute.xlu0 %1286
    %1288 = vrot.lane.b32.xlu0 %v1245, 96
    %v1289 = vpop.permute.xlu0 %1288
    %1290 = vrot.lane.b32.xlu0 %v1249, 96
    %v1291 = vpop.permute.xlu0 %1290
    %1292 = vrot.lane.b32.xlu0 %v1251, 96
    %v1293 = vpop.permute.xlu0 %1292
    %1294 = vrot.lane.b32.xlu0 %v1250, 96
    %v1295 = vpop.permute.xlu0 %1294
    %1296 = vrot.lane.b32.xlu0 %v1254, 96
    %v1297 = vpop.permute.xlu0 %1296
    %1298 = vrot.lane.b32.xlu0 %v1256, 96
    %v1299 = vpop.permute.xlu0 %1298
    %1300 = vrot.lane.b32.xlu0 %v1255, 96
    %v1301 = vpop.permute.xlu0 %1300
    %1302 = vrot.lane.b32.xlu0 %v1259, 96
    %v1303 = vpop.permute.xlu0 %1302
    %1304 = vrot.lane.b32.xlu0 %v1261, 96
    %v1305 = vpop.permute.xlu0 %1304
    %1306 = vrot.lane.b32.xlu0 %v1260, 96
    %v1307 = vpop.permute.xlu0 %1306
    %1308 = vrot.lane.b32.xlu0 %v1264, 96
    %v1309 = vpop.permute.xlu0 %1308
    %1310 = vrot.lane.b32.xlu0 %v1266, 96
    %v1311 = vpop.permute.xlu0 %1310
    %1312 = vrot.lane.b32.xlu0 %v1265, 96
    %v1313 = vpop.permute.xlu0 %1312
    %1314 = vrot.lane.b32.xlu0 %v1269, 96
    %v1315 = vpop.permute.xlu0 %1314
    %1316 = vrot.lane.b32.xlu0 %v1271, 96
    %v1317 = vpop.permute.xlu0 %1316
    %1318 = vrot.lane.b32.xlu0 %v1270, 96
    %v1319 = vpop.permute.xlu0 %1318
    %v1344 = vadd.f32 %v1184, %v1273
    %v1345 = vadd.f32 %v1185, %v1275
    %v1346 = vadd.f32 %v1186, %v1277
    %v1347 = vadd.f32 %v1187, %v1279
    %v1348 = vadd.f32 %v1188, %v1281
    %v1349 = vadd.f32 %v1189, %v1283
    %v1350 = vadd.f32 %v1190, %v1285
    %v1351 = vadd.f32 %v1191, %v1287
    %v1352 = vadd.f32 %v1192, %v1289
    %v1353 = vadd.f32 %v1193, %v1291
    %v1354 = vadd.f32 %v1194, %v1293
    %v1355 = vadd.f32 %v1195, %v1295
    %v1356 = vadd.f32 %v1196, %v1297
    %v1357 = vadd.f32 %v1197, %v1299
    %v1358 = vadd.f32 %v1198, %v1301
    %v1359 = vadd.f32 %v1199, %v1303
    %v1360 = vadd.f32 %v1200, %v1305
    %v1361 = vadd.f32 %v1201, %v1307
    %v1362 = vadd.f32 %v1202, %v1309
    %v1363 = vadd.f32 %v1203, %v1311
    %v1364 = vadd.f32 %v1204, %v1313
    %v1365 = vadd.f32 %v1205, %v1315
    %v1366 = vadd.f32 %v1206, %v1317
    %v1367 = vadd.f32 %v1207, %v1319
    %v1368 = vrot.slane %v1086, 2
    %v1369 = vrot.slane %v1091, 2
    %v1370 = vsel %vm708, %v1368, %v1369
    %v1371 = vrot.slane %v1099, 2
    %v1372 = vrot.slane %v1102, 2
    %v1373 = vsel %vm708, %v1371, %v1372
    %v1374 = vrot.slane %v1110, 2
    %v1375 = vrot.slane %v1115, 2
    %v1376 = vsel %vm708, %v1374, %v1375
    %v1377 = vrot.slane %v1123, 2
    %v1378 = vrot.slane %v1126, 2
    %v1379 = vsel %vm708, %v1377, %v1378
    %v1380 = vrot.slane %v1134, 2
    %v1381 = vrot.slane %v1139, 2
    %v1382 = vsel %vm708, %v1380, %v1381
    %v1383 = vrot.slane %v1147, 2
    %v1384 = vrot.slane %v1150, 2
    %v1385 = vsel %vm708, %v1383, %v1384
    %v1386 = vrot.slane %v1158, 2
    %v1387 = vrot.slane %v1163, 2
    %v1388 = vsel %vm708, %v1386, %v1387
    %v1389 = vrot.slane %v1171, 2
    %v1390 = vrot.slane %v1174, 2
    %v1391 = vsel %vm708, %v1389, %v1390
    %1392 = vrot.lane.b32.xlu0 %v1368, 64
    %v1393 = vpop.permute.xlu0 %1392
    %1394 = vrot.lane.b32.xlu0 %v1370, 64
    %v1395 = vpop.permute.xlu0 %1394
    %1396 = vrot.lane.b32.xlu0 %v1369, 64
    %v1397 = vpop.permute.xlu0 %1396
    %1398 = vrot.lane.b32.xlu0 %v1371, 64
    %v1399 = vpop.permute.xlu0 %1398
    %1400 = vrot.lane.b32.xlu0 %v1373, 64
    %v1401 = vpop.permute.xlu0 %1400
    %1402 = vrot.lane.b32.xlu0 %v1372, 64
    %v1403 = vpop.permute.xlu0 %1402
    %1404 = vrot.lane.b32.xlu0 %v1374, 64
    %v1405 = vpop.permute.xlu0 %1404
    %1406 = vrot.lane.b32.xlu0 %v1376, 64
    %v1407 = vpop.permute.xlu0 %1406
    %1408 = vrot.lane.b32.xlu0 %v1375, 64
    %v1409 = vpop.permute.xlu0 %1408
    %1410 = vrot.lane.b32.xlu0 %v1377, 64
    %v1411 = vpop.permute.xlu0 %1410
    %1412 = vrot.lane.b32.xlu0 %v1379, 64
    %v1413 = vpop.permute.xlu0 %1412
    %1414 = vrot.lane.b32.xlu0 %v1378, 64
    %v1415 = vpop.permute.xlu0 %1414
    %1416 = vrot.lane.b32.xlu0 %v1380, 64
    %v1417 = vpop.permute.xlu0 %1416
    %1418 = vrot.lane.b32.xlu0 %v1382, 64
    %v1419 = vpop.permute.xlu0 %1418
    %1420 = vrot.lane.b32.xlu0 %v1381, 64
    %v1421 = vpop.permute.xlu0 %1420
    %1422 = vrot.lane.b32.xlu0 %v1383, 64
    %v1423 = vpop.permute.xlu0 %1422
    %1424 = vrot.lane.b32.xlu0 %v1385, 64
    %v1425 = vpop.permute.xlu0 %1424
    %1426 = vrot.lane.b32.xlu0 %v1384, 64
    %v1427 = vpop.permute.xlu0 %1426
    %1428 = vrot.lane.b32.xlu0 %v1386, 64
    %v1429 = vpop.permute.xlu0 %1428
    %1430 = vrot.lane.b32.xlu0 %v1388, 64
    %v1431 = vpop.permute.xlu0 %1430
    %1432 = vrot.lane.b32.xlu0 %v1387, 64
    %v1433 = vpop.permute.xlu0 %1432
    %1434 = vrot.lane.b32.xlu0 %v1389, 64
    %v1435 = vpop.permute.xlu0 %1434
    %1436 = vrot.lane.b32.xlu0 %v1391, 64
    %v1437 = vpop.permute.xlu0 %1436
    %1438 = vrot.lane.b32.xlu0 %v1390, 64
    %v1439 = vpop.permute.xlu0 %1438
    %v1464 = vadd.f32 %v1344, %v1393
    %v1465 = vadd.f32 %v1345, %v1395
    %v1466 = vadd.f32 %v1346, %v1397
    %v1467 = vadd.f32 %v1347, %v1399
    %v1468 = vadd.f32 %v1348, %v1401
    %v1469 = vadd.f32 %v1349, %v1403
    %v1470 = vadd.f32 %v1350, %v1405
    %v1471 = vadd.f32 %v1351, %v1407
    %v1472 = vadd.f32 %v1352, %v1409
    %v1473 = vadd.f32 %v1353, %v1411
    %v1474 = vadd.f32 %v1354, %v1413
    %v1475 = vadd.f32 %v1355, %v1415
    %v1476 = vadd.f32 %v1356, %v1417
    %v1477 = vadd.f32 %v1357, %v1419
    %v1478 = vadd.f32 %v1358, %v1421
    %v1479 = vadd.f32 %v1359, %v1423
    %v1480 = vadd.f32 %v1360, %v1425
    %v1481 = vadd.f32 %v1361, %v1427
    %v1482 = vadd.f32 %v1362, %v1429
    %v1483 = vadd.f32 %v1363, %v1431
    %v1484 = vadd.f32 %v1364, %v1433
    %v1485 = vadd.f32 %v1365, %v1435
    %v1486 = vadd.f32 %v1366, %v1437
    %v1487 = vadd.f32 %v1367, %v1439
    %v1488 = vmax.f32 %v1464, 0.0
    %v1489 = vmax.f32 %v1465, 0.0
    %v1490 = vmax.f32 %v1466, 0.0
    %v1491 = vmax.f32 %v1467, 0.0
    %v1492 = vmax.f32 %v1468, 0.0
    %v1493 = vmax.f32 %v1469, 0.0
    %v1494 = vmax.f32 %v1470, 0.0
    %v1495 = vmax.f32 %v1471, 0.0
    %v1496 = vmax.f32 %v1472, 0.0
    %v1497 = vmax.f32 %v1473, 0.0
    %v1498 = vmax.f32 %v1474, 0.0
    %v1499 = vmax.f32 %v1475, 0.0
    %v1500 = vmax.f32 %v1476, 0.0
    %v1501 = vmax.f32 %v1477, 0.0
    %v1502 = vmax.f32 %v1478, 0.0
    %v1503 = vmax.f32 %v1479, 0.0
    %v1504 = vmax.f32 %v1480, 0.0
    %v1505 = vmax.f32 %v1481, 0.0
    %v1506 = vmax.f32 %v1482, 0.0
    %v1507 = vmax.f32 %v1483, 0.0
    %v1508 = vmax.f32 %v1484, 0.0
    %v1509 = vmax.f32 %v1485, 0.0
    %v1510 = vmax.f32 %v1486, 0.0
    %v1511 = vmax.f32 %v1487, 0.0
    %v1528 = vrot.slane %v862, 2
    %v1529 = vrot.slane %v863, 2
    %v1530 = vsel %vm708, %v1528, %v1529
    %v1531 = vrot.slane %v864, 2
    %v1532 = vrot.slane %v865, 2
    %v1533 = vsel %vm708, %v1531, %v1532
    %v1534 = vrot.slane %v866, 2
    %v1535 = vrot.slane %v867, 2
    %v1536 = vsel %vm708, %v1534, %v1535
    %v1537 = vrot.slane %v868, 2
    %v1538 = vrot.slane %v869, 2
    %v1539 = vsel %vm708, %v1537, %v1538
    %v1540 = vrot.slane %v870, 2
    %v1541 = vrot.slane %v871, 2
    %v1542 = vsel %vm708, %v1540, %v1541
    %v1543 = vrot.slane %v872, 2
    %v1544 = vrot.slane %v873, 2
    %v1545 = vsel %vm708, %v1543, %v1544
    %v1546 = vrot.slane %v874, 2
    %v1547 = vrot.slane %v875, 2
    %v1548 = vsel %vm708, %v1546, %v1547
    %v1549 = vrot.slane %v876, 2
    %v1550 = vrot.slane %v877, 2
    %v1551 = vsel %vm708, %v1549, %v1550
    %1552 = vrot.lane.b32.xlu0 %v1528, 32
    %v1553 = vpop.permute.xlu0 %1552
    %1554 = vrot.lane.b32.xlu0 %v1530, 32
    %v1555 = vpop.permute.xlu0 %1554
    %1556 = vrot.lane.b32.xlu0 %v1529, 32
    %v1557 = vpop.permute.xlu0 %1556
    %1558 = vrot.lane.b32.xlu0 %v1531, 32
    %v1559 = vpop.permute.xlu0 %1558
    %1560 = vrot.lane.b32.xlu0 %v1533, 32
    %v1561 = vpop.permute.xlu0 %1560
    %1562 = vrot.lane.b32.xlu0 %v1532, 32
    %v1563 = vpop.permute.xlu0 %1562
    %1564 = vrot.lane.b32.xlu0 %v1534, 32
    %v1565 = vpop.permute.xlu0 %1564
    %1566 = vrot.lane.b32.xlu0 %v1536, 32
    %v1567 = vpop.permute.xlu0 %1566
    %1568 = vrot.lane.b32.xlu0 %v1535, 32
    %v1569 = vpop.permute.xlu0 %1568
    %1570 = vrot.lane.b32.xlu0 %v1537, 32
    %v1571 = vpop.permute.xlu0 %1570
    %1572 = vrot.lane.b32.xlu0 %v1539, 32
    %v1573 = vpop.permute.xlu0 %1572
    %1574 = vrot.lane.b32.xlu0 %v1538, 32
    %v1575 = vpop.permute.xlu0 %1574
    %1576 = vrot.lane.b32.xlu0 %v1540, 32
    %v1577 = vpop.permute.xlu0 %1576
    %1578 = vrot.lane.b32.xlu0 %v1542, 32
    %v1579 = vpop.permute.xlu0 %1578
    %1580 = vrot.lane.b32.xlu0 %v1541, 32
    %v1581 = vpop.permute.xlu0 %1580
    %1582 = vrot.lane.b32.xlu0 %v1543, 32
    %v1583 = vpop.permute.xlu0 %1582
    %1584 = vrot.lane.b32.xlu0 %v1545, 32
    %v1585 = vpop.permute.xlu0 %1584
    %1586 = vrot.lane.b32.xlu0 %v1544, 32
    %v1587 = vpop.permute.xlu0 %1586
    %1588 = vrot.lane.b32.xlu0 %v1546, 32
    %v1589 = vpop.permute.xlu0 %1588
    %1590 = vrot.lane.b32.xlu0 %v1548, 32
    %v1591 = vpop.permute.xlu0 %1590
    %1592 = vrot.lane.b32.xlu0 %v1547, 32
    %v1593 = vpop.permute.xlu0 %1592
    %1594 = vrot.lane.b32.xlu0 %v1549, 32
    %v1595 = vpop.permute.xlu0 %1594
    %1596 = vrot.lane.b32.xlu0 %v1551, 32
    %v1597 = vpop.permute.xlu0 %1596
    %1598 = vrot.lane.b32.xlu0 %v1550, 32
    %v1599 = vpop.permute.xlu0 %1598
    %v1624 = vadd.f32 %v1488, %v1553
    %v1625 = vadd.f32 %v1489, %v1555
    %v1626 = vadd.f32 %v1490, %v1557
    %v1627 = vadd.f32 %v1491, %v1559
    %v1628 = vadd.f32 %v1492, %v1561
    %v1629 = vadd.f32 %v1493, %v1563
    %v1630 = vadd.f32 %v1494, %v1565
    %v1631 = vadd.f32 %v1495, %v1567
    %v1632 = vadd.f32 %v1496, %v1569
    %v1633 = vadd.f32 %v1497, %v1571
    %v1634 = vadd.f32 %v1498, %v1573
    %v1635 = vadd.f32 %v1499, %v1575
    %v1636 = vadd.f32 %v1500, %v1577
    %v1637 = vadd.f32 %v1501, %v1579
    %v1638 = vadd.f32 %v1502, %v1581
    %v1639 = vadd.f32 %v1503, %v1583
    %v1640 = vadd.f32 %v1504, %v1585
    %v1641 = vadd.f32 %v1505, %v1587
    %v1642 = vadd.f32 %v1506, %v1589
    %v1643 = vadd.f32 %v1507, %v1591
    %v1644 = vadd.f32 %v1508, %v1593
    %v1645 = vadd.f32 %v1509, %v1595
    %v1646 = vadd.f32 %v1510, %v1597
    %v1647 = vadd.f32 %v1511, %v1599
    %v1648 = vmax.f32 %v1624, 0.0
    %v1649 = vmax.f32 %v1625, 0.0
    %v1650 = vmax.f32 %v1626, 0.0
    %v1651 = vmax.f32 %v1627, 0.0
    %v1652 = vmax.f32 %v1628, 0.0
    %v1653 = vmax.f32 %v1629, 0.0
    %v1654 = vmax.f32 %v1630, 0.0
    %v1655 = vmax.f32 %v1631, 0.0
    %v1656 = vmax.f32 %v1632, 0.0
    %v1657 = vmax.f32 %v1633, 0.0
    %v1658 = vmax.f32 %v1634, 0.0
    %v1659 = vmax.f32 %v1635, 0.0
    %v1660 = vmax.f32 %v1636, 0.0
    %v1661 = vmax.f32 %v1637, 0.0
    %v1662 = vmax.f32 %v1638, 0.0
    %v1663 = vmax.f32 %v1639, 0.0
    %v1664 = vmax.f32 %v1640, 0.0
    %v1665 = vmax.f32 %v1641, 0.0
    %v1666 = vmax.f32 %v1642, 0.0
    %v1667 = vmax.f32 %v1643, 0.0
    %v1668 = vmax.f32 %v1644, 0.0
    %v1669 = vmax.f32 %v1645, 0.0
    %v1670 = vmax.f32 %v1646, 0.0
    %v1671 = vmax.f32 %v1647, 0.0
    %1672 = vst.msk [vmem:[#allocation2 + $0x2] sm:$0xc0] %vm878, %v1648
    %1673 = vst.msk [vmem:[#allocation2 + $0xa] sm:$0xff] %vm145, %v1649
    %1674 = vst.msk [vmem:[#allocation2 + $0x12] sm:$0x3f] %vm881, %v1650
    %1675 = vst.msk [vmem:[#allocation2 + $0x1a] sm:$0xc0] %vm878, %v1651
    %1676 = vst.msk [vmem:[#allocation2 + $0x22] sm:$0xff] %vm145, %v1652
    %1677 = vst.msk [vmem:[#allocation2 + $0x2a] sm:$0x3f] %vm881, %v1653
    %1678 = vst.msk [vmem:[#allocation2 + $0x32] sm:$0xc0] %vm878, %v1654
    %1679 = vst.msk [vmem:[#allocation2 + $0x3a] sm:$0xff] %vm145, %v1655
    %1680 = vst.msk [vmem:[#allocation2 + $0x42] sm:$0x3f] %vm881, %v1656
    %1681 = vst.msk [vmem:[#allocation2 + $0x4a] sm:$0xc0] %vm878, %v1657
    %1682 = vst.msk [vmem:[#allocation2 + $0x52] sm:$0xff] %vm145, %v1658
    %1683 = vst.msk [vmem:[#allocation2 + $0x5a] sm:$0x3f] %vm881, %v1659
    %1684 = vst.msk [vmem:[#allocation2 + $0x62] sm:$0xc0] %vm878, %v1660
    %1685 = vst.msk [vmem:[#allocation2 + $0x6a] sm:$0xff] %vm145, %v1661
    %1686 = vst.msk [vmem:[#allocation2 + $0x72] sm:$0x3f] %vm881, %v1662
    %1687 = vst.msk [vmem:[#allocation2 + $0x7a] sm:$0xc0] %vm878, %v1663
    %1688 = vst.msk [vmem:[#allocation2 + $0x82] sm:$0xff] %vm145, %v1664
    %1689 = vst.msk [vmem:[#allocation2 + $0x8a] sm:$0x3f] %vm881, %v1665
    %1690 = vst.msk [vmem:[#allocation2 + $0x92] sm:$0xc0] %vm878, %v1666
    %1691 = vst.msk [vmem:[#allocation2 + $0x9a] sm:$0xff] %vm145, %v1667
    %1692 = vst.msk [vmem:[#allocation2 + $0xa2] sm:$0x3f] %vm881, %v1668
    %1693 = vst.msk [vmem:[#allocation2 + $0xaa] sm:$0xc0] %vm878, %v1669
    %1694 = vst.msk [vmem:[#allocation2 + $0xb2] sm:$0xff] %vm145, %v1670
    %1695 = vst.msk [vmem:[#allocation2 + $0xba] sm:$0x3f] %vm881, %v1671
    %v1696 = vld [vmem:[#allocation2] sm:$0xff]
    %v1697 = vld [vmem:[#allocation2 + $0x8] sm:$0xff]
    %v1698 = vld [vmem:[#allocation2 + $0x10] sm:$0xff]
    %v1699 = vld [vmem:[#allocation2 + $0x18] sm:$0xff]
    %v1700 = vld [vmem:[#allocation2 + $0x20] sm:$0xff]
    %v1701 = vld [vmem:[#allocation2 + $0x28] sm:$0xff]
    %v1702 = vld [vmem:[#allocation2 + $0x30] sm:$0xff]
    %v1703 = vld [vmem:[#allocation2 + $0x38] sm:$0xff]
    %v1704 = vld [vmem:[#allocation2 + $0x40] sm:$0xff]
    %v1705 = vld [vmem:[#allocation2 + $0x48] sm:$0xff]
    %v1706 = vld [vmem:[#allocation2 + $0x50] sm:$0xff]
    %v1707 = vld [vmem:[#allocation2 + $0x58] sm:$0xff]
    %v1708 = vld [vmem:[#allocation2 + $0x60] sm:$0xff]
    %v1709 = vld [vmem:[#allocation2 + $0x68] sm:$0xff]
    %v1710 = vld [vmem:[#allocation2 + $0x70] sm:$0xff]
    %v1711 = vld [vmem:[#allocation2 + $0x78] sm:$0xff]
    %v1712 = vld [vmem:[#allocation2 + $0x80] sm:$0xff]
    %v1713 = vld [vmem:[#allocation2 + $0x88] sm:$0xff]
    %v1714 = vld [vmem:[#allocation2 + $0x90] sm:$0xff]
    %v1715 = vld [vmem:[#allocation2 + $0x98] sm:$0xff]
    %v1716 = vld [vmem:[#allocation2 + $0xa0] sm:$0xff]
    %v1717 = vld [vmem:[#allocation2 + $0xa8] sm:$0xff]
    %v1718 = vld [vmem:[#allocation2 + $0xb0] sm:$0xff]
    %v1719 = vld [vmem:[#allocation2 + $0xb8] sm:$0xff]
    %v1720 = vpack.c.bf16 %v1697, %v1696
    %v1721 = vpack.c.bf16 %v1698, %v1698
    %v1722 = vpack.c.bf16 %v1700, %v1699
    %v1723 = vpack.c.bf16 %v1701, %v1701
    %v1724 = vpack.c.bf16 %v1703, %v1702
    %v1725 = vpack.c.bf16 %v1704, %v1704
    %v1726 = vpack.c.bf16 %v1706, %v1705
    %v1727 = vpack.c.bf16 %v1707, %v1707
    %v1728 = vpack.c.bf16 %v1709, %v1708
    %v1729 = vpack.c.bf16 %v1710, %v1710
    %v1730 = vpack.c.bf16 %v1712, %v1711
    %v1731 = vpack.c.bf16 %v1713, %v1713
    %v1732 = vpack.c.bf16 %v1715, %v1714
    %v1733 = vpack.c.bf16 %v1716, %v1716
    %v1734 = vpack.c.bf16 %v1718, %v1717
    %v1735 = vpack.c.bf16 %v1719, %v1719
    %v1752 = vunpack.c.l.b16 %v1720
    %v1753 = vunpack.c.h.b16 %v1720
    %v1754 = vunpack.c.l.b16 %v1721
    %v1755 = vunpack.c.l.b16 %v1722
    %v1756 = vunpack.c.h.b16 %v1722
    %v1757 = vunpack.c.l.b16 %v1723
    %v1758 = vunpack.c.l.b16 %v1724
    %v1759 = vunpack.c.h.b16 %v1724
    %v1760 = vunpack.c.l.b16 %v1725
    %v1761 = vunpack.c.l.b16 %v1726
    %v1762 = vunpack.c.h.b16 %v1726
    %v1763 = vunpack.c.l.b16 %v1727
    %v1764 = vunpack.c.l.b16 %v1728
    %v1765 = vunpack.c.h.b16 %v1728
    %v1766 = vunpack.c.l.b16 %v1729
    %v1767 = vunpack.c.l.b16 %v1730
    %v1768 = vunpack.c.h.b16 %v1730
    %v1769 = vunpack.c.l.b16 %v1731
    %v1770 = vunpack.c.l.b16 %v1732
    %v1771 = vunpack.c.h.b16 %v1732
    %v1772 = vunpack.c.l.b16 %v1733
    %v1773 = vunpack.c.l.b16 %v1734
    %v1774 = vunpack.c.h.b16 %v1734
    %v1775 = vunpack.c.l.b16 %v1735
    %v1776 = vld [vmem:[#allocation15] sm:$0xf]
    %v1777 = vld [vmem:[#allocation15 + $0x4] sm:$0xf]
    %v1778 = vld [vmem:[#allocation15 + $0x8] sm:$0xf]
    %v1779 = vld [vmem:[#allocation15 + $0xc] sm:$0xf]
    %v1780 = vpack.c.b16 %v1753, %v1752
    %v1781 = vpack.c.b16 %v1755, %v1754
    %v1782 = vpack.c.b16 %v1757, %v1756
    %v1783 = vpack.c.b16 %v1759, %v1758
    %v1784 = vpack.c.b16 %v1761, %v1760
    %v1785 = vpack.c.b16 %v1763, %v1762
    %v1786 = vpack.c.b16 %v1765, %v1764
    %v1787 = vpack.c.b16 %v1767, %v1766
    %v1788 = vpack.c.b16 %v1769, %v1768
    %v1789 = vpack.c.b16 %v1771, %v1770
    %v1790 = vpack.c.b16 %v1773, %v1772
    %v1791 = vpack.c.b16 %v1775, %v1774
    %v1796 = vunpack.c.l.b16 %v1776
    %v1797 = vunpack.c.l.b16 %v1777
    %v1798 = vunpack.c.l.b16 %v1778
    %v1799 = vunpack.c.l.b16 %v1779
    %v1800 = vpack.c.b16 %v1797, %v1796
    %v1801 = vpack.c.b16 %v1799, %v1798
    %v1805 = vsel %vm145, %v1780, 0
    %v1808 = vsel %vm145, %v1781, 0
    %v1811 = vsel %vm145, %v1782, 0
    %v1814 = vsel %vm145, %v1783, 0
    %v1817 = vsel %vm145, %v1784, 0
    %v1820 = vsel %vm145, %v1785, 0
    %v1823 = vsel %vm145, %v1786, 0
    %v1826 = vsel %vm145, %v1787, 0
    %v1829 = vsel %vm145, %v1788, 0
    %v1832 = vsel %vm145, %v1789, 0
    %v1835 = vsel %vm145, %v1790, 0
    %v1838 = vsel %vm145, %v1791, 0
    %1840 = vmatprep.subr.bf16.mxu0 0
    %1841 = vmatpush1.bf16.msra.mxu0 0
    %1842 = vmatprep.subr.bf16.mxu0 0
    %1843 = vmatpush1.bf16.msra.mxu0 0
    %1844 = vmatprep.subr.bf16.mxu0 0
    %1845 = vmatpush1.bf16.msra.mxu0 0
    %1846 = vmatprep.subr.bf16.mxu0 0
    %1847 = vmatpush1.bf16.msra.mxu0 0
    %1848 = vmatprep.subr.bf16.mxu0 0
    %1849 = vmatpush1.bf16.msra.mxu0 0
    %1850 = vmatprep.subr.bf16.mxu0 0
    %1851 = vmatpush1.bf16.msra.mxu0 0
    %1852 = vmatprep.subr.bf16.mxu0 0
    %1853 = vmatpush1.bf16.msra.mxu0 %v1801
    %1854 = vmatprep.subr.bf16.mxu0 0
    %1855 = vmatpush1.bf16.msra.mxu0 %v1800
    %1856 = vmatprep.subr.bf16.mxu0 0
    %1857 = vmatpush2.bf16.msra.mxu0 0
    %1858 = vmatprep.subr.bf16.mxu0 0
    %1859 = vmatpush2.bf16.msra.mxu0 0
    %1860 = vmatprep.subr.bf16.mxu0 0
    %1861 = vmatpush2.bf16.msra.mxu0 0
    %1862 = vmatprep.subr.bf16.mxu0 0
    %1863 = vmatpush2.bf16.msra.mxu0 0
    %1864 = vmatprep.subr.bf16.mxu0 0
    %1865 = vmatpush2.bf16.msra.mxu0 0
    %1866 = vmatprep.subr.bf16.mxu0 0
    %1867 = vmatpush2.bf16.msra.mxu0 0
    %1868 = vmatprep.subr.bf16.mxu0 0
    %1869 = vmatpush2.bf16.msra.mxu0 0
    %1870 = vmatprep.subr.bf16.mxu0 0
    %1871 = vmatpush2.bf16.msra.mxu0 0
    %1872 = vmatprep.mubr.bf16.mxu0 0
    %1873 = vmatmul.mubr.bf16.gmra.mxu0 %v1805
    %v1874 = vpop.f32.mrf.mxu0
    %v1875 = vadd.f32 0.0, %v1874
    %v1876 = vpop.f32.mrf.mxu0
    %v1877 = vpop.f32.mrf.mxu0
    %v1878 = vadd.f32 0.0, %v1877
    %v1879 = vpop.f32.mrf.mxu0
    %1880 = vmatprep.mubr.bf16.mxu0 0
    %1881 = vmatmul.mubr.bf16.gmra.mxu0 %v1808
    %v1882 = vpop.f32.mrf.mxu0
    %v1883 = vadd.f32 0.0, %v1882
    %v1884 = vpop.f32.mrf.mxu0
    %v1885 = vpop.f32.mrf.mxu0
    %v1886 = vadd.f32 0.0, %v1885
    %v1887 = vpop.f32.mrf.mxu0
    %1888 = vmatprep.mubr.bf16.mxu0 0
    %1889 = vmatmul.mubr.bf16.gmra.mxu0 %v1811
    %v1890 = vpop.f32.mrf.mxu0
    %v1891 = vadd.f32 0.0, %v1890
    %v1892 = vpop.f32.mrf.mxu0
    %v1893 = vpop.f32.mrf.mxu0
    %v1894 = vadd.f32 0.0, %v1893
    %v1895 = vpop.f32.mrf.mxu0
    %1896 = vmatprep.mubr.bf16.mxu0 0
    %1897 = vmatmul.mubr.bf16.gmra.mxu0 %v1814
    %v1898 = vpop.f32.mrf.mxu0
    %v1899 = vadd.f32 0.0, %v1898
    %v1900 = vpop.f32.mrf.mxu0
    %v1901 = vpop.f32.mrf.mxu0
    %v1902 = vadd.f32 0.0, %v1901
    %v1903 = vpop.f32.mrf.mxu0
    %1904 = vmatprep.mubr.bf16.mxu0 0
    %1905 = vmatmul.mubr.bf16.gmra.mxu0 %v1817
    %v1906 = vpop.f32.mrf.mxu0
    %v1907 = vadd.f32 0.0, %v1906
    %v1908 = vpop.f32.mrf.mxu0
    %v1909 = vpop.f32.mrf.mxu0
    %v1910 = vadd.f32 0.0, %v1909
    %v1911 = vpop.f32.mrf.mxu0
    %1912 = vmatprep.mubr.bf16.mxu0 0
    %1913 = vmatmul.mubr.bf16.gmra.mxu0 %v1820
    %v1914 = vpop.f32.mrf.mxu0
    %v1915 = vadd.f32 0.0, %v1914
    %v1916 = vpop.f32.mrf.mxu0
    %v1917 = vpop.f32.mrf.mxu0
    %v1918 = vadd.f32 0.0, %v1917
    %v1919 = vpop.f32.mrf.mxu0
    %1920 = vmatprep.mubr.bf16.mxu0 0
    %1921 = vmatmul.mubr.bf16.gmra.mxu0 %v1823
    %v1922 = vpop.f32.mrf.mxu0
    %v1923 = vadd.f32 0.0, %v1922
    %v1924 = vpop.f32.mrf.mxu0
    %v1925 = vpop.f32.mrf.mxu0
    %v1926 = vadd.f32 0.0, %v1925
    %v1927 = vpop.f32.mrf.mxu0
    %1928 = vmatprep.mubr.bf16.mxu0 0
    %1929 = vmatmul.mubr.bf16.gmra.mxu0 %v1826
    %v1930 = vpop.f32.mrf.mxu0
    %v1931 = vadd.f32 0.0, %v1930
    %v1932 = vpop.f32.mrf.mxu0
    %v1933 = vpop.f32.mrf.mxu0
    %v1934 = vadd.f32 0.0, %v1933
    %v1935 = vpop.f32.mrf.mxu0
    %1936 = vmatprep.mubr.bf16.mxu0 0
    %1937 = vmatmul.mubr.bf16.gmra.mxu0 %v1829
    %v1938 = vpop.f32.mrf.mxu0
    %v1939 = vadd.f32 0.0, %v1938
    %v1940 = vpop.f32.mrf.mxu0
    %v1941 = vpop.f32.mrf.mxu0
    %v1942 = vadd.f32 0.0, %v1941
    %v1943 = vpop.f32.mrf.mxu0
    %1944 = vmatprep.mubr.bf16.mxu0 0
    %1945 = vmatmul.mubr.bf16.gmra.mxu0 %v1832
    %v1946 = vpop.f32.mrf.mxu0
    %v1947 = vadd.f32 0.0, %v1946
    %v1948 = vpop.f32.mrf.mxu0
    %v1949 = vpop.f32.mrf.mxu0
    %v1950 = vadd.f32 0.0, %v1949
    %v1951 = vpop.f32.mrf.mxu0
    %1952 = vmatprep.mubr.bf16.mxu0 0
    %1953 = vmatmul.mubr.bf16.gmra.mxu0 %v1835
    %v1954 = vpop.f32.mrf.mxu0
    %v1955 = vadd.f32 0.0, %v1954
    %v1956 = vpop.f32.mrf.mxu0
    %v1957 = vpop.f32.mrf.mxu0
    %v1958 = vadd.f32 0.0, %v1957
    %v1959 = vpop.f32.mrf.mxu0
    %1960 = vmatprep.mubr.bf16.mxu0 0
    %1961 = vmatmul.mubr.bf16.gmra.mxu0 %v1838
    %v1962 = vpop.f32.mrf.mxu0
    %v1963 = vadd.f32 0.0, %v1962
    %v1964 = vpop.f32.mrf.mxu0
    %v1965 = vpop.f32.mrf.mxu0
    %v1966 = vadd.f32 0.0, %v1965
    %v1967 = vpop.f32.mrf.mxu0
    %1968 = vdwg.mxu0
    %v1969 = vld [vmem:[#allocation16] sm:$0x1]
    %v1971 = vlaneseq
    %v1972 = vshrl.u32 %v1971, 7
    %v1973 = vsub.s32 0, %v1972
    %v1974 = vrot.slane %v1969, %v1973
    %v1976 = vadd.f32 %v1974, %v1875
    %v1977 = vadd.f32 %v1974, %v1878
    %v1978 = vadd.f32 %v1974, %v1883
    %v1979 = vadd.f32 %v1974, %v1886
    %v1980 = vadd.f32 %v1974, %v1891
    %v1981 = vadd.f32 %v1974, %v1894
    %v1982 = vadd.f32 %v1974, %v1899
    %v1983 = vadd.f32 %v1974, %v1902
    %v1984 = vadd.f32 %v1974, %v1907
    %v1985 = vadd.f32 %v1974, %v1910
    %v1986 = vadd.f32 %v1974, %v1915
    %v1987 = vadd.f32 %v1974, %v1918
    %v1988 = vadd.f32 %v1974, %v1923
    %v1989 = vadd.f32 %v1974, %v1926
    %v1990 = vadd.f32 %v1974, %v1931
    %v1991 = vadd.f32 %v1974, %v1934
    %v1992 = vadd.f32 %v1974, %v1939
    %v1993 = vadd.f32 %v1974, %v1942
    %v1994 = vadd.f32 %v1974, %v1947
    %v1995 = vadd.f32 %v1974, %v1950
    %v1996 = vadd.f32 %v1974, %v1955
    %v1997 = vadd.f32 %v1974, %v1958
    %v1998 = vadd.f32 %v1974, %v1963
    %v1999 = vadd.f32 %v1974, %v1966
    %v2024 = vrot.slane %v1875, 2
    %v2025 = vrot.slane %v1878, 2
    %v2026 = vsel %vm708, %v2024, %v2025
    %v2027 = vrot.slane %v1883, 2
    %v2028 = vsel %vm708, %v2025, %v2027
    %v2029 = vrot.slane %v1886, 2
    %v2030 = vrot.slane %v1891, 2
    %v2031 = vsel %vm708, %v2029, %v2030
    %v2032 = vrot.slane %v1894, 2
    %v2033 = vsel %vm708, %v2030, %v2032
    %v2034 = vrot.slane %v1899, 2
    %v2035 = vrot.slane %v1902, 2
    %v2036 = vsel %vm708, %v2034, %v2035
    %v2037 = vrot.slane %v1907, 2
    %v2038 = vsel %vm708, %v2035, %v2037
    %v2039 = vrot.slane %v1910, 2
    %v2040 = vrot.slane %v1915, 2
    %v2041 = vsel %vm708, %v2039, %v2040
    %v2042 = vrot.slane %v1918, 2
    %v2043 = vsel %vm708, %v2040, %v2042
    %v2044 = vrot.slane %v1923, 2
    %v2045 = vrot.slane %v1926, 2
    %v2046 = vsel %vm708, %v2044, %v2045
    %v2047 = vrot.slane %v1931, 2
    %v2048 = vsel %vm708, %v2045, %v2047
    %v2049 = vrot.slane %v1934, 2
    %v2050 = vrot.slane %v1939, 2
    %v2051 = vsel %vm708, %v2049, %v2050
    %v2052 = vrot.slane %v1942, 2
    %v2053 = vsel %vm708, %v2050, %v2052
    %v2054 = vrot.slane %v1947, 2
    %v2055 = vrot.slane %v1950, 2
    %v2056 = vsel %vm708, %v2054, %v2055
    %v2057 = vrot.slane %v1955, 2
    %v2058 = vsel %vm708, %v2055, %v2057
    %v2059 = vrot.slane %v1958, 2
    %v2060 = vrot.slane %v1963, 2
    %v2061 = vsel %vm708, %v2059, %v2060
    %v2062 = vrot.slane %v1966, 2
    %v2063 = vsel %vm708, %v2060, %v2062
    %2064 = vrot.lane.b32.xlu0 %v2026, 96
    %v2065 = vpop.permute.xlu0 %2064
    %2066 = vrot.lane.b32.xlu0 %v2028, 96
    %v2067 = vpop.permute.xlu0 %2066
    %2068 = vrot.lane.b32.xlu0 %v2027, 96
    %v2069 = vpop.permute.xlu0 %2068
    %2070 = vrot.lane.b32.xlu0 %v2031, 96
    %v2071 = vpop.permute.xlu0 %2070
    %2072 = vrot.lane.b32.xlu0 %v2033, 96
    %v2073 = vpop.permute.xlu0 %2072
    %2074 = vrot.lane.b32.xlu0 %v2032, 96
    %v2075 = vpop.permute.xlu0 %2074
    %2076 = vrot.lane.b32.xlu0 %v2036, 96
    %v2077 = vpop.permute.xlu0 %2076
    %2078 = vrot.lane.b32.xlu0 %v2038, 96
    %v2079 = vpop.permute.xlu0 %2078
    %2080 = vrot.lane.b32.xlu0 %v2037, 96
    %v2081 = vpop.permute.xlu0 %2080
    %2082 = vrot.lane.b32.xlu0 %v2041, 96
    %v2083 = vpop.permute.xlu0 %2082
    %2084 = vrot.lane.b32.xlu0 %v2043, 96
    %v2085 = vpop.permute.xlu0 %2084
    %2086 = vrot.lane.b32.xlu0 %v2042, 96
    %v2087 = vpop.permute.xlu0 %2086
    %2088 = vrot.lane.b32.xlu0 %v2046, 96
    %v2089 = vpop.permute.xlu0 %2088
    %2090 = vrot.lane.b32.xlu0 %v2048, 96
    %v2091 = vpop.permute.xlu0 %2090
    %2092 = vrot.lane.b32.xlu0 %v2047, 96
    %v2093 = vpop.permute.xlu0 %2092
    %2094 = vrot.lane.b32.xlu0 %v2051, 96
    %v2095 = vpop.permute.xlu0 %2094
    %2096 = vrot.lane.b32.xlu0 %v2053, 96
    %v2097 = vpop.permute.xlu0 %2096
    %2098 = vrot.lane.b32.xlu0 %v2052, 96
    %v2099 = vpop.permute.xlu0 %2098
    %2100 = vrot.lane.b32.xlu0 %v2056, 96
    %v2101 = vpop.permute.xlu0 %2100
    %2102 = vrot.lane.b32.xlu0 %v2058, 96
    %v2103 = vpop.permute.xlu0 %2102
    %2104 = vrot.lane.b32.xlu0 %v2057, 96
    %v2105 = vpop.permute.xlu0 %2104
    %2106 = vrot.lane.b32.xlu0 %v2061, 96
    %v2107 = vpop.permute.xlu0 %2106
    %2108 = vrot.lane.b32.xlu0 %v2063, 96
    %v2109 = vpop.permute.xlu0 %2108
    %2110 = vrot.lane.b32.xlu0 %v2062, 96
    %v2111 = vpop.permute.xlu0 %2110
    %v2136 = vadd.f32 %v1976, %v2065
    %v2137 = vadd.f32 %v1977, %v2067
    %v2138 = vadd.f32 %v1978, %v2069
    %v2139 = vadd.f32 %v1979, %v2071
    %v2140 = vadd.f32 %v1980, %v2073
    %v2141 = vadd.f32 %v1981, %v2075
    %v2142 = vadd.f32 %v1982, %v2077
    %v2143 = vadd.f32 %v1983, %v2079
    %v2144 = vadd.f32 %v1984, %v2081
    %v2145 = vadd.f32 %v1985, %v2083
    %v2146 = vadd.f32 %v1986, %v2085
    %v2147 = vadd.f32 %v1987, %v2087
    %v2148 = vadd.f32 %v1988, %v2089
    %v2149 = vadd.f32 %v1989, %v2091
    %v2150 = vadd.f32 %v1990, %v2093
    %v2151 = vadd.f32 %v1991, %v2095
    %v2152 = vadd.f32 %v1992, %v2097
    %v2153 = vadd.f32 %v1993, %v2099
    %v2154 = vadd.f32 %v1994, %v2101
    %v2155 = vadd.f32 %v1995, %v2103
    %v2156 = vadd.f32 %v1996, %v2105
    %v2157 = vadd.f32 %v1997, %v2107
    %v2158 = vadd.f32 %v1998, %v2109
    %v2159 = vadd.f32 %v1999, %v2111
    %vm2160 = vcmask 1043456
    %v2161 = vrot.slane %v1878, 4
    %v2162 = vrot.slane %v1883, 4
    %v2163 = vsel %vm2160, %v2161, %v2162
    %v2164 = vrot.slane %v1891, 4
    %v2165 = vrot.slane %v1894, 4
    %v2166 = vsel %vm2160, %v2164, %v2165
    %v2167 = vrot.slane %v1902, 4
    %v2168 = vrot.slane %v1907, 4
    %v2169 = vsel %vm2160, %v2167, %v2168
    %v2170 = vrot.slane %v1915, 4
    %v2171 = vrot.slane %v1918, 4
    %v2172 = vsel %vm2160, %v2170, %v2171
    %v2173 = vrot.slane %v1926, 4
    %v2174 = vrot.slane %v1931, 4
    %v2175 = vsel %vm2160, %v2173, %v2174
    %v2176 = vrot.slane %v1939, 4
    %v2177 = vrot.slane %v1942, 4
    %v2178 = vsel %vm2160, %v2176, %v2177
    %v2179 = vrot.slane %v1950, 4
    %v2180 = vrot.slane %v1955, 4
    %v2181 = vsel %vm2160, %v2179, %v2180
    %v2182 = vrot.slane %v1963, 4
    %v2183 = vrot.slane %v1966, 4
    %v2184 = vsel %vm2160, %v2182, %v2183
    %2185 = vrot.lane.b32.xlu0 %v2161, 64
    %v2186 = vpop.permute.xlu0 %2185
    %2187 = vrot.lane.b32.xlu0 %v2163, 64
    %v2188 = vpop.permute.xlu0 %2187
    %2189 = vrot.lane.b32.xlu0 %v2162, 64
    %v2190 = vpop.permute.xlu0 %2189
    %2191 = vrot.lane.b32.xlu0 %v2164, 64
    %v2192 = vpop.permute.xlu0 %2191
    %2193 = vrot.lane.b32.xlu0 %v2166, 64
    %v2194 = vpop.permute.xlu0 %2193
    %2195 = vrot.lane.b32.xlu0 %v2165, 64
    %v2196 = vpop.permute.xlu0 %2195
    %2197 = vrot.lane.b32.xlu0 %v2167, 64
    %v2198 = vpop.permute.xlu0 %2197
    %2199 = vrot.lane.b32.xlu0 %v2169, 64
    %v2200 = vpop.permute.xlu0 %2199
    %2201 = vrot.lane.b32.xlu0 %v2168, 64
    %v2202 = vpop.permute.xlu0 %2201
    %2203 = vrot.lane.b32.xlu0 %v2170, 64
    %v2204 = vpop.permute.xlu0 %2203
    %2205 = vrot.lane.b32.xlu0 %v2172, 64
    %v2206 = vpop.permute.xlu0 %2205
    %2207 = vrot.lane.b32.xlu0 %v2171, 64
    %v2208 = vpop.permute.xlu0 %2207
    %2209 = vrot.lane.b32.xlu0 %v2173, 64
    %v2210 = vpop.permute.xlu0 %2209
    %2211 = vrot.lane.b32.xlu0 %v2175, 64
    %v2212 = vpop.permute.xlu0 %2211
    %2213 = vrot.lane.b32.xlu0 %v2174, 64
    %v2214 = vpop.permute.xlu0 %2213
    %2215 = vrot.lane.b32.xlu0 %v2176, 64
    %v2216 = vpop.permute.xlu0 %2215
    %2217 = vrot.lane.b32.xlu0 %v2178, 64
    %v2218 = vpop.permute.xlu0 %2217
    %2219 = vrot.lane.b32.xlu0 %v2177, 64
    %v2220 = vpop.permute.xlu0 %2219
    %2221 = vrot.lane.b32.xlu0 %v2179, 64
    %v2222 = vpop.permute.xlu0 %2221
    %2223 = vrot.lane.b32.xlu0 %v2181, 64
    %v2224 = vpop.permute.xlu0 %2223
    %2225 = vrot.lane.b32.xlu0 %v2180, 64
    %v2226 = vpop.permute.xlu0 %2225
    %2227 = vrot.lane.b32.xlu0 %v2182, 64
    %v2228 = vpop.permute.xlu0 %2227
    %2229 = vrot.lane.b32.xlu0 %v2184, 64
    %v2230 = vpop.permute.xlu0 %2229
    %2231 = vrot.lane.b32.xlu0 %v2183, 64
    %v2232 = vpop.permute.xlu0 %2231
    %v2257 = vadd.f32 %v2136, %v2186
    %v2258 = vadd.f32 %v2137, %v2188
    %v2259 = vadd.f32 %v2138, %v2190
    %v2260 = vadd.f32 %v2139, %v2192
    %v2261 = vadd.f32 %v2140, %v2194
    %v2262 = vadd.f32 %v2141, %v2196
    %v2263 = vadd.f32 %v2142, %v2198
    %v2264 = vadd.f32 %v2143, %v2200
    %v2265 = vadd.f32 %v2144, %v2202
    %v2266 = vadd.f32 %v2145, %v2204
    %v2267 = vadd.f32 %v2146, %v2206
    %v2268 = vadd.f32 %v2147, %v2208
    %v2269 = vadd.f32 %v2148, %v2210
    %v2270 = vadd.f32 %v2149, %v2212
    %v2271 = vadd.f32 %v2150, %v2214
    %v2272 = vadd.f32 %v2151, %v2216
    %v2273 = vadd.f32 %v2152, %v2218
    %v2274 = vadd.f32 %v2153, %v2220
    %v2275 = vadd.f32 %v2154, %v2222
    %v2276 = vadd.f32 %v2155, %v2224
    %v2277 = vadd.f32 %v2156, %v2226
    %v2278 = vadd.f32 %v2157, %v2228
    %v2279 = vadd.f32 %v2158, %v2230
    %v2280 = vadd.f32 %v2159, %v2232
    %v2281 = vmax.f32 %v2257, 0.0
    %v2282 = vmax.f32 %v2258, 0.0
    %v2283 = vmax.f32 %v2259, 0.0
    %v2284 = vmax.f32 %v2260, 0.0
    %v2285 = vmax.f32 %v2261, 0.0
    %v2286 = vmax.f32 %v2262, 0.0
    %v2287 = vmax.f32 %v2263, 0.0
    %v2288 = vmax.f32 %v2264, 0.0
    %v2289 = vmax.f32 %v2265, 0.0
    %v2290 = vmax.f32 %v2266, 0.0
    %v2291 = vmax.f32 %v2267, 0.0
    %v2292 = vmax.f32 %v2268, 0.0
    %v2293 = vmax.f32 %v2269, 0.0
    %v2294 = vmax.f32 %v2270, 0.0
    %v2295 = vmax.f32 %v2271, 0.0
    %v2296 = vmax.f32 %v2272, 0.0
    %v2297 = vmax.f32 %v2273, 0.0
    %v2298 = vmax.f32 %v2274, 0.0
    %v2299 = vmax.f32 %v2275, 0.0
    %v2300 = vmax.f32 %v2276, 0.0
    %v2301 = vmax.f32 %v2277, 0.0
    %v2302 = vmax.f32 %v2278, 0.0
    %v2303 = vmax.f32 %v2279, 0.0
    %v2304 = vmax.f32 %v2280, 0.0
    %vm2305 = vcmask 261124
    %2306 = vst.msk [vmem:[#allocation3 + $0x4] sm:$0xf0] %vm2305, %v2281
    %2307 = vst.msk [vmem:[#allocation3 + $0xc] sm:$0xff] %vm145, %v2282
    %vm2308 = vcmask 257024
    %2309 = vst.msk [vmem:[#allocation3 + $0x14] sm:$0xf] %vm2308, %v2283
    %2310 = vst.msk [vmem:[#allocation3 + $0x1c] sm:$0xf0] %vm2305, %v2284
    %2311 = vst.msk [vmem:[#allocation3 + $0x24] sm:$0xff] %vm145, %v2285
    %2312 = vst.msk [vmem:[#allocation3 + $0x2c] sm:$0xf] %vm2308, %v2286
    %2313 = vst.msk [vmem:[#allocation3 + $0x34] sm:$0xf0] %vm2305, %v2287
    %2314 = vst.msk [vmem:[#allocation3 + $0x3c] sm:$0xff] %vm145, %v2288
    %2315 = vst.msk [vmem:[#allocation3 + $0x44] sm:$0xf] %vm2308, %v2289
    %2316 = vst.msk [vmem:[#allocation3 + $0x4c] sm:$0xf0] %vm2305, %v2290
    %2317 = vst.msk [vmem:[#allocation3 + $0x54] sm:$0xff] %vm145, %v2291
    %2318 = vst.msk [vmem:[#allocation3 + $0x5c] sm:$0xf] %vm2308, %v2292
    %2319 = vst.msk [vmem:[#allocation3 + $0x64] sm:$0xf0] %vm2305, %v2293
    %2320 = vst.msk [vmem:[#allocation3 + $0x6c] sm:$0xff] %vm145, %v2294
    %2321 = vst.msk [vmem:[#allocation3 + $0x74] sm:$0xf] %vm2308, %v2295
    %2322 = vst.msk [vmem:[#allocation3 + $0x7c] sm:$0xf0] %vm2305, %v2296
    %2323 = vst.msk [vmem:[#allocation3 + $0x84] sm:$0xff] %vm145, %v2297
    %2324 = vst.msk [vmem:[#allocation3 + $0x8c] sm:$0xf] %vm2308, %v2298
    %2325 = vst.msk [vmem:[#allocation3 + $0x94] sm:$0xf0] %vm2305, %v2299
    %2326 = vst.msk [vmem:[#allocation3 + $0x9c] sm:$0xff] %vm145, %v2300
    %2327 = vst.msk [vmem:[#allocation3 + $0xa4] sm:$0xf] %vm2308, %v2301
    %2328 = vst.msk [vmem:[#allocation3 + $0xac] sm:$0xf0] %vm2305, %v2302
    %2329 = vst.msk [vmem:[#allocation3 + $0xb4] sm:$0xff] %vm145, %v2303
    %2330 = vst.msk [vmem:[#allocation3 + $0xbc] sm:$0xf] %vm2308, %v2304
    %v2331 = vld [vmem:[#allocation3] sm:$0xff]
    %v2332 = vld [vmem:[#allocation3 + $0x8] sm:$0xff]
    %v2333 = vld [vmem:[#allocation3 + $0x10] sm:$0xff]
    %v2334 = vld [vmem:[#allocation3 + $0x18] sm:$0xff]
    %v2335 = vld [vmem:[#allocation3 + $0x20] sm:$0xff]
    %v2336 = vld [vmem:[#allocation3 + $0x28] sm:$0xff]
    %v2337 = vld [vmem:[#allocation3 + $0x30] sm:$0xff]
    %v2338 = vld [vmem:[#allocation3 + $0x38] sm:$0xff]
    %v2339 = vld [vmem:[#allocation3 + $0x40] sm:$0xff]
    %v2340 = vld [vmem:[#allocation3 + $0x48] sm:$0xff]
    %v2341 = vld [vmem:[#allocation3 + $0x50] sm:$0xff]
    %v2342 = vld [vmem:[#allocation3 + $0x58] sm:$0xff]
    %v2343 = vld [vmem:[#allocation3 + $0x60] sm:$0xff]
    %v2344 = vld [vmem:[#allocation3 + $0x68] sm:$0xff]
    %v2345 = vld [vmem:[#allocation3 + $0x70] sm:$0xff]
    %v2346 = vld [vmem:[#allocation3 + $0x78] sm:$0xff]
    %v2347 = vld [vmem:[#allocation3 + $0x80] sm:$0xff]
    %v2348 = vld [vmem:[#allocation3 + $0x88] sm:$0xff]
    %v2349 = vld [vmem:[#allocation3 + $0x90] sm:$0xff]
    %v2350 = vld [vmem:[#allocation3 + $0x98] sm:$0xff]
    %v2351 = vld [vmem:[#allocation3 + $0xa0] sm:$0xff]
    %v2352 = vld [vmem:[#allocation3 + $0xa8] sm:$0xff]
    %v2353 = vld [vmem:[#allocation3 + $0xb0] sm:$0xff]
    %v2354 = vld [vmem:[#allocation3 + $0xb8] sm:$0xff]
    %v2355 = vpack.c.bf16 %v2332, %v2331
    %v2356 = vpack.c.bf16 %v2333, %v2333
    %v2357 = vpack.c.bf16 %v2335, %v2334
    %v2358 = vpack.c.bf16 %v2336, %v2336
    %v2359 = vpack.c.bf16 %v2338, %v2337
    %v2360 = vpack.c.bf16 %v2339, %v2339
    %v2361 = vpack.c.bf16 %v2341, %v2340
    %v2362 = vpack.c.bf16 %v2342, %v2342
    %v2363 = vpack.c.bf16 %v2344, %v2343
    %v2364 = vpack.c.bf16 %v2345, %v2345
    %v2365 = vpack.c.bf16 %v2347, %v2346
    %v2366 = vpack.c.bf16 %v2348, %v2348
    %v2367 = vpack.c.bf16 %v2350, %v2349
    %v2368 = vpack.c.bf16 %v2351, %v2351
    %v2369 = vpack.c.bf16 %v2353, %v2352
    %v2370 = vpack.c.bf16 %v2354, %v2354
    %v2387 = vunpack.c.l.b16 %v2355
    %v2388 = vunpack.c.h.b16 %v2355
    %v2389 = vunpack.c.l.b16 %v2356
    %v2390 = vunpack.c.l.b16 %v2357
    %v2391 = vunpack.c.h.b16 %v2357
    %v2392 = vunpack.c.l.b16 %v2358
    %v2393 = vunpack.c.l.b16 %v2359
    %v2394 = vunpack.c.h.b16 %v2359
    %v2395 = vunpack.c.l.b16 %v2360
    %v2396 = vunpack.c.l.b16 %v2361
    %v2397 = vunpack.c.h.b16 %v2361
    %v2398 = vunpack.c.l.b16 %v2362
    %v2399 = vunpack.c.l.b16 %v2363
    %v2400 = vunpack.c.h.b16 %v2363
    %v2401 = vunpack.c.l.b16 %v2364
    %v2402 = vunpack.c.l.b16 %v2365
    %v2403 = vunpack.c.h.b16 %v2365
    %v2404 = vunpack.c.l.b16 %v2366
    %v2405 = vunpack.c.l.b16 %v2367
    %v2406 = vunpack.c.h.b16 %v2367
    %v2407 = vunpack.c.l.b16 %v2368
    %v2408 = vunpack.c.l.b16 %v2369
    %v2409 = vunpack.c.h.b16 %v2369
    %v2410 = vunpack.c.l.b16 %v2370
    %v2411 = vld [vmem:[%s8] sm:$0xf]
    %v2412 = vld [vmem:[%s8 + $0x4] sm:$0xf]
    %v2413 = vld [vmem:[%s8 + $0x8] sm:$0xf]
    %v2414 = vld [vmem:[%s8 + $0xc] sm:$0xf]
    %v2415 = vpack.c.b16 %v2388, %v2387
    %v2416 = vpack.c.b16 %v2390, %v2389
    %v2417 = vpack.c.b16 %v2392, %v2391
    %v2418 = vpack.c.b16 %v2394, %v2393
    %v2419 = vpack.c.b16 %v2396, %v2395
    %v2420 = vpack.c.b16 %v2398, %v2397
    %v2421 = vpack.c.b16 %v2400, %v2399
    %v2422 = vpack.c.b16 %v2402, %v2401
    %v2423 = vpack.c.b16 %v2404, %v2403
    %v2424 = vpack.c.b16 %v2406, %v2405
    %v2425 = vpack.c.b16 %v2408, %v2407
    %v2426 = vpack.c.b16 %v2410, %v2409
    %v2431 = vunpack.c.l.b16 %v2411
    %v2432 = vunpack.c.l.b16 %v2412
    %v2433 = vunpack.c.l.b16 %v2413
    %v2434 = vunpack.c.l.b16 %v2414
    %v2435 = vpack.c.b16 %v2432, %v2431
    %v2436 = vpack.c.b16 %v2434, %v2433
    %v2440 = vsel %vm145, %v2415, 0
    %v2443 = vsel %vm145, %v2416, 0
    %v2446 = vsel %vm145, %v2417, 0
    %v2449 = vsel %vm145, %v2418, 0
    %v2452 = vsel %vm145, %v2419, 0
    %v2455 = vsel %vm145, %v2420, 0
    %v2458 = vsel %vm145, %v2421, 0
    %v2461 = vsel %vm145, %v2422, 0
    %v2464 = vsel %vm145, %v2423, 0
    %v2467 = vsel %vm145, %v2424, 0
    %v2470 = vsel %vm145, %v2425, 0
    %v2473 = vsel %vm145, %v2426, 0
    %2475 = vmatprep.subr.bf16.mxu0 0
    %2476 = vmatpush1.bf16.msra.mxu0 0
    %2477 = vmatprep.subr.bf16.mxu0 0
    %2478 = vmatpush1.bf16.msra.mxu0 0
    %2479 = vmatprep.subr.bf16.mxu0 0
    %2480 = vmatpush1.bf16.msra.mxu0 0
    %2481 = vmatprep.subr.bf16.mxu0 0
    %2482 = vmatpush1.bf16.msra.mxu0 0
    %2483 = vmatprep.subr.bf16.mxu0 0
    %2484 = vmatpush1.bf16.msra.mxu0 0
    %2485 = vmatprep.subr.bf16.mxu0 0
    %2486 = vmatpush1.bf16.msra.mxu0 0
    %2487 = vmatprep.subr.bf16.mxu0 0
    %2488 = vmatpush1.bf16.msra.mxu0 %v2436
    %2489 = vmatprep.subr.bf16.mxu0 0
    %2490 = vmatpush1.bf16.msra.mxu0 %v2435
    %2491 = vmatprep.subr.bf16.mxu0 0
    %2492 = vmatpush2.bf16.msra.mxu0 0
    %2493 = vmatprep.subr.bf16.mxu0 0
    %2494 = vmatpush2.bf16.msra.mxu0 0
    %2495 = vmatprep.subr.bf16.mxu0 0
    %2496 = vmatpush2.bf16.msra.mxu0 0
    %2497 = vmatprep.subr.bf16.mxu0 0
    %2498 = vmatpush2.bf16.msra.mxu0 0
    %2499 = vmatprep.subr.bf16.mxu0 0
    %2500 = vmatpush2.bf16.msra.mxu0 0
    %2501 = vmatprep.subr.bf16.mxu0 0
    %2502 = vmatpush2.bf16.msra.mxu0 0
    %2503 = vmatprep.subr.bf16.mxu0 0
    %2504 = vmatpush2.bf16.msra.mxu0 0
    %2505 = vmatprep.subr.bf16.mxu0 0
    %2506 = vmatpush2.bf16.msra.mxu0 0
    %2507 = vmatprep.mubr.bf16.mxu0 0
    %2508 = vmatmul.mubr.bf16.gmra.mxu0 %v2440
    %v2509 = vpop.f32.mrf.mxu0
    %v2510 = vadd.f32 0.0, %v2509
    %v2511 = vpop.f32.mrf.mxu0
    %v2512 = vpop.f32.mrf.mxu0
    %v2513 = vadd.f32 0.0, %v2512
    %v2514 = vpop.f32.mrf.mxu0
    %2515 = vmatprep.mubr.bf16.mxu0 0
    %2516 = vmatmul.mubr.bf16.gmra.mxu0 %v2443
    %v2517 = vpop.f32.mrf.mxu0
    %v2518 = vadd.f32 0.0, %v2517
    %v2519 = vpop.f32.mrf.mxu0
    %v2520 = vpop.f32.mrf.mxu0
    %v2521 = vadd.f32 0.0, %v2520
    %v2522 = vpop.f32.mrf.mxu0
    %2523 = vmatprep.mubr.bf16.mxu0 0
    %2524 = vmatmul.mubr.bf16.gmra.mxu0 %v2446
    %v2525 = vpop.f32.mrf.mxu0
    %v2526 = vadd.f32 0.0, %v2525
    %v2527 = vpop.f32.mrf.mxu0
    %v2528 = vpop.f32.mrf.mxu0
    %v2529 = vadd.f32 0.0, %v2528
    %v2530 = vpop.f32.mrf.mxu0
    %2531 = vmatprep.mubr.bf16.mxu0 0
    %2532 = vmatmul.mubr.bf16.gmra.mxu0 %v2449
    %v2533 = vpop.f32.mrf.mxu0
    %v2534 = vadd.f32 0.0, %v2533
    %v2535 = vpop.f32.mrf.mxu0
    %v2536 = vpop.f32.mrf.mxu0
    %v2537 = vadd.f32 0.0, %v2536
    %v2538 = vpop.f32.mrf.mxu0
    %2539 = vmatprep.mubr.bf16.mxu0 0
    %2540 = vmatmul.mubr.bf16.gmra.mxu0 %v2452
    %v2541 = vpop.f32.mrf.mxu0
    %v2542 = vadd.f32 0.0, %v2541
    %v2543 = vpop.f32.mrf.mxu0
    %v2544 = vpop.f32.mrf.mxu0
    %v2545 = vadd.f32 0.0, %v2544
    %v2546 = vpop.f32.mrf.mxu0
    %2547 = vmatprep.mubr.bf16.mxu0 0
    %2548 = vmatmul.mubr.bf16.gmra.mxu0 %v2455
    %v2549 = vpop.f32.mrf.mxu0
    %v2550 = vadd.f32 0.0, %v2549
    %v2551 = vpop.f32.mrf.mxu0
    %v2552 = vpop.f32.mrf.mxu0
    %v2553 = vadd.f32 0.0, %v2552
    %v2554 = vpop.f32.mrf.mxu0
    %2555 = vmatprep.mubr.bf16.mxu0 0
    %2556 = vmatmul.mubr.bf16.gmra.mxu0 %v2458
    %v2557 = vpop.f32.mrf.mxu0
    %v2558 = vadd.f32 0.0, %v2557
    %v2559 = vpop.f32.mrf.mxu0
    %v2560 = vpop.f32.mrf.mxu0
    %v2561 = vadd.f32 0.0, %v2560
    %v2562 = vpop.f32.mrf.mxu0
    %2563 = vmatprep.mubr.bf16.mxu0 0
    %2564 = vmatmul.mubr.bf16.gmra.mxu0 %v2461
    %v2565 = vpop.f32.mrf.mxu0
    %v2566 = vadd.f32 0.0, %v2565
    %v2567 = vpop.f32.mrf.mxu0
    %v2568 = vpop.f32.mrf.mxu0
    %v2569 = vadd.f32 0.0, %v2568
    %v2570 = vpop.f32.mrf.mxu0
    %2571 = vmatprep.mubr.bf16.mxu0 0
    %2572 = vmatmul.mubr.bf16.gmra.mxu0 %v2464
    %v2573 = vpop.f32.mrf.mxu0
    %v2574 = vadd.f32 0.0, %v2573
    %v2575 = vpop.f32.mrf.mxu0
    %v2576 = vpop.f32.mrf.mxu0
    %v2577 = vadd.f32 0.0, %v2576
    %v2578 = vpop.f32.mrf.mxu0
    %2579 = vmatprep.mubr.bf16.mxu0 0
    %2580 = vmatmul.mubr.bf16.gmra.mxu0 %v2467
    %v2581 = vpop.f32.mrf.mxu0
    %v2582 = vadd.f32 0.0, %v2581
    %v2583 = vpop.f32.mrf.mxu0
    %v2584 = vpop.f32.mrf.mxu0
    %v2585 = vadd.f32 0.0, %v2584
    %v2586 = vpop.f32.mrf.mxu0
    %2587 = vmatprep.mubr.bf16.mxu0 0
    %2588 = vmatmul.mubr.bf16.gmra.mxu0 %v2470
    %v2589 = vpop.f32.mrf.mxu0
    %v2590 = vadd.f32 0.0, %v2589
    %v2591 = vpop.f32.mrf.mxu0
    %v2592 = vpop.f32.mrf.mxu0
    %v2593 = vadd.f32 0.0, %v2592
    %v2594 = vpop.f32.mrf.mxu0
    %2595 = vmatprep.mubr.bf16.mxu0 0
    %2596 = vmatmul.mubr.bf16.gmra.mxu0 %v2473
    %v2597 = vpop.f32.mrf.mxu0
    %v2598 = vadd.f32 0.0, %v2597
    %v2599 = vpop.f32.mrf.mxu0
    %v2600 = vpop.f32.mrf.mxu0
    %v2601 = vadd.f32 0.0, %v2600
    %v2602 = vpop.f32.mrf.mxu0
    %2603 = vdwg.mxu0
    %v2604 = vld [vmem:[%s9] sm:$0x1]
    %v2606 = vlaneseq
    %v2607 = vshrl.u32 %v2606, 7
    %v2608 = vsub.s32 0, %v2607
    %v2609 = vrot.slane %v2604, %v2608
    %v2611 = vadd.f32 %v2609, %v2510
    %v2612 = vadd.f32 %v2609, %v2513
    %v2613 = vadd.f32 %v2609, %v2518
    %v2614 = vadd.f32 %v2609, %v2521
    %v2615 = vadd.f32 %v2609, %v2526
    %v2616 = vadd.f32 %v2609, %v2529
    %v2617 = vadd.f32 %v2609, %v2534
    %v2618 = vadd.f32 %v2609, %v2537
    %v2619 = vadd.f32 %v2609, %v2542
    %v2620 = vadd.f32 %v2609, %v2545
    %v2621 = vadd.f32 %v2609, %v2550
    %v2622 = vadd.f32 %v2609, %v2553
    %v2623 = vadd.f32 %v2609, %v2558
    %v2624 = vadd.f32 %v2609, %v2561
    %v2625 = vadd.f32 %v2609, %v2566
    %v2626 = vadd.f32 %v2609, %v2569
    %v2627 = vadd.f32 %v2609, %v2574
    %v2628 = vadd.f32 %v2609, %v2577
    %v2629 = vadd.f32 %v2609, %v2582
    %v2630 = vadd.f32 %v2609, %v2585
    %v2631 = vadd.f32 %v2609, %v2590
    %v2632 = vadd.f32 %v2609, %v2593
    %v2633 = vadd.f32 %v2609, %v2598
    %v2634 = vadd.f32 %v2609, %v2601
    %v2659 = vrot.slane %v2510, 2
    %v2660 = vrot.slane %v2513, 2
    %v2661 = vsel %vm708, %v2659, %v2660
    %v2662 = vrot.slane %v2518, 2
    %v2663 = vsel %vm708, %v2660, %v2662
    %v2664 = vrot.slane %v2521, 2
    %v2665 = vrot.slane %v2526, 2
    %v2666 = vsel %vm708, %v2664, %v2665
    %v2667 = vrot.slane %v2529, 2
    %v2668 = vsel %vm708, %v2665, %v2667
    %v2669 = vrot.slane %v2534, 2
    %v2670 = vrot.slane %v2537, 2
    %v2671 = vsel %vm708, %v2669, %v2670
    %v2672 = vrot.slane %v2542, 2
    %v2673 = vsel %vm708, %v2670, %v2672
    %v2674 = vrot.slane %v2545, 2
    %v2675 = vrot.slane %v2550, 2
    %v2676 = vsel %vm708, %v2674, %v2675
    %v2677 = vrot.slane %v2553, 2
    %v2678 = vsel %vm708, %v2675, %v2677
    %v2679 = vrot.slane %v2558, 2
    %v2680 = vrot.slane %v2561, 2
    %v2681 = vsel %vm708, %v2679, %v2680
    %v2682 = vrot.slane %v2566, 2
    %v2683 = vsel %vm708, %v2680, %v2682
    %v2684 = vrot.slane %v2569, 2
    %v2685 = vrot.slane %v2574, 2
    %v2686 = vsel %vm708, %v2684, %v2685
    %v2687 = vrot.slane %v2577, 2
    %v2688 = vsel %vm708, %v2685, %v2687
    %v2689 = vrot.slane %v2582, 2
    %v2690 = vrot.slane %v2585, 2
    %v2691 = vsel %vm708, %v2689, %v2690
    %v2692 = vrot.slane %v2590, 2
    %v2693 = vsel %vm708, %v2690, %v2692
    %v2694 = vrot.slane %v2593, 2
    %v2695 = vrot.slane %v2598, 2
    %v2696 = vsel %vm708, %v2694, %v2695
    %v2697 = vrot.slane %v2601, 2
    %v2698 = vsel %vm708, %v2695, %v2697
    %2699 = vrot.lane.b32.xlu0 %v2661, 96
    %v2700 = vpop.permute.xlu0 %2699
    %2701 = vrot.lane.b32.xlu0 %v2663, 96
    %v2702 = vpop.permute.xlu0 %2701
    %2703 = vrot.lane.b32.xlu0 %v2662, 96
    %v2704 = vpop.permute.xlu0 %2703
    %2705 = vrot.lane.b32.xlu0 %v2666, 96
    %v2706 = vpop.permute.xlu0 %2705
    %2707 = vrot.lane.b32.xlu0 %v2668, 96
    %v2708 = vpop.permute.xlu0 %2707
    %2709 = vrot.lane.b32.xlu0 %v2667, 96
    %v2710 = vpop.permute.xlu0 %2709
    %2711 = vrot.lane.b32.xlu0 %v2671, 96
    %v2712 = vpop.permute.xlu0 %2711
    %2713 = vrot.lane.b32.xlu0 %v2673, 96
    %v2714 = vpop.permute.xlu0 %2713
    %2715 = vrot.lane.b32.xlu0 %v2672, 96
    %v2716 = vpop.permute.xlu0 %2715
    %2717 = vrot.lane.b32.xlu0 %v2676, 96
    %v2718 = vpop.permute.xlu0 %2717
    %2719 = vrot.lane.b32.xlu0 %v2678, 96
    %v2720 = vpop.permute.xlu0 %2719
    %2721 = vrot.lane.b32.xlu0 %v2677, 96
    %v2722 = vpop.permute.xlu0 %2721
    %2723 = vrot.lane.b32.xlu0 %v2681, 96
    %v2724 = vpop.permute.xlu0 %2723
    %2725 = vrot.lane.b32.xlu0 %v2683, 96
    %v2726 = vpop.permute.xlu0 %2725
    %2727 = vrot.lane.b32.xlu0 %v2682, 96
    %v2728 = vpop.permute.xlu0 %2727
    %2729 = vrot.lane.b32.xlu0 %v2686, 96
    %v2730 = vpop.permute.xlu0 %2729
    %2731 = vrot.lane.b32.xlu0 %v2688, 96
    %v2732 = vpop.permute.xlu0 %2731
    %2733 = vrot.lane.b32.xlu0 %v2687, 96
    %v2734 = vpop.permute.xlu0 %2733
    %2735 = vrot.lane.b32.xlu0 %v2691, 96
    %v2736 = vpop.permute.xlu0 %2735
    %2737 = vrot.lane.b32.xlu0 %v2693, 96
    %v2738 = vpop.permute.xlu0 %2737
    %2739 = vrot.lane.b32.xlu0 %v2692, 96
    %v2740 = vpop.permute.xlu0 %2739
    %2741 = vrot.lane.b32.xlu0 %v2696, 96
    %v2742 = vpop.permute.xlu0 %2741
    %2743 = vrot.lane.b32.xlu0 %v2698, 96
    %v2744 = vpop.permute.xlu0 %2743
    %2745 = vrot.lane.b32.xlu0 %v2697, 96
    %v2746 = vpop.permute.xlu0 %2745
    %v2771 = vadd.f32 %v2611, %v2700
    %v2772 = vadd.f32 %v2612, %v2702
    %v2773 = vadd.f32 %v2613, %v2704
    %v2774 = vadd.f32 %v2614, %v2706
    %v2775 = vadd.f32 %v2615, %v2708
    %v2776 = vadd.f32 %v2616, %v2710
    %v2777 = vadd.f32 %v2617, %v2712
    %v2778 = vadd.f32 %v2618, %v2714
    %v2779 = vadd.f32 %v2619, %v2716
    %v2780 = vadd.f32 %v2620, %v2718
    %v2781 = vadd.f32 %v2621, %v2720
    %v2782 = vadd.f32 %v2622, %v2722
    %v2783 = vadd.f32 %v2623, %v2724
    %v2784 = vadd.f32 %v2624, %v2726
    %v2785 = vadd.f32 %v2625, %v2728
    %v2786 = vadd.f32 %v2626, %v2730
    %v2787 = vadd.f32 %v2627, %v2732
    %v2788 = vadd.f32 %v2628, %v2734
    %v2789 = vadd.f32 %v2629, %v2736
    %v2790 = vadd.f32 %v2630, %v2738
    %v2791 = vadd.f32 %v2631, %v2740
    %v2792 = vadd.f32 %v2632, %v2742
    %v2793 = vadd.f32 %v2633, %v2744
    %v2794 = vadd.f32 %v2634, %v2746
    %v2795 = vrot.slane %v2513, 4
    %v2796 = vrot.slane %v2518, 4
    %v2797 = vsel %vm2160, %v2795, %v2796
    %v2798 = vrot.slane %v2526, 4
    %v2799 = vrot.slane %v2529, 4
    %v2800 = vsel %vm2160, %v2798, %v2799
    %v2801 = vrot.slane %v2537, 4
    %v2802 = vrot.slane %v2542, 4
    %v2803 = vsel %vm2160, %v2801, %v2802
    %v2804 = vrot.slane %v2550, 4
    %v2805 = vrot.slane %v2553, 4
    %v2806 = vsel %vm2160, %v2804, %v2805
    %v2807 = vrot.slane %v2561, 4
    %v2808 = vrot.slane %v2566, 4
    %v2809 = vsel %vm2160, %v2807, %v2808
    %v2810 = vrot.slane %v2574, 4
    %v2811 = vrot.slane %v2577, 4
    %v2812 = vsel %vm2160, %v2810, %v2811
    %v2813 = vrot.slane %v2585, 4
    %v2814 = vrot.slane %v2590, 4
    %v2815 = vsel %vm2160, %v2813, %v2814
    %v2816 = vrot.slane %v2598, 4
    %v2817 = vrot.slane %v2601, 4
    %v2818 = vsel %vm2160, %v2816, %v2817
    %2819 = vrot.lane.b32.xlu0 %v2795, 64
    %v2820 = vpop.permute.xlu0 %2819
    %2821 = vrot.lane.b32.xlu0 %v2797, 64
    %v2822 = vpop.permute.xlu0 %2821
    %2823 = vrot.lane.b32.xlu0 %v2796, 64
    %v2824 = vpop.permute.xlu0 %2823
    %2825 = vrot.lane.b32.xlu0 %v2798, 64
    %v2826 = vpop.permute.xlu0 %2825
    %2827 = vrot.lane.b32.xlu0 %v2800, 64
    %v2828 = vpop.permute.xlu0 %2827
    %2829 = vrot.lane.b32.xlu0 %v2799, 64
    %v2830 = vpop.permute.xlu0 %2829
    %2831 = vrot.lane.b32.xlu0 %v2801, 64
    %v2832 = vpop.permute.xlu0 %2831
    %2833 = vrot.lane.b32.xlu0 %v2803, 64
    %v2834 = vpop.permute.xlu0 %2833
    %2835 = vrot.lane.b32.xlu0 %v2802, 64
    %v2836 = vpop.permute.xlu0 %2835
    %2837 = vrot.lane.b32.xlu0 %v2804, 64
    %v2838 = vpop.permute.xlu0 %2837
    %2839 = vrot.lane.b32.xlu0 %v2806, 64
    %v2840 = vpop.permute.xlu0 %2839
    %2841 = vrot.lane.b32.xlu0 %v2805, 64
    %v2842 = vpop.permute.xlu0 %2841
    %2843 = vrot.lane.b32.xlu0 %v2807, 64
    %v2844 = vpop.permute.xlu0 %2843
    %2845 = vrot.lane.b32.xlu0 %v2809, 64
    %v2846 = vpop.permute.xlu0 %2845
    %2847 = vrot.lane.b32.xlu0 %v2808, 64
    %v2848 = vpop.permute.xlu0 %2847
    %2849 = vrot.lane.b32.xlu0 %v2810, 64
    %v2850 = vpop.permute.xlu0 %2849
    %2851 = vrot.lane.b32.xlu0 %v2812, 64
    %v2852 = vpop.permute.xlu0 %2851
    %2853 = vrot.lane.b32.xlu0 %v2811, 64
    %v2854 = vpop.permute.xlu0 %2853
    %2855 = vrot.lane.b32.xlu0 %v2813, 64
    %v2856 = vpop.permute.xlu0 %2855
    %2857 = vrot.lane.b32.xlu0 %v2815, 64
    %v2858 = vpop.permute.xlu0 %2857
    %2859 = vrot.lane.b32.xlu0 %v2814, 64
    %v2860 = vpop.permute.xlu0 %2859
    %2861 = vrot.lane.b32.xlu0 %v2816, 64
    %v2862 = vpop.permute.xlu0 %2861
    %2863 = vrot.lane.b32.xlu0 %v2818, 64
    %v2864 = vpop.permute.xlu0 %2863
    %2865 = vrot.lane.b32.xlu0 %v2817, 64
    %v2866 = vpop.permute.xlu0 %2865
    %v2891 = vadd.f32 %v2771, %v2820
    %v2892 = vadd.f32 %v2772, %v2822
    %v2893 = vadd.f32 %v2773, %v2824
    %v2894 = vadd.f32 %v2774, %v2826
    %v2895 = vadd.f32 %v2775, %v2828
    %v2896 = vadd.f32 %v2776, %v2830
    %v2897 = vadd.f32 %v2777, %v2832
    %v2898 = vadd.f32 %v2778, %v2834
    %v2899 = vadd.f32 %v2779, %v2836
    %v2900 = vadd.f32 %v2780, %v2838
    %v2901 = vadd.f32 %v2781, %v2840
    %v2902 = vadd.f32 %v2782, %v2842
    %v2903 = vadd.f32 %v2783, %v2844
    %v2904 = vadd.f32 %v2784, %v2846
    %v2905 = vadd.f32 %v2785, %v2848
    %v2906 = vadd.f32 %v2786, %v2850
    %v2907 = vadd.f32 %v2787, %v2852
    %v2908 = vadd.f32 %v2788, %v2854
    %v2909 = vadd.f32 %v2789, %v2856
    %v2910 = vadd.f32 %v2790, %v2858
    %v2911 = vadd.f32 %v2791, %v2860
    %v2912 = vadd.f32 %v2792, %v2862
    %v2913 = vadd.f32 %v2793, %v2864
    %v2914 = vadd.f32 %v2794, %v2866
    %v2915 = vmax.f32 %v2891, 0.0
    %v2916 = vmax.f32 %v2892, 0.0
    %v2917 = vmax.f32 %v2893, 0.0
    %v2918 = vmax.f32 %v2894, 0.0
    %v2919 = vmax.f32 %v2895, 0.0
    %v2920 = vmax.f32 %v2896, 0.0
    %v2921 = vmax.f32 %v2897, 0.0
    %v2922 = vmax.f32 %v2898, 0.0
    %v2923 = vmax.f32 %v2899, 0.0
    %v2924 = vmax.f32 %v2900, 0.0
    %v2925 = vmax.f32 %v2901, 0.0
    %v2926 = vmax.f32 %v2902, 0.0
    %v2927 = vmax.f32 %v2903, 0.0
    %v2928 = vmax.f32 %v2904, 0.0
    %v2929 = vmax.f32 %v2905, 0.0
    %v2930 = vmax.f32 %v2906, 0.0
    %v2931 = vmax.f32 %v2907, 0.0
    %v2932 = vmax.f32 %v2908, 0.0
    %v2933 = vmax.f32 %v2909, 0.0
    %v2934 = vmax.f32 %v2910, 0.0
    %v2935 = vmax.f32 %v2911, 0.0
    %v2936 = vmax.f32 %v2912, 0.0
    %v2937 = vmax.f32 %v2913, 0.0
    %v2938 = vmax.f32 %v2914, 0.0
    %v2939 = vld [vmem:[#allocation2 + $0x8] sm:$0xff]
    %v2940 = vld [vmem:[#allocation2 + $0x10] sm:$0xff]
    %v2941 = vld [vmem:[#allocation2 + $0x20] sm:$0xff]
    %v2942 = vld [vmem:[#allocation2 + $0x28] sm:$0xff]
    %v2943 = vld [vmem:[#allocation2 + $0x38] sm:$0xff]
    %v2944 = vld [vmem:[#allocation2 + $0x40] sm:$0xff]
    %v2945 = vld [vmem:[#allocation2 + $0x50] sm:$0xff]
    %v2946 = vld [vmem:[#allocation2 + $0x58] sm:$0xff]
    %v2947 = vld [vmem:[#allocation2 + $0x68] sm:$0xff]
    %v2948 = vld [vmem:[#allocation2 + $0x70] sm:$0xff]
    %v2949 = vld [vmem:[#allocation2 + $0x80] sm:$0xff]
    %v2950 = vld [vmem:[#allocation2 + $0x88] sm:$0xff]
    %v2951 = vld [vmem:[#allocation2 + $0x98] sm:$0xff]
    %v2952 = vld [vmem:[#allocation2 + $0xa0] sm:$0xff]
    %v2953 = vld [vmem:[#allocation2 + $0xb0] sm:$0xff]
    %v2954 = vld [vmem:[#allocation2 + $0xb8] sm:$0xff]
    %v2971 = vrot.slane %v2939, 4
    %v2972 = vrot.slane %v2940, 4
    %v2973 = vsel %vm2160, %v2971, %v2972
    %v2974 = vrot.slane %v2941, 4
    %v2975 = vrot.slane %v2942, 4
    %v2976 = vsel %vm2160, %v2974, %v2975
    %v2977 = vrot.slane %v2943, 4
    %v2978 = vrot.slane %v2944, 4
    %v2979 = vsel %vm2160, %v2977, %v2978
    %v2980 = vrot.slane %v2945, 4
    %v2981 = vrot.slane %v2946, 4
    %v2982 = vsel %vm2160, %v2980, %v2981
    %v2983 = vrot.slane %v2947, 4
    %v2984 = vrot.slane %v2948, 4
    %v2985 = vsel %vm2160, %v2983, %v2984
    %v2986 = vrot.slane %v2949, 4
    %v2987 = vrot.slane %v2950, 4
    %v2988 = vsel %vm2160, %v2986, %v2987
    %v2989 = vrot.slane %v2951, 4
    %v2990 = vrot.slane %v2952, 4
    %v2991 = vsel %vm2160, %v2989, %v2990
    %v2992 = vrot.slane %v2953, 4
    %v2993 = vrot.slane %v2954, 4
    %v2994 = vsel %vm2160, %v2992, %v2993
    %v3019 = vadd.f32 %v2915, %v2971
    %v3020 = vadd.f32 %v2916, %v2973
    %v3021 = vadd.f32 %v2917, %v2972
    %v3022 = vadd.f32 %v2918, %v2974
    %v3023 = vadd.f32 %v2919, %v2976
    %v3024 = vadd.f32 %v2920, %v2975
    %v3025 = vadd.f32 %v2921, %v2977
    %v3026 = vadd.f32 %v2922, %v2979
    %v3027 = vadd.f32 %v2923, %v2978
    %v3028 = vadd.f32 %v2924, %v2980
    %v3029 = vadd.f32 %v2925, %v2982
    %v3030 = vadd.f32 %v2926, %v2981
    %v3031 = vadd.f32 %v2927, %v2983
    %v3032 = vadd.f32 %v2928, %v2985
    %v3033 = vadd.f32 %v2929, %v2984
    %v3034 = vadd.f32 %v2930, %v2986
    %v3035 = vadd.f32 %v2931, %v2988
    %v3036 = vadd.f32 %v2932, %v2987
    %v3037 = vadd.f32 %v2933, %v2989
    %v3038 = vadd.f32 %v2934, %v2991
    %v3039 = vadd.f32 %v2935, %v2990
    %v3040 = vadd.f32 %v2936, %v2992
    %v3041 = vadd.f32 %v2937, %v2994
    %v3042 = vadd.f32 %v2938, %v2993
    %v3043 = vmax.f32 %v3019, 0.0
    %v3044 = vmax.f32 %v3020, 0.0
    %v3045 = vmax.f32 %v3021, 0.0
    %v3046 = vmax.f32 %v3022, 0.0
    %v3047 = vmax.f32 %v3023, 0.0
    %v3048 = vmax.f32 %v3024, 0.0
    %v3049 = vmax.f32 %v3025, 0.0
    %v3050 = vmax.f32 %v3026, 0.0
    %v3051 = vmax.f32 %v3027, 0.0
    %v3052 = vmax.f32 %v3028, 0.0
    %v3053 = vmax.f32 %v3029, 0.0
    %v3054 = vmax.f32 %v3030, 0.0
    %v3055 = vmax.f32 %v3031, 0.0
    %v3056 = vmax.f32 %v3032, 0.0
    %v3057 = vmax.f32 %v3033, 0.0
    %v3058 = vmax.f32 %v3034, 0.0
    %v3059 = vmax.f32 %v3035, 0.0
    %v3060 = vmax.f32 %v3036, 0.0
    %v3061 = vmax.f32 %v3037, 0.0
    %v3062 = vmax.f32 %v3038, 0.0
    %v3063 = vmax.f32 %v3039, 0.0
    %v3064 = vmax.f32 %v3040, 0.0
    %v3065 = vmax.f32 %v3041, 0.0
    %v3066 = vmax.f32 %v3042, 0.0
    %3067 = vst.msk [vmem:[#allocation2 + $0x4] sm:$0xf0] %vm2305, %v3043
    %3068 = vst.msk [vmem:[#allocation2 + $0xc] sm:$0xff] %vm145, %v3044
    %3069 = vst.msk [vmem:[#allocation2 + $0x14] sm:$0xf] %vm2308, %v3045
    %3070 = vst.msk [vmem:[#allocation2 + $0x1c] sm:$0xf0] %vm2305, %v3046
    %3071 = vst.msk [vmem:[#allocation2 + $0x24] sm:$0xff] %vm145, %v3047
    %3072 = vst.msk [vmem:[#allocation2 + $0x2c] sm:$0xf] %vm2308, %v3048
    %3073 = vst.msk [vmem:[#allocation2 + $0x34] sm:$0xf0] %vm2305, %v3049
    %3074 = vst.msk [vmem:[#allocation2 + $0x3c] sm:$0xff] %vm145, %v3050
    %3075 = vst.msk [vmem:[#allocation2 + $0x44] sm:$0xf] %vm2308, %v3051
    %3076 = vst.msk [vmem:[#allocation2 + $0x4c] sm:$0xf0] %vm2305, %v3052
    %3077 = vst.msk [vmem:[#allocation2 + $0x54] sm:$0xff] %vm145, %v3053
    %3078 = vst.msk [vmem:[#allocation2 + $0x5c] sm:$0xf] %vm2308, %v3054
    %3079 = vst.msk [vmem:[#allocation2 + $0x64] sm:$0xf0] %vm2305, %v3055
    %3080 = vst.msk [vmem:[#allocation2 + $0x6c] sm:$0xff] %vm145, %v3056
    %3081 = vst.msk [vmem:[#allocation2 + $0x74] sm:$0xf] %vm2308, %v3057
    %3082 = vst.msk [vmem:[#allocation2 + $0x7c] sm:$0xf0] %vm2305, %v3058
    %3083 = vst.msk [vmem:[#allocation2 + $0x84] sm:$0xff] %vm145, %v3059
    %3084 = vst.msk [vmem:[#allocation2 + $0x8c] sm:$0xf] %vm2308, %v3060
    %3085 = vst.msk [vmem:[#allocation2 + $0x94] sm:$0xf0] %vm2305, %v3061
    %3086 = vst.msk [vmem:[#allocation2 + $0x9c] sm:$0xff] %vm145, %v3062
    %3087 = vst.msk [vmem:[#allocation2 + $0xa4] sm:$0xf] %vm2308, %v3063
    %3088 = vst.msk [vmem:[#allocation2 + $0xac] sm:$0xf0] %vm2305, %v3064
    %3089 = vst.msk [vmem:[#allocation2 + $0xb4] sm:$0xff] %vm145, %v3065
    %3090 = vst.msk [vmem:[#allocation2 + $0xbc] sm:$0xf] %vm2308, %v3066
    %v3091 = vld [vmem:[#allocation2 + $0x17] sm:$0x1]
    %v3092 = vld [vmem:[#allocation2 + $0x2f] sm:$0x1]
    %v3093 = vld [vmem:[#allocation2 + $0x47] sm:$0x1]
    %v3094 = vld [vmem:[#allocation2 + $0x5f] sm:$0x1]
    %v3095 = vld [vmem:[#allocation2 + $0x77] sm:$0x1]
    %v3096 = vld [vmem:[#allocation2 + $0x8f] sm:$0x1]
    %v3097 = vld [vmem:[#allocation2 + $0xa7] sm:$0x1]
    %v3098 = vld [vmem:[#allocation2 + $0xbf] sm:$0x1]
    %v3099 = vld [vmem:[%s10] sm:$0x1]
    %v3100 = vmul.f32 %v3091, %v3099
    %v3101 = vmul.f32 %v3092, %v3099
    %v3102 = vmul.f32 %v3093, %v3099
    %v3103 = vmul.f32 %v3094, %v3099
    %v3104 = vmul.f32 %v3095, %v3099
    %v3105 = vmul.f32 %v3096, %v3099
    %v3106 = vmul.f32 %v3097, %v3099
    %v3107 = vmul.f32 %v3098, %v3099
    %vm3108 = vcmask 253952
    %v3109 = vsel %vm3108, %v3100, 0.0
    %3110 = vadd.xlane.f32.xlu0 %v3109
    %v3111 = vpop.xlane.xlu0 %3110
    %v3112 = vsel %vm3108, %v3101, 0.0
    %3113 = vadd.xlane.f32.xlu0 %v3112
    %v3114 = vpop.xlane.xlu0 %3113
    %v3115 = vsel %vm3108, %v3102, 0.0
    %3116 = vadd.xlane.f32.xlu0 %v3115
    %v3117 = vpop.xlane.xlu0 %3116
    %v3118 = vsel %vm3108, %v3103, 0.0
    %3119 = vadd.xlane.f32.xlu0 %v3118
    %v3120 = vpop.xlane.xlu0 %3119
    %v3121 = vsel %vm3108, %v3104, 0.0
    %3122 = vadd.xlane.f32.xlu0 %v3121
    %v3123 = vpop.xlane.xlu0 %3122
    %v3124 = vsel %vm3108, %v3105, 0.0
    %3125 = vadd.xlane.f32.xlu0 %v3124
    %v3126 = vpop.xlane.xlu0 %3125
    %v3127 = vsel %vm3108, %v3106, 0.0
    %3128 = vadd.xlane.f32.xlu0 %v3127
    %v3129 = vpop.xlane.xlu0 %3128
    %v3130 = vsel %vm3108, %v3107, 0.0
    %3131 = vadd.xlane.f32.xlu0 %v3130
    %v3132 = vpop.xlane.xlu0 %3131
    %v3133 = vld [vmem:[#allocation4] sm:$0x1]
    %v3134 = vadd.f32 %v3111, %v3133
    %v3135 = vadd.f32 %v3114, %v3133
    %v3136 = vadd.f32 %v3117, %v3133
    %v3137 = vadd.f32 %v3120, %v3133
    %v3138 = vadd.f32 %v3123, %v3133
    %v3139 = vadd.f32 %v3126, %v3133
    %v3140 = vadd.f32 %v3129, %v3133
    %v3141 = vadd.f32 %v3132, %v3133
    %vm3142 = vcmask 0
    %3143 = vst.msk [vmem:[%s12] sm:$0x1] %vm3142, %v3134
    %3144 = vst.msk [vmem:[%s12 + $0x1] sm:$0x1] %vm3142, %v3135
    %3145 = vst.msk [vmem:[%s12 + $0x2] sm:$0x1] %vm3142, %v3136
    %3146 = vst.msk [vmem:[%s12 + $0x3] sm:$0x1] %vm3142, %v3137
    %3147 = vst.msk [vmem:[%s12 + $0x4] sm:$0x1] %vm3142, %v3138
    %3148 = vst.msk [vmem:[%s12 + $0x5] sm:$0x1] %vm3142, %v3139
    %3149 = vst.msk [vmem:[%s12 + $0x6] sm:$0x1] %vm3142, %v3140
    %3150 = vst.msk [vmem:[%s12 + $0x7] sm:$0x1] %vm3142, %v3141
    // Predicated region
    $region82: #{tpu_custom_call.1} parent=1 // pred_check
      _
    $region83: #{tpu_custom_call.1} parent=1 // pred_check_branch
      %3152 = sbr.rel (0) target = $region85
    $region84: #{tpu_custom_call.1} parent=1 // pred_region
      _
    $region85: #{tpu_custom_call.1} parent=1 // pred_fallthru
      _
    // Predicated region
    $region86: #{tpu_custom_call.1} parent=1 // pred_check
      _
    $region87: #{tpu_custom_call.1} parent=1 // pred_check_branch
      %3154 = sbr.rel (0) target = $region89
    $region88: #{tpu_custom_call.1} parent=1 // pred_region
      _
    $region89: #{tpu_custom_call.1} parent=1 // pred_fallthru
      _
    %3155 = vsyncpa [#allocation6], 1
    %3156 = vsyncpa [#allocation8], 1
    %3157 = vsyncpa [#allocation11], 1
    %3158 = vsyncpa [#allocation14], 1
    %3159 = vsyncpa [#allocation17], 1

</llo_original>
